<compile_context>
chip_gen: v7x
topology: tpu7x:2x2x1
jax: 0.10.0
libtpu: 0.0.40
codegen_flags: <defaults>
</compile_context>

<pallas_src>
import functools

import jax
import jax.numpy as jnp
from jax.experimental import pallas as pl
from jax.experimental.pallas import tpu as pltpu


_LANE = 128
_CP_TILE = 128          # output-channel tile (lane-dense stores, aligned MXU N)
_TARGET_M = 256         # rows per matmul; keeps the f32 accumulator <= 128 KiB

_BUFFERED_OK = False    # resolved eagerly by _resolve_buffered() (before any jit)
_VMEM_LIMIT = None


def _round_up(x, m):
    return (x + m - 1) // m * m


def _resolve_buffered():
    """Probe once (eagerly, pre-jit) whether pipeline_mode=pl.Buffered(1) works."""
    global _BUFFERED_OK
    ok = False
    if hasattr(pl, "Buffered"):
        try:
            def k(x_ref, o_ref):
                o_ref[...] = x_ref[...] + 1.0
            spec = pl.BlockSpec((8, _LANE), lambda i: (0, 0),
                                pipeline_mode=pl.Buffered(1))
            y = pl.pallas_call(
                k,
                out_shape=jax.ShapeDtypeStruct((8, _LANE), jnp.float32),
                grid=(1,),
                in_specs=[spec],
                out_specs=pl.BlockSpec((8, _LANE), lambda i: (0, 0)),
            )(jnp.zeros((8, _LANE), jnp.float32))
            jax.block_until_ready(y)
            ok = True
        except Exception:
            ok = False
    _BUFFERED_OK = ok
    return ok


def _spec(shape, index_map, *, single_buffer=False):
    """BlockSpec; (near-)grid-invariant operands are single-buffered if supported."""
    if single_buffer and _BUFFERED_OK:
        return pl.BlockSpec(shape, index_map, pipeline_mode=pl.Buffered(1))
    return pl.BlockSpec(shape, index_map)


def _vmem_limit():
    """Generation-dependent scoped-VMEM budget (~100 MiB v5e/v6e, ~54 MiB v7x)."""
    global _VMEM_LIMIT
    if _VMEM_LIMIT is None:
        try:
            cap = int(pltpu.get_tpu_info().vmem_capacity_bytes)
        except Exception:
            cap = 64 * 1024 * 1024
        _VMEM_LIMIT = int(min(100 * 1024 * 1024,
                              max(32 * 1024 * 1024, cap * 0.85)))
    return _VMEM_LIMIT


def _pick_th(ho, wo, target=_TARGET_M):
    """Row-tile height: th | ho, th*wo <= target (or full image), th*wo % 8 == 0."""
    if ho * wo <= target:
        return ho
    cands = [th for th in range(1, ho + 1)
             if ho % th == 0 and th * wo <= target and (th * wo) % 8 == 0]
    return max(cands) if cands else ho


# ---------------------------------------------------------------------------
# Pallas kernel: row-tap conv (+bias) [+ stats accumulation | + LeakyReLU]
# ---------------------------------------------------------------------------
def _conv_kernel(z_ref, w_ref, b_ref, *out_refs, wo, taps, m, nt, normalize, act):
    """One (m, ck) @ (ck, cp_tile) matmul per row tap, f32 accumulation.

    z_ref : (1, HWz, ck)        bf16  flattened column-folded image (resident)
    w_ref : (T, ck, cp_tile)    bf16  one matrix per row tap
    b_ref : (1, cp_tile)        f32
    outputs:
      y_ref                     (1, m, cp_tile)  conv(+bias)[+act]
      [sum_ref / ssq_ref        (1, 1, cp_tile)  per-channel sum / sum-of-squares]
    """
    if normalize:
        y_ref, sum_ref, ssq_ref = out_refs
    else:
        (y_ref,) = out_refs

    if nt == 1:
        base = 0                                   # static slices for single-tile layers
    else:
        base = pl.program_id(2) * m
        base = pl.multiple_of(base, 8)             # m % 8 == 0 whenever nt > 1

    acc = None
    for j, dh in enumerate(taps):                  # static, fully unrolled (2 or 4 taps)
        a = z_ref[0, pl.ds(base + dh * wo, m), :]  # (m, ck) bf16, contiguous rows
        d = jnp.dot(a, w_ref[j], preferred_element_type=jnp.float32)
        acc = d if acc is None else acc + d
    acc = acc + b_ref[...]                         # (1, cp_tile) bias broadcast

    if normalize:
        t = pl.program_id(2)

        @pl.when(t == 0)
        def _init():
            sum_ref[...] = jnp.zeros_like(sum_ref)
            ssq_ref[...] = jnp.zeros_like(ssq_ref)

        # one read-modify-write per grid step (stats stay off the critical path)
        sum_ref[0] = sum_ref[0] + jnp.sum(acc, axis=0, keepdims=True)
        ssq_ref[0] = ssq_ref[0] + jnp.sum(acc * acc, axis=0, keepdims=True)
    elif act == "leaky":
        acc = jnp.where(acc > 0, acc, 0.2 * acc)

    y_ref[0] = acc.astype(y_ref.dtype)


def _conv_layer(z, w2, b2, taps, ho, wo, *, normalize, act, out_dtype):
    """y[p] = sum_j z[p + taps[j]*wo] @ w2[j] + b  over flattened output rows."""
    n, hwz, ck = z.shape
    ntaps, ckw, cp = w2.shape
    assert ckw == ck and ntaps == len(taps) and cp % _CP_TILE == 0
    assert hwz == (ho + taps[-1]) * wo

    n_cp = cp // _CP_TILE
    th = _pick_th(ho, wo)
    n_t = ho // th
    m = th * wo

    kern = functools.partial(_conv_kernel, wo=wo, taps=tuple(taps), m=m, nt=n_t,
                             normalize=normalize, act=act)

    in_specs = [
        _spec((1, hwz, ck), lambda i, c, t: (i, 0, 0), single_buffer=True),
        _spec((ntaps, ck, _CP_TILE), lambda i, c, t: (0, 0, c), single_buffer=True),
        _spec((1, _CP_TILE), lambda i, c, t: (0, c), single_buffer=True),
    ]
    y_spec = pl.BlockSpec((1, m, _CP_TILE), lambda i, c, t: (i, t, c))
    y_sds = jax.ShapeDtypeStruct((n, ho * wo, cp), out_dtype)
    cparams = pltpu.CompilerParams(
        dimension_semantics=("parallel", "parallel",
                             "arbitrary" if normalize else "parallel"),
        vmem_limit_bytes=_vmem_limit())

    if normalize:
        s_spec = pl.BlockSpec((1, 1, _CP_TILE), lambda i, c, t: (i, 0, c))
        s_sds = jax.ShapeDtypeStruct((n, 1, cp), jnp.float32)
        return pl.pallas_call(
            kern,
            out_shape=(y_sds, s_sds, s_sds),
            grid=(n, n_cp, n_t),
            in_specs=in_specs,
            out_specs=(y_spec, s_spec, s_spec),
            compiler_params=cparams,
        )(z, w2, b2)

    return pl.pallas_call(
        kern,
        out_shape=y_sds,
        grid=(n, n_cp, n_t),
        in_specs=in_specs,
        out_specs=y_spec,
        compiler_params=cparams,
    )(z, w2, b2)


# ---------------------------------------------------------------------------
# Host-side layout plumbing (XLA): pad + space-to-depth + column fold + weights
# ---------------------------------------------------------------------------
def _prep_stride2(x_nhwc):
    """pad(1) + space-to-depth(2) + fold 2 column taps -> (N, (ho+1)*wo, 8C) bf16."""
    n, h, w, c = x_nhwc.shape
    assert h % 2 == 0 and w % 2 == 0
    xp = jnp.pad(x_nhwc, ((0, 0), (1, 1), (1, 1), (0, 0)))
    hs, ws = h // 2 + 1, w // 2 + 1
    s = xp.reshape(n, hs, 2, ws, 2, c)
    s = jnp.transpose(s, (0, 1, 3, 2, 4, 5)).reshape(n, hs, ws, 4 * c)
    z = jnp.concatenate([s[:, :, :-1, :], s[:, :, 1:, :]], axis=-1)   # (n, hs, wo, 8c)
    wo = ws - 1
    return z.reshape(n, hs * wo, 8 * c).astype(jnp.bfloat16)


def _prep_final(x_nhwc):
    """ZeroPad2d((1,0,1,0)) + conv pad 1 -> pad ((2,1),(2,1)); fold 4 column taps."""
    n, h, w, c = x_nhwc.shape
    xp = jnp.pad(x_nhwc, ((0, 0), (2, 1), (2, 1), (0, 0)))            # (n, h+3, w+3, c)
    z = jnp.concatenate([xp[:, :, kw:kw + w, :] for kw in range(4)], axis=-1)
    return z.reshape(n, (h + 3) * w, 4 * c).astype(jnp.bfloat16)


def _w_stride2(w_oihw, cp):
    """(Cout, Cin, 4, 4) torch weight -> (2 row taps, 8*Cin, cp) bf16."""
    cout, cin, _, _ = w_oihw.shape
    w = jnp.transpose(w_oihw, (2, 3, 1, 0))                 # (kh, kw, ci, co)
    w = w.reshape(2, 2, 2, 2, cin, cout)                    # (dh, ph, dw, pw, ci, co)
    w = jnp.transpose(w, (0, 2, 1, 3, 4, 5))                # (dh, dw, ph, pw, ci, co)
    w = w.reshape(2, 8 * cin, cout)
    w = jnp.pad(w, ((0, 0), (0, 0), (0, cp - cout)))
    return w.astype(jnp.bfloat16)


def _w_final(w_oihw, cp):
    """(Cout, Cin, 4, 4) -> (4 row taps, 4*Cin, cp) bf16."""
    cout, cin, _, _ = w_oihw.shape
    w = jnp.transpose(w_oihw, (2, 3, 1, 0)).reshape(4, 4 * cin, cout)
    w = jnp.pad(w, ((0, 0), (0, 0), (0, cp - cout)))
    return w.astype(jnp.bfloat16)


def _pad_bias(b, cp):
    return jnp.pad(b, (0, cp - b.shape[0])).reshape(1, cp).astype(jnp.float32)


def _finish(y_flat, ho, wo, cp, cout, stats):
    """Drop padded channels; for normalized blocks apply InstanceNorm + LeakyReLU.

    This is fused by XLA into the next layer's prep, so the normalized
    activation is never written/re-read as a separate pass.
    """
    n = y_flat.shape[0]
    x = y_flat.reshape(n, ho, wo, cp)[..., :cout]
    if stats is None:
        return x                                            # leaky applied in-kernel
    ssum, ssq = stats
    inv = 1.0 / float(ho * wo)
    mean = (ssum[:, 0, :cout] * inv).reshape(n, 1, 1, cout)
    ex2 = (ssq[:, 0, :cout] * inv).reshape(n, 1, 1, cout)
    scale = jax.lax.rsqrt(jnp.maximum(ex2 - mean * mean, 0.0) + 1e-5)
    xf = (x.astype(jnp.float32) - mean) * scale
    return jnp.where(xf > 0, xf, 0.2 * xf)


# ---------------------------------------------------------------------------
# Discriminator
# ---------------------------------------------------------------------------
def init_discriminator_params(key, input_shape, patch, ndf=64):
    assert patch in (4, 8, 16)
    channels, _, _ = input_shape

    cfg = [(channels, ndf, False), (ndf, ndf * 2, True)]
    if patch in (4, 8):
        cfg.append((ndf * 2, ndf * 2, True))
    cfg.append((ndf * 2, ndf * 4, True))
    if patch == 4:
        cfg.append((ndf * 4, ndf * 4, True))
    cfg.append((ndf * 4, ndf * 8, True))

    blocks = []
    for cin, cout, _ in cfg:
        key, kw, kb = jax.random.split(key, 3)
        blocks.append(dict(
            w=0.05 * jax.random.normal(kw, (cout, cin, 4, 4), jnp.float32),
            b=0.05 * jax.random.normal(kb, (cout,), jnp.float32)))

    key, kw, kb = jax.random.split(key, 3)
    params = dict(
        blocks=blocks,
        w_final=0.05 * jax.random.normal(kw, (1, ndf * 8, 4, 4), jnp.float32),
        b_final=0.05 * jax.random.normal(kb, (1,), jnp.float32))
    norm_flags = tuple(norm for _, _, norm in cfg)
    return params, norm_flags


def discriminator_forward(params, img_nchw, norm_flags):
    """img_nchw (N, C, H, W) f32 -> (out,), out (N, 1, H//2^B, W//2^B)."""
    x = jnp.transpose(img_nchw, (0, 2, 3, 1)).astype(jnp.float32)     # NHWC

    for blk, norm in zip(params["blocks"], norm_flags):
        n, h, w, _ = x.shape
        ho, wo = h // 2, w // 2
        cout = blk["w"].shape[0]
        cp = _round_up(cout, _CP_TILE)
        z = _prep_stride2(x)                                 # (N, (ho+1)*wo, 8*cin) bf16
        w2 = _w_stride2(blk["w"], cp)
        b2 = _pad_bias(blk["b"], cp)
        if norm:
            y, ssum, ssq = _conv_layer(z, w2, b2, (0, 1), ho, wo,
                                       normalize=True, act=None,
                                       out_dtype=jnp.bfloat16)
            x = _finish(y, ho, wo, cp, cout, (ssum, ssq))
        else:
            y = _conv_layer(z, w2, b2, (0, 1), ho, wo,
                            normalize=False, act="leaky",
                            out_dtype=jnp.bfloat16)
            x = _finish(y, ho, wo, cp, cout, None)

    # ZeroPad2d((1, 0, 1, 0)) + Conv2d(ndf*8, 1, 4, padding=1)
    n, ho, wo, _ = x.shape
    z = _prep_final(x)                                       # (N, (ho+3)*wo, 4*cin) bf16
    cp = _CP_TILE                                            # Cout=1 in one lane group
    w2 = _w_final(params["w_final"], cp)
    b2 = _pad_bias(params["b_final"], cp)
    y = _conv_layer(z, w2, b2, (0, 1, 2, 3), ho, wo,
                    normalize=False, act=None, out_dtype=jnp.float32)
    out = y.reshape(n, ho, wo, cp)[..., 0][:, None, :, :]    # NCHW, channel 0
    return (out,)


# ---------------------------------------------------------------------------
# Pure-XLA f32 reference (for self-verification only)
# ---------------------------------------------------------------------------
def reference_forward(params, img_nchw, norm_flags):
    dn = ("NHWC", "HWIO", "NHWC")
    x = jnp.transpose(img_nchw, (0, 2, 3, 1)).astype(jnp.float32)
    for blk, norm in zip(params["blocks"], norm_flags):
        w = jnp.transpose(blk["w"], (2, 3, 1, 0))
        y = jax.lax.conv_general_dilated(x, w, (2, 2), ((1, 1), (1, 1)),
                                         dimension_numbers=dn)
        y = y + blk["b"].reshape(1, 1, 1, -1)
        if norm:
            mean = jnp.mean(y, axis=(1, 2), keepdims=True)
            var = jnp.mean(jnp.square(y - mean), axis=(1, 2), keepdims=True)
            y = (y - mean) * jax.lax.rsqrt(var + 1e-5)
        x = jnp.where(y > 0, y, 0.2 * y)
    x = jnp.pad(x, ((0, 0), (1, 0), (1, 0), (0, 0)))         # ZeroPad2d((1, 0, 1, 0))
    w = jnp.transpose(params["w_final"], (2, 3, 1, 0))
    y = jax.lax.conv_general_dilated(x, w, (1, 1), ((1, 1), (1, 1)),
                                     dimension_numbers=dn)
    y = y + params["b_final"].reshape(1, 1, 1, -1)
    return jnp.transpose(y, (0, 3, 1, 2))


if __name__ == "__main__":
    # Small but multi-tile shapes: patch=16 discriminator, ndf=8, 3x64x64 input.
    batch, channels, height, width = 2, 3, 64, 64
    patch, ndf = 16, 8

    key = jax.random.PRNGKey(0)
    key, kimg = jax.random.split(key)
    img = jax.random.normal(kimg, (batch, channels, height, width), jnp.float32)
    params, norm_flags = init_discriminator_params(
        key, (channels, height, width), patch, ndf=ndf)

    _resolve_buffered()   # eager probe for pl.Buffered(1) support (before jit)

    fwd = jax.jit(lambda p, x: discriminator_forward(p, x, norm_flags))
    out = fwd(params, img)
    out0 = jax.block_until_ready(out[0])

    expected = (batch, 1, height // 16, width // 16)
    assert out0.shape == expected, (out0.shape, expected)
    assert bool(jnp.all(jnp.isfinite(out0))), "non-finite output"

    ref = jax.block_until_ready(reference_forward(params, img, norm_flags))
    err = float(jnp.max(jnp.abs(out0.astype(jnp.float32) - ref)))
    tol = 0.15 * (1.0 + float(jnp.max(jnp.abs(ref))))        # generous bf16 tolerance
    assert err < tol, (err, tol)

    print("KERNEL_OK")
</pallas_src>

<mosaic_0001>
module attributes {stable_mosaic.version = 11 : i64} {
  func.func @k(%arg0: i32, %arg1: memref<8x128xf32, #tpu.memory_space<vmem>>, %arg2: memref<8x128xf32, #tpu.memory_space<vmem>>) attributes {dimension_semantics = [#tpu.dimension_semantics<arbitrary>], iteration_bounds = array<i64: 1>, scalar_prefetch = 0 : i64, scratch_operands = 0 : i64, tpu.core_type = #tpu.core_type<tc>, window_params = [{pipeline_mode = #tpu.pipeline_mode<synchronous>, transform_indices = @transform_0, window_bounds = array<i64: 8, 128>}, {pipeline_mode = #tpu.pipeline_mode<synchronous>, transform_indices = @transform_1, window_bounds = array<i64: 8, 128>}]} {
    %c0 = arith.constant 0 : index
    %c0_0 = arith.constant 0 : index
    %0 = vector.load %arg1[%c0, %c0_0] : memref<8x128xf32, #tpu.memory_space<vmem>>, vector<8x128xf32>
    %cst = arith.constant 1.000000e+00 : f32
    %1 = vector.broadcast %cst : f32 to vector<8x128xf32>
    %2 = arith.addf %0, %1 : vector<8x128xf32>
    %c0_1 = arith.constant 0 : index
    %c0_2 = arith.constant 0 : index
    %3 = vector.load %arg2[%c0_1, %c0_2] : memref<8x128xf32, #tpu.memory_space<vmem>>, vector<8x128xf32>
    tpu.vector_store %arg2[%c0_1, %c0_2], %2 {strides = array<i32>} : memref<8x128xf32, #tpu.memory_space<vmem>>, vector<8x128xf32>,
    return
  }
  func.func @transform_0(%arg0: i32) -> (i32, i32) {
    %c0_i32 = arith.constant 0 : i32
    %c0_i32_0 = arith.constant 0 : i32
    %c0_i32_1 = arith.constant 0 : i32
    return %c0_i32, %c0_i32_0 : i32, i32
  }
  func.func @transform_1(%arg0: i32) -> (i32, i32) {
    %c0_i32 = arith.constant 0 : i32
    %c0_i32_0 = arith.constant 0 : i32
    %c0_i32_1 = arith.constant 0 : i32
    return %c0_i32, %c0_i32_0 : i32, i32
  }
}

module attributes {stable_mosaic.version = 11 : i64} {
  func.func @_conv_kernel(%arg0: i32, %arg1: i32, %arg2: i32, %arg3: memref<1x1056x24xbf16, #tpu.memory_space<vmem>>, %arg4: memref<2x24x128xbf16, #tpu.memory_space<vmem>>, %arg5: memref<1x128xf32, #tpu.memory_space<vmem>>, %arg6: memref<1x256x128xbf16, #tpu.memory_space<vmem>>) attributes {dimension_semantics = [#tpu.dimension_semantics<parallel>, #tpu.dimension_semantics<parallel>, #tpu.dimension_semantics<parallel>], iteration_bounds = array<i64: 2, 1, 4>, scalar_prefetch = 0 : i64, scratch_operands = 0 : i64, tpu.core_type = #tpu.core_type<tc>, window_params = [{transform_indices = @transform_0, window_bounds = array<i64: 1, 1056, 24>}, {transform_indices = @transform_1, window_bounds = array<i64: 2, 24, 128>}, {transform_indices = @transform_2, window_bounds = array<i64: 1, 128>}, {transform_indices = @transform_3, window_bounds = array<i64: 1, 256, 128>}]} {
    %c256_i32 = arith.constant 256 : i32
    %0 = arith.muli %arg2, %c256_i32 : i32
    %1 = tpu.assume_multiple %0, 8 : i32
    %c0_i32 = arith.constant 0 : i32
    %2 = arith.addi %1, %c0_i32 : i32
    %c0 = arith.constant 0 : index
    %3 = arith.index_cast %2 : i32 to index
    %c0_0 = arith.constant 0 : index
    %4 = vector.load %arg3[%c0, %3, %c0_0] : memref<1x1056x24xbf16, #tpu.memory_space<vmem>>, vector<1x256x24xbf16>
    %5 = vector.shape_cast %4 : vector<1x256x24xbf16> to vector<256x24xbf16>
    %c0_1 = arith.constant 0 : index
    %c0_2 = arith.constant 0 : index
    %c0_3 = arith.constant 0 : index
    %6 = vector.load %arg4[%c0_1, %c0_2, %c0_3] : memref<2x24x128xbf16, #tpu.memory_space<vmem>>, vector<1x24x128xbf16>
    %7 = vector.shape_cast %6 : vector<1x24x128xbf16> to vector<24x128xbf16>
    %cst = arith.constant dense<0.000000e+00> : vector<256x128xf32>
    %8 = tpu.matmul %5, %7, %cst {dimension_numbers = #tpu.dot_dimension_numbers<[1], [0], [0], [1], [0, 0, 1, 1], [], []>} : vector<256x24xbf16>, vector<24x128xbf16>, vector<256x128xf32> -> vector<256x128xf32>
    %c32_i32 = arith.constant 32 : i32
    %9 = arith.addi %1, %c32_i32 : i32
    %c0_4 = arith.constant 0 : index
    %10 = arith.index_cast %9 : i32 to index
    %c0_5 = arith.constant 0 : index
    %11 = vector.load %arg3[%c0_4, %10, %c0_5] : memref<1x1056x24xbf16, #tpu.memory_space<vmem>>, vector<1x256x24xbf16>
    %12 = vector.shape_cast %11 : vector<1x256x24xbf16> to vector<256x24xbf16>
    %c1 = arith.constant 1 : index
    %c0_6 = arith.constant 0 : index
    %c0_7 = arith.constant 0 : index
    %13 = vector.load %arg4[%c1, %c0_6, %c0_7] : memref<2x24x128xbf16, #tpu.memory_space<vmem>>, vector<1x24x128xbf16>
    %14 = vector.shape_cast %13 : vector<1x24x128xbf16> to vector<24x128xbf16>
    %cst_8 = arith.constant dense<0.000000e+00> : vector<256x128xf32>
    %15 = tpu.matmul %12, %14, %cst_8 {dimension_numbers = #tpu.dot_dimension_numbers<[1], [0], [0], [1], [0, 0, 1, 1], [], []>} : vector<256x24xbf16>, vector<24x128xbf16>, vector<256x128xf32> -> vector<256x128xf32>
    %16 = arith.addf %8, %15 : vector<256x128xf32>
    %c0_9 = arith.constant 0 : index
    %c0_10 = arith.constant 0 : index
    %17 = vector.load %arg5[%c0_9, %c0_10] : memref<1x128xf32, #tpu.memory_space<vmem>>, vector<1x128xf32>
    %18 = vector.broadcast %17 : vector<1x128xf32> to vector<256x128xf32>
    %19 = arith.addf %16, %18 : vector<256x128xf32>
    %cst_11 = arith.constant 0.000000e+00 : f32
    %20 = vector.broadcast %cst_11 : f32 to vector<256x128xf32>
    %21 = arith.cmpf ogt, %19, %20 : vector<256x128xf32>
    %cst_12 = arith.constant 2.000000e-01 : f32
    %22 = vector.broadcast %cst_12 : f32 to vector<256x128xf32>
    %23 = arith.mulf %22, %19 : vector<256x128xf32>
    %24 = arith.select %21, %19, %23 : vector<256x128xi1>, vector<256x128xf32>
    %25 = arith.truncf %24 : vector<256x128xf32> to vector<256x128xbf16>
    %c0_13 = arith.constant 0 : index
    %c0_14 = arith.constant 0 : index
    %c0_15 = arith.constant 0 : index
    %26 = vector.load %arg6[%c0_13, %c0_14, %c0_15] : memref<1x256x128xbf16, #tpu.memory_space<vmem>>, vector<1x256x128xbf16>
    %27 = vector.shape_cast %26 : vector<1x256x128xbf16> to vector<256x128xbf16>
    %28 = vector.shape_cast %25 : vector<256x128xbf16> to vector<1x256x128xbf16>
    tpu.vector_store %arg6[%c0_13, %c0_14, %c0_15], %28 {strides = array<i32>} : memref<1x256x128xbf16, #tpu.memory_space<vmem>>, vector<1x256x128xbf16>,
    return
  }
  func.func @transform_0(%arg0: i32, %arg1: i32, %arg2: i32) -> (i32, i32, i32) {
    %c0_i32 = arith.constant 0 : i32
    %c0_i32_0 = arith.constant 0 : i32
    %c0_i32_1 = arith.constant 0 : i32
    return %arg0, %c0_i32, %c0_i32_0 : i32, i32, i32
  }
  func.func @transform_1(%arg0: i32, %arg1: i32, %arg2: i32) -> (i32, i32, i32) {
    %c0_i32 = arith.constant 0 : i32
    %c0_i32_0 = arith.constant 0 : i32
    %c0_i32_1 = arith.constant 0 : i32
    return %c0_i32, %c0_i32_0, %arg1 : i32, i32, i32
  }
  func.func @transform_2(%arg0: i32, %arg1: i32, %arg2: i32) -> (i32, i32) {
    %c0_i32 = arith.constant 0 : i32
    %c0_i32_0 = arith.constant 0 : i32
    return %c0_i32, %arg1 : i32, i32
  }
  func.func @transform_3(%arg0: i32, %arg1: i32, %arg2: i32) -> (i32, i32, i32) {
    %c0_i32 = arith.constant 0 : i32
    return %arg0, %arg2, %arg1 : i32, i32, i32
  }
}

module attributes {stable_mosaic.version = 11 : i64} {
  func.func @_conv_kernel(%arg0: i32, %arg1: i32, %arg2: i32, %arg3: memref<1x272x64xbf16, #tpu.memory_space<vmem>>, %arg4: memref<2x64x128xbf16, #tpu.memory_space<vmem>>, %arg5: memref<1x128xf32, #tpu.memory_space<vmem>>, %arg6: memref<1x256x128xbf16, #tpu.memory_space<vmem>>, %arg7: memref<1x1x128xf32, #tpu.memory_space<vmem>>, %arg8: memref<1x1x128xf32, #tpu.memory_space<vmem>>) attributes {dimension_semantics = [#tpu.dimension_semantics<parallel>, #tpu.dimension_semantics<parallel>, #tpu.dimension_semantics<arbitrary>], iteration_bounds = array<i64: 2, 1, 1>, scalar_prefetch = 0 : i64, scratch_operands = 0 : i64, tpu.core_type = #tpu.core_type<tc>, window_params = [{transform_indices = @transform_0, window_bounds = array<i64: 1, 272, 64>}, {transform_indices = @transform_1, window_bounds = array<i64: 2, 64, 128>}, {transform_indices = @transform_2, window_bounds = array<i64: 1, 128>}, {transform_indices = @transform_3, window_bounds = array<i64: 1, 256, 128>}, {transform_indices = @transform_4, window_bounds = array<i64: 1, 1, 128>}, {transform_indices = @transform_5, window_bounds = array<i64: 1, 1, 128>}]} {
    %c0 = arith.constant 0 : index
    %c0_0 = arith.constant 0 : index
    %c0_1 = arith.constant 0 : index
    %0 = vector.load %arg3[%c0, %c0_0, %c0_1] : memref<1x272x64xbf16, #tpu.memory_space<vmem>>, vector<1x256x64xbf16>
    %1 = vector.shape_cast %0 : vector<1x256x64xbf16> to vector<256x64xbf16>
    %c0_2 = arith.constant 0 : index
    %c0_3 = arith.constant 0 : index
    %c0_4 = arith.constant 0 : index
    %2 = vector.load %arg4[%c0_2, %c0_3, %c0_4] : memref<2x64x128xbf16, #tpu.memory_space<vmem>>, vector<1x64x128xbf16>
    %3 = vector.shape_cast %2 : vector<1x64x128xbf16> to vector<64x128xbf16>
    %cst = arith.constant dense<0.000000e+00> : vector<256x128xf32>
    %4 = tpu.matmul %1, %3, %cst {dimension_numbers = #tpu.dot_dimension_numbers<[1], [0], [0], [1], [0, 0, 1, 1], [], []>} : vector<256x64xbf16>, vector<64x128xbf16>, vector<256x128xf32> -> vector<256x128xf32>
    %c0_5 = arith.constant 0 : index
    %c16 = arith.constant 16 : index
    %c0_6 = arith.constant 0 : index
    %5 = vector.load %arg3[%c0_5, %c16, %c0_6] : memref<1x272x64xbf16, #tpu.memory_space<vmem>>, vector<1x256x64xbf16>
    %6 = vector.shape_cast %5 : vector<1x256x64xbf16> to vector<256x64xbf16>
    %c1 = arith.constant 1 : index
    %c0_7 = arith.constant 0 : index
    %c0_8 = arith.constant 0 : index
    %7 = vector.load %arg4[%c1, %c0_7, %c0_8] : memref<2x64x128xbf16, #tpu.memory_space<vmem>>, vector<1x64x128xbf16>
    %8 = vector.shape_cast %7 : vector<1x64x128xbf16> to vector<64x128xbf16>
    %cst_9 = arith.constant dense<0.000000e+00> : vector<256x128xf32>
    %9 = tpu.matmul %6, %8, %cst_9 {dimension_numbers = #tpu.dot_dimension_numbers<[1], [0], [0], [1], [0, 0, 1, 1], [], []>} : vector<256x64xbf16>, vector<64x128xbf16>, vector<256x128xf32> -> vector<256x128xf32>
    %10 = arith.addf %4, %9 : vector<256x128xf32>
    %c0_10 = arith.constant 0 : index
    %c0_11 = arith.constant 0 : index
    %11 = vector.load %arg5[%c0_10, %c0_11] : memref<1x128xf32, #tpu.memory_space<vmem>>, vector<1x128xf32>
    %12 = vector.broadcast %11 : vector<1x128xf32> to vector<256x128xf32>
    %13 = arith.addf %10, %12 : vector<256x128xf32>
    %c0_i32 = arith.constant 0 : i32
    %14 = arith.cmpi eq, %arg2, %c0_i32 : i32
    %15 = arith.extui %14 : i1 to i32
    %c0_i32_12 = arith.constant 0 : i32
    %16 = arith.cmpi ne, %15, %c0_i32_12 : i32
    scf.if %16 {
      %cst_30 = arith.constant 0.000000e+00 : f32
      %38 = vector.broadcast %cst_30 : f32 to vector<1x1x128xf32>
      %c0_31 = arith.constant 0 : index
      %c0_32 = arith.constant 0 : index
      %c0_33 = arith.constant 0 : index
      %39 = vector.load %arg7[%c0_31, %c0_32, %c0_33] : memref<1x1x128xf32, #tpu.memory_space<vmem>>, vector<1x1x128xf32>
      tpu.vector_store %arg7[%c0_31, %c0_32, %c0_33], %38 {strides = array<i32>} : memref<1x1x128xf32, #tpu.memory_space<vmem>>, vector<1x1x128xf32>,
      %cst_34 = arith.constant 0.000000e+00 : f32
      %40 = vector.broadcast %cst_34 : f32 to vector<1x1x128xf32>
      %c0_35 = arith.constant 0 : index
      %c0_36 = arith.constant 0 : index
      %c0_37 = arith.constant 0 : index
      %41 = vector.load %arg8[%c0_35, %c0_36, %c0_37] : memref<1x1x128xf32, #tpu.memory_space<vmem>>, vector<1x1x128xf32>
      tpu.vector_store %arg8[%c0_35, %c0_36, %c0_37], %40 {strides = array<i32>} : memref<1x1x128xf32, #tpu.memory_space<vmem>>, vector<1x1x128xf32>,
    } else {
    }
    %c0_13 = arith.constant 0 : index
    %c0_14 = arith.constant 0 : index
    %c0_15 = arith.constant 0 : index
    %17 = vector.load %arg7[%c0_13, %c0_14, %c0_15] : memref<1x1x128xf32, #tpu.memory_space<vmem>>, vector<1x1x128xf32>
    %18 = vector.shape_cast %17 : vector<1x1x128xf32> to vector<1x128xf32>
    %cst_16 = arith.constant dense<0.000000e+00> : vector<128xf32>
    %19 = vector.multi_reduction <add>, %13, %cst_16 [0] : vector<256x128xf32> to vector<128xf32>
    %20 = vector.shape_cast %19 : vector<128xf32> to vector<1x128xf32>
    %21 = arith.addf %18, %20 : vector<1x128xf32>
    %c0_17 = arith.constant 0 : index
    %c0_18 = arith.constant 0 : index
    %c0_19 = arith.constant 0 : index
    %22 = vector.load %arg7[%c0_17, %c0_18, %c0_19] : memref<1x1x128xf32, #tpu.memory_space<vmem>>, vector<1x1x128xf32>
    %23 = vector.shape_cast %22 : vector<1x1x128xf32> to vector<1x128xf32>
    %24 = vector.shape_cast %21 : vector<1x128xf32> to vector<1x1x128xf32>
    tpu.vector_store %arg7[%c0_17, %c0_18, %c0_19], %24 {strides = array<i32>} : memref<1x1x128xf32, #tpu.memory_space<vmem>>, vector<1x1x128xf32>,
    %c0_20 = arith.constant 0 : index
    %c0_21 = arith.constant 0 : index
    %c0_22 = arith.constant 0 : index
    %25 = vector.load %arg8[%c0_20, %c0_21, %c0_22] : memref<1x1x128xf32, #tpu.memory_space<vmem>>, vector<1x1x128xf32>
    %26 = vector.shape_cast %25 : vector<1x1x128xf32> to vector<1x128xf32>
    %27 = arith.mulf %13, %13 : vector<256x128xf32>
    %cst_23 = arith.constant dense<0.000000e+00> : vector<128xf32>
    %28 = vector.multi_reduction <add>, %27, %cst_23 [0] : vector<256x128xf32> to vector<128xf32>
    %29 = vector.shape_cast %28 : vector<128xf32> to vector<1x128xf32>
    %30 = arith.addf %26, %29 : vector<1x128xf32>
    %c0_24 = arith.constant 0 : index
    %c0_25 = arith.constant 0 : index
    %c0_26 = arith.constant 0 : index
    %31 = vector.load %arg8[%c0_24, %c0_25, %c0_26] : memref<1x1x128xf32, #tpu.memory_space<vmem>>, vector<1x1x128xf32>
    %32 = vector.shape_cast %31 : vector<1x1x128xf32> to vector<1x128xf32>
    %33 = vector.shape_cast %30 : vector<1x128xf32> to vector<1x1x128xf32>
    tpu.vector_store %arg8[%c0_24, %c0_25, %c0_26], %33 {strides = array<i32>} : memref<1x1x128xf32, #tpu.memory_space<vmem>>, vector<1x1x128xf32>,
    %34 = arith.truncf %13 : vector<256x128xf32> to vector<256x128xbf16>
    %c0_27 = arith.constant 0 : index
    %c0_28 = arith.constant 0 : index
    %c0_29 = arith.constant 0 : index
    %35 = vector.load %arg6[%c0_27, %c0_28, %c0_29] : memref<1x256x128xbf16, #tpu.memory_space<vmem>>, vector<1x256x128xbf16>
    %36 = vector.shape_cast %35 : vector<1x256x128xbf16> to vector<256x128xbf16>
    %37 = vector.shape_cast %34 : vector<256x128xbf16> to vector<1x256x128xbf16>
    tpu.vector_store %arg6[%c0_27, %c0_28, %c0_29], %37 {strides = array<i32>} : memref<1x256x128xbf16, #tpu.memory_space<vmem>>, vector<1x256x128xbf16>,
    return
  }
  func.func @transform_0(%arg0: i32, %arg1: i32, %arg2: i32) -> (i32, i32, i32) {
    %c0_i32 = arith.constant 0 : i32
    %c0_i32_0 = arith.constant 0 : i32
    %c0_i32_1 = arith.constant 0 : i32
    return %arg0, %c0_i32, %c0_i32_0 : i32, i32, i32
  }
  func.func @transform_1(%arg0: i32, %arg1: i32, %arg2: i32) -> (i32, i32, i32) {
    %c0_i32 = arith.constant 0 : i32
    %c0_i32_0 = arith.constant 0 : i32
    %c0_i32_1 = arith.constant 0 : i32
    return %c0_i32, %c0_i32_0, %arg1 : i32, i32, i32
  }
  func.func @transform_2(%arg0: i32, %arg1: i32, %arg2: i32) -> (i32, i32) {
    %c0_i32 = arith.constant 0 : i32
    %c0_i32_0 = arith.constant 0 : i32
    return %c0_i32, %arg1 : i32, i32
  }
  func.func @transform_3(%arg0: i32, %arg1: i32, %arg2: i32) -> (i32, i32, i32) {
    %c0_i32 = arith.constant 0 : i32
    return %arg0, %arg2, %arg1 : i32, i32, i32
  }
  func.func @transform_4(%arg0: i32, %arg1: i32, %arg2: i32) -> (i32, i32, i32) {
    %c0_i32 = arith.constant 0 : i32
    %c0_i32_0 = arith.constant 0 : i32
    return %arg0, %c0_i32, %arg1 : i32, i32, i32
  }
  func.func @transform_5(%arg0: i32, %arg1: i32, %arg2: i32) -> (i32, i32, i32) {
    %c0_i32 = arith.constant 0 : i32
    %c0_i32_0 = arith.constant 0 : i32
    return %arg0, %c0_i32, %arg1 : i32, i32, i32
  }
}

module attributes {stable_mosaic.version = 11 : i64} {
  func.func @_conv_kernel(%arg0: i32, %arg1: i32, %arg2: i32, %arg3: memref<1x72x128xbf16, #tpu.memory_space<vmem>>, %arg4: memref<2x128x128xbf16, #tpu.memory_space<vmem>>, %arg5: memref<1x128xf32, #tpu.memory_space<vmem>>, %arg6: memref<1x64x128xbf16, #tpu.memory_space<vmem>>, %arg7: memref<1x1x128xf32, #tpu.memory_space<vmem>>, %arg8: memref<1x1x128xf32, #tpu.memory_space<vmem>>) attributes {dimension_semantics = [#tpu.dimension_semantics<parallel>, #tpu.dimension_semantics<parallel>, #tpu.dimension_semantics<arbitrary>], iteration_bounds = array<i64: 2, 1, 1>, scalar_prefetch = 0 : i64, scratch_operands = 0 : i64, tpu.core_type = #tpu.core_type<tc>, window_params = [{transform_indices = @transform_0, window_bounds = array<i64: 1, 72, 128>}, {transform_indices = @transform_1, window_bounds = array<i64: 2, 128, 128>}, {transform_indices = @transform_2, window_bounds = array<i64: 1, 128>}, {transform_indices = @transform_3, window_bounds = array<i64: 1, 64, 128>}, {transform_indices = @transform_4, window_bounds = array<i64: 1, 1, 128>}, {transform_indices = @transform_5, window_bounds = array<i64: 1, 1, 128>}]} {
    %c0 = arith.constant 0 : index
    %c0_0 = arith.constant 0 : index
    %c0_1 = arith.constant 0 : index
    %0 = vector.load %arg3[%c0, %c0_0, %c0_1] : memref<1x72x128xbf16, #tpu.memory_space<vmem>>, vector<1x64x128xbf16>
    %1 = vector.shape_cast %0 : vector<1x64x128xbf16> to vector<64x128xbf16>
    %c0_2 = arith.constant 0 : index
    %c0_3 = arith.constant 0 : index
    %c0_4 = arith.constant 0 : index
    %2 = vector.load %arg4[%c0_2, %c0_3, %c0_4] : memref<2x128x128xbf16, #tpu.memory_space<vmem>>, vector<1x128x128xbf16>
    %3 = vector.shape_cast %2 : vector<1x128x128xbf16> to vector<128x128xbf16>
    %cst = arith.constant dense<0.000000e+00> : vector<64x128xf32>
    %4 = tpu.matmul %1, %3, %cst {dimension_numbers = #tpu.dot_dimension_numbers<[1], [0], [0], [1], [0, 0, 1, 1], [], []>} : vector<64x128xbf16>, vector<128x128xbf16>, vector<64x128xf32> -> vector<64x128xf32>
    %c0_5 = arith.constant 0 : index
    %c8 = arith.constant 8 : index
    %c0_6 = arith.constant 0 : index
    %5 = vector.load %arg3[%c0_5, %c8, %c0_6] : memref<1x72x128xbf16, #tpu.memory_space<vmem>>, vector<1x64x128xbf16>
    %6 = vector.shape_cast %5 : vector<1x64x128xbf16> to vector<64x128xbf16>
    %c1 = arith.constant 1 : index
    %c0_7 = arith.constant 0 : index
    %c0_8 = arith.constant 0 : index
    %7 = vector.load %arg4[%c1, %c0_7, %c0_8] : memref<2x128x128xbf16, #tpu.memory_space<vmem>>, vector<1x128x128xbf16>
    %8 = vector.shape_cast %7 : vector<1x128x128xbf16> to vector<128x128xbf16>
    %cst_9 = arith.constant dense<0.000000e+00> : vector<64x128xf32>
    %9 = tpu.matmul %6, %8, %cst_9 {dimension_numbers = #tpu.dot_dimension_numbers<[1], [0], [0], [1], [0, 0, 1, 1], [], []>} : vector<64x128xbf16>, vector<128x128xbf16>, vector<64x128xf32> -> vector<64x128xf32>
    %10 = arith.addf %4, %9 : vector<64x128xf32>
    %c0_10 = arith.constant 0 : index
    %c0_11 = arith.constant 0 : index
    %11 = vector.load %arg5[%c0_10, %c0_11] : memref<1x128xf32, #tpu.memory_space<vmem>>, vector<1x128xf32>
    %12 = vector.broadcast %11 : vector<1x128xf32> to vector<64x128xf32>
    %13 = arith.addf %10, %12 : vector<64x128xf32>
    %c0_i32 = arith.constant 0 : i32
    %14 = arith.cmpi eq, %arg2, %c0_i32 : i32
    %15 = arith.extui %14 : i1 to i32
    %c0_i32_12 = arith.constant 0 : i32
    %16 = arith.cmpi ne, %15, %c0_i32_12 : i32
    scf.if %16 {
      %cst_30 = arith.constant 0.000000e+00 : f32
      %38 = vector.broadcast %cst_30 : f32 to vector<1x1x128xf32>
      %c0_31 = arith.constant 0 : index
      %c0_32 = arith.constant 0 : index
      %c0_33 = arith.constant 0 : index
      %39 = vector.load %arg7[%c0_31, %c0_32, %c0_33] : memref<1x1x128xf32, #tpu.memory_space<vmem>>, vector<1x1x128xf32>
      tpu.vector_store %arg7[%c0_31, %c0_32, %c0_33], %38 {strides = array<i32>} : memref<1x1x128xf32, #tpu.memory_space<vmem>>, vector<1x1x128xf32>,
      %cst_34 = arith.constant 0.000000e+00 : f32
      %40 = vector.broadcast %cst_34 : f32 to vector<1x1x128xf32>
      %c0_35 = arith.constant 0 : index
      %c0_36 = arith.constant 0 : index
      %c0_37 = arith.constant 0 : index
      %41 = vector.load %arg8[%c0_35, %c0_36, %c0_37] : memref<1x1x128xf32, #tpu.memory_space<vmem>>, vector<1x1x128xf32>
      tpu.vector_store %arg8[%c0_35, %c0_36, %c0_37], %40 {strides = array<i32>} : memref<1x1x128xf32, #tpu.memory_space<vmem>>, vector<1x1x128xf32>,
    } else {
    }
    %c0_13 = arith.constant 0 : index
    %c0_14 = arith.constant 0 : index
    %c0_15 = arith.constant 0 : index
    %17 = vector.load %arg7[%c0_13, %c0_14, %c0_15] : memref<1x1x128xf32, #tpu.memory_space<vmem>>, vector<1x1x128xf32>
    %18 = vector.shape_cast %17 : vector<1x1x128xf32> to vector<1x128xf32>
    %cst_16 = arith.constant dense<0.000000e+00> : vector<128xf32>
    %19 = vector.multi_reduction <add>, %13, %cst_16 [0] : vector<64x128xf32> to vector<128xf32>
    %20 = vector.shape_cast %19 : vector<128xf32> to vector<1x128xf32>
    %21 = arith.addf %18, %20 : vector<1x128xf32>
    %c0_17 = arith.constant 0 : index
    %c0_18 = arith.constant 0 : index
    %c0_19 = arith.constant 0 : index
    %22 = vector.load %arg7[%c0_17, %c0_18, %c0_19] : memref<1x1x128xf32, #tpu.memory_space<vmem>>, vector<1x1x128xf32>
    %23 = vector.shape_cast %22 : vector<1x1x128xf32> to vector<1x128xf32>
    %24 = vector.shape_cast %21 : vector<1x128xf32> to vector<1x1x128xf32>
    tpu.vector_store %arg7[%c0_17, %c0_18, %c0_19], %24 {strides = array<i32>} : memref<1x1x128xf32, #tpu.memory_space<vmem>>, vector<1x1x128xf32>,
    %c0_20 = arith.constant 0 : index
    %c0_21 = arith.constant 0 : index
    %c0_22 = arith.constant 0 : index
    %25 = vector.load %arg8[%c0_20, %c0_21, %c0_22] : memref<1x1x128xf32, #tpu.memory_space<vmem>>, vector<1x1x128xf32>
    %26 = vector.shape_cast %25 : vector<1x1x128xf32> to vector<1x128xf32>
    %27 = arith.mulf %13, %13 : vector<64x128xf32>
    %cst_23 = arith.constant dense<0.000000e+00> : vector<128xf32>
    %28 = vector.multi_reduction <add>, %27, %cst_23 [0] : vector<64x128xf32> to vector<128xf32>
    %29 = vector.shape_cast %28 : vector<128xf32> to vector<1x128xf32>
    %30 = arith.addf %26, %29 : vector<1x128xf32>
    %c0_24 = arith.constant 0 : index
    %c0_25 = arith.constant 0 : index
    %c0_26 = arith.constant 0 : index
    %31 = vector.load %arg8[%c0_24, %c0_25, %c0_26] : memref<1x1x128xf32, #tpu.memory_space<vmem>>, vector<1x1x128xf32>
    %32 = vector.shape_cast %31 : vector<1x1x128xf32> to vector<1x128xf32>
    %33 = vector.shape_cast %30 : vector<1x128xf32> to vector<1x1x128xf32>
    tpu.vector_store %arg8[%c0_24, %c0_25, %c0_26], %33 {strides = array<i32>} : memref<1x1x128xf32, #tpu.memory_space<vmem>>, vector<1x1x128xf32>,
    %34 = arith.truncf %13 : vector<64x128xf32> to vector<64x128xbf16>
    %c0_27 = arith.constant 0 : index
    %c0_28 = arith.constant 0 : index
    %c0_29 = arith.constant 0 : index
    %35 = vector.load %arg6[%c0_27, %c0_28, %c0_29] : memref<1x64x128xbf16, #tpu.memory_space<vmem>>, vector<1x64x128xbf16>
    %36 = vector.shape_cast %35 : vector<1x64x128xbf16> to vector<64x128xbf16>
    %37 = vector.shape_cast %34 : vector<64x128xbf16> to vector<1x64x128xbf16>
    tpu.vector_store %arg6[%c0_27, %c0_28, %c0_29], %37 {strides = array<i32>} : memref<1x64x128xbf16, #tpu.memory_space<vmem>>, vector<1x64x128xbf16>,
    return
  }
  func.func @transform_0(%arg0: i32, %arg1: i32, %arg2: i32) -> (i32, i32, i32) {
    %c0_i32 = arith.constant 0 : i32
    %c0_i32_0 = arith.constant 0 : i32
    %c0_i32_1 = arith.constant 0 : i32
    return %arg0, %c0_i32, %c0_i32_0 : i32, i32, i32
  }
  func.func @transform_1(%arg0: i32, %arg1: i32, %arg2: i32) -> (i32, i32, i32) {
    %c0_i32 = arith.constant 0 : i32
    %c0_i32_0 = arith.constant 0 : i32
    %c0_i32_1 = arith.constant 0 : i32
    return %c0_i32, %c0_i32_0, %arg1 : i32, i32, i32
  }
  func.func @transform_2(%arg0: i32, %arg1: i32, %arg2: i32) -> (i32, i32) {
    %c0_i32 = arith.constant 0 : i32
    %c0_i32_0 = arith.constant 0 : i32
    return %c0_i32, %arg1 : i32, i32
  }
  func.func @transform_3(%arg0: i32, %arg1: i32, %arg2: i32) -> (i32, i32, i32) {
    %c0_i32 = arith.constant 0 : i32
    return %arg0, %arg2, %arg1 : i32, i32, i32
  }
  func.func @transform_4(%arg0: i32, %arg1: i32, %arg2: i32) -> (i32, i32, i32) {
    %c0_i32 = arith.constant 0 : i32
    %c0_i32_0 = arith.constant 0 : i32
    return %arg0, %c0_i32, %arg1 : i32, i32, i32
  }
  func.func @transform_5(%arg0: i32, %arg1: i32, %arg2: i32) -> (i32, i32, i32) {
    %c0_i32 = arith.constant 0 : i32
    %c0_i32_0 = arith.constant 0 : i32
    return %arg0, %c0_i32, %arg1 : i32, i32, i32
  }
}

module attributes {stable_mosaic.version = 11 : i64} {
  func.func @_conv_kernel(%arg0: i32, %arg1: i32, %arg2: i32, %arg3: memref<1x20x256xbf16, #tpu.memory_space<vmem>>, %arg4: memref<2x256x128xbf16, #tpu.memory_space<vmem>>, %arg5: memref<1x128xf32, #tpu.memory_space<vmem>>, %arg6: memref<1x16x128xbf16, #tpu.memory_space<vmem>>, %arg7: memref<1x1x128xf32, #tpu.memory_space<vmem>>, %arg8: memref<1x1x128xf32, #tpu.memory_space<vmem>>) attributes {dimension_semantics = [#tpu.dimension_semantics<parallel>, #tpu.dimension_semantics<parallel>, #tpu.dimension_semantics<arbitrary>], iteration_bounds = array<i64: 2, 1, 1>, scalar_prefetch = 0 : i64, scratch_operands = 0 : i64, tpu.core_type = #tpu.core_type<tc>, window_params = [{transform_indices = @transform_0, window_bounds = array<i64: 1, 20, 256>}, {transform_indices = @transform_1, window_bounds = array<i64: 2, 256, 128>}, {transform_indices = @transform_2, window_bounds = array<i64: 1, 128>}, {transform_indices = @transform_3, window_bounds = array<i64: 1, 16, 128>}, {transform_indices = @transform_4, window_bounds = array<i64: 1, 1, 128>}, {transform_indices = @transform_5, window_bounds = array<i64: 1, 1, 128>}]} {
    %c0 = arith.constant 0 : index
    %c0_0 = arith.constant 0 : index
    %c0_1 = arith.constant 0 : index
    %0 = vector.load %arg3[%c0, %c0_0, %c0_1] : memref<1x20x256xbf16, #tpu.memory_space<vmem>>, vector<1x16x256xbf16>
    %1 = vector.shape_cast %0 : vector<1x16x256xbf16> to vector<16x256xbf16>
    %c0_2 = arith.constant 0 : index
    %c0_3 = arith.constant 0 : index
    %c0_4 = arith.constant 0 : index
    %2 = vector.load %arg4[%c0_2, %c0_3, %c0_4] : memref<2x256x128xbf16, #tpu.memory_space<vmem>>, vector<1x256x128xbf16>
    %3 = vector.shape_cast %2 : vector<1x256x128xbf16> to vector<256x128xbf16>
    %cst = arith.constant dense<0.000000e+00> : vector<16x128xf32>
    %4 = tpu.matmul %1, %3, %cst {dimension_numbers = #tpu.dot_dimension_numbers<[1], [0], [0], [1], [0, 0, 1, 1], [], []>} : vector<16x256xbf16>, vector<256x128xbf16>, vector<16x128xf32> -> vector<16x128xf32>
    %c0_5 = arith.constant 0 : index
    %c4 = arith.constant 4 : index
    %c0_6 = arith.constant 0 : index
    %5 = vector.load %arg3[%c0_5, %c4, %c0_6] : memref<1x20x256xbf16, #tpu.memory_space<vmem>>, vector<1x16x256xbf16>
    %6 = vector.shape_cast %5 : vector<1x16x256xbf16> to vector<16x256xbf16>
    %c1 = arith.constant 1 : index
    %c0_7 = arith.constant 0 : index
    %c0_8 = arith.constant 0 : index
    %7 = vector.load %arg4[%c1, %c0_7, %c0_8] : memref<2x256x128xbf16, #tpu.memory_space<vmem>>, vector<1x256x128xbf16>
    %8 = vector.shape_cast %7 : vector<1x256x128xbf16> to vector<256x128xbf16>
    %cst_9 = arith.constant dense<0.000000e+00> : vector<16x128xf32>
    %9 = tpu.matmul %6, %8, %cst_9 {dimension_numbers = #tpu.dot_dimension_numbers<[1], [0], [0], [1], [0, 0, 1, 1], [], []>} : vector<16x256xbf16>, vector<256x128xbf16>, vector<16x128xf32> -> vector<16x128xf32>
    %10 = arith.addf %4, %9 : vector<16x128xf32>
    %c0_10 = arith.constant 0 : index
    %c0_11 = arith.constant 0 : index
    %11 = vector.load %arg5[%c0_10, %c0_11] : memref<1x128xf32, #tpu.memory_space<vmem>>, vector<1x128xf32>
    %12 = vector.broadcast %11 : vector<1x128xf32> to vector<16x128xf32>
    %13 = arith.addf %10, %12 : vector<16x128xf32>
    %c0_i32 = arith.constant 0 : i32
    %14 = arith.cmpi eq, %arg2, %c0_i32 : i32
    %15 = arith.extui %14 : i1 to i32
    %c0_i32_12 = arith.constant 0 : i32
    %16 = arith.cmpi ne, %15, %c0_i32_12 : i32
    scf.if %16 {
      %cst_30 = arith.constant 0.000000e+00 : f32
      %38 = vector.broadcast %cst_30 : f32 to vector<1x1x128xf32>
      %c0_31 = arith.constant 0 : index
      %c0_32 = arith.constant 0 : index
      %c0_33 = arith.constant 0 : index
      %39 = vector.load %arg7[%c0_31, %c0_32, %c0_33] : memref<1x1x128xf32, #tpu.memory_space<vmem>>, vector<1x1x128xf32>
      tpu.vector_store %arg7[%c0_31, %c0_32, %c0_33], %38 {strides = array<i32>} : memref<1x1x128xf32, #tpu.memory_space<vmem>>, vector<1x1x128xf32>,
      %cst_34 = arith.constant 0.000000e+00 : f32
      %40 = vector.broadcast %cst_34 : f32 to vector<1x1x128xf32>
      %c0_35 = arith.constant 0 : index
      %c0_36 = arith.constant 0 : index
      %c0_37 = arith.constant 0 : index
      %41 = vector.load %arg8[%c0_35, %c0_36, %c0_37] : memref<1x1x128xf32, #tpu.memory_space<vmem>>, vector<1x1x128xf32>
      tpu.vector_store %arg8[%c0_35, %c0_36, %c0_37], %40 {strides = array<i32>} : memref<1x1x128xf32, #tpu.memory_space<vmem>>, vector<1x1x128xf32>,
    } else {
    }
    %c0_13 = arith.constant 0 : index
    %c0_14 = arith.constant 0 : index
    %c0_15 = arith.constant 0 : index
    %17 = vector.load %arg7[%c0_13, %c0_14, %c0_15] : memref<1x1x128xf32, #tpu.memory_space<vmem>>, vector<1x1x128xf32>
    %18 = vector.shape_cast %17 : vector<1x1x128xf32> to vector<1x128xf32>
    %cst_16 = arith.constant dense<0.000000e+00> : vector<128xf32>
    %19 = vector.multi_reduction <add>, %13, %cst_16 [0] : vector<16x128xf32> to vector<128xf32>
    %20 = vector.shape_cast %19 : vector<128xf32> to vector<1x128xf32>
    %21 = arith.addf %18, %20 : vector<1x128xf32>
    %c0_17 = arith.constant 0 : index
    %c0_18 = arith.constant 0 : index
    %c0_19 = arith.constant 0 : index
    %22 = vector.load %arg7[%c0_17, %c0_18, %c0_19] : memref<1x1x128xf32, #tpu.memory_space<vmem>>, vector<1x1x128xf32>
    %23 = vector.shape_cast %22 : vector<1x1x128xf32> to vector<1x128xf32>
    %24 = vector.shape_cast %21 : vector<1x128xf32> to vector<1x1x128xf32>
    tpu.vector_store %arg7[%c0_17, %c0_18, %c0_19], %24 {strides = array<i32>} : memref<1x1x128xf32, #tpu.memory_space<vmem>>, vector<1x1x128xf32>,
    %c0_20 = arith.constant 0 : index
    %c0_21 = arith.constant 0 : index
    %c0_22 = arith.constant 0 : index
    %25 = vector.load %arg8[%c0_20, %c0_21, %c0_22] : memref<1x1x128xf32, #tpu.memory_space<vmem>>, vector<1x1x128xf32>
    %26 = vector.shape_cast %25 : vector<1x1x128xf32> to vector<1x128xf32>
    %27 = arith.mulf %13, %13 : vector<16x128xf32>
    %cst_23 = arith.constant dense<0.000000e+00> : vector<128xf32>
    %28 = vector.multi_reduction <add>, %27, %cst_23 [0] : vector<16x128xf32> to vector<128xf32>
    %29 = vector.shape_cast %28 : vector<128xf32> to vector<1x128xf32>
    %30 = arith.addf %26, %29 : vector<1x128xf32>
    %c0_24 = arith.constant 0 : index
    %c0_25 = arith.constant 0 : index
    %c0_26 = arith.constant 0 : index
    %31 = vector.load %arg8[%c0_24, %c0_25, %c0_26] : memref<1x1x128xf32, #tpu.memory_space<vmem>>, vector<1x1x128xf32>
    %32 = vector.shape_cast %31 : vector<1x1x128xf32> to vector<1x128xf32>
    %33 = vector.shape_cast %30 : vector<1x128xf32> to vector<1x1x128xf32>
    tpu.vector_store %arg8[%c0_24, %c0_25, %c0_26], %33 {strides = array<i32>} : memref<1x1x128xf32, #tpu.memory_space<vmem>>, vector<1x1x128xf32>,
    %34 = arith.truncf %13 : vector<16x128xf32> to vector<16x128xbf16>
    %c0_27 = arith.constant 0 : index
    %c0_28 = arith.constant 0 : index
    %c0_29 = arith.constant 0 : index
    %35 = vector.load %arg6[%c0_27, %c0_28, %c0_29] : memref<1x16x128xbf16, #tpu.memory_space<vmem>>, vector<1x16x128xbf16>
    %36 = vector.shape_cast %35 : vector<1x16x128xbf16> to vector<16x128xbf16>
    %37 = vector.shape_cast %34 : vector<16x128xbf16> to vector<1x16x128xbf16>
    tpu.vector_store %arg6[%c0_27, %c0_28, %c0_29], %37 {strides = array<i32>} : memref<1x16x128xbf16, #tpu.memory_space<vmem>>, vector<1x16x128xbf16>,
    return
  }
  func.func @transform_0(%arg0: i32, %arg1: i32, %arg2: i32) -> (i32, i32, i32) {
    %c0_i32 = arith.constant 0 : i32
    %c0_i32_0 = arith.constant 0 : i32
    %c0_i32_1 = arith.constant 0 : i32
    return %arg0, %c0_i32, %c0_i32_0 : i32, i32, i32
  }
  func.func @transform_1(%arg0: i32, %arg1: i32, %arg2: i32) -> (i32, i32, i32) {
    %c0_i32 = arith.constant 0 : i32
    %c0_i32_0 = arith.constant 0 : i32
    %c0_i32_1 = arith.constant 0 : i32
    return %c0_i32, %c0_i32_0, %arg1 : i32, i32, i32
  }
  func.func @transform_2(%arg0: i32, %arg1: i32, %arg2: i32) -> (i32, i32) {
    %c0_i32 = arith.constant 0 : i32
    %c0_i32_0 = arith.constant 0 : i32
    return %c0_i32, %arg1 : i32, i32
  }
  func.func @transform_3(%arg0: i32, %arg1: i32, %arg2: i32) -> (i32, i32, i32) {
    %c0_i32 = arith.constant 0 : i32
    return %arg0, %arg2, %arg1 : i32, i32, i32
  }
  func.func @transform_4(%arg0: i32, %arg1: i32, %arg2: i32) -> (i32, i32, i32) {
    %c0_i32 = arith.constant 0 : i32
    %c0_i32_0 = arith.constant 0 : i32
    return %arg0, %c0_i32, %arg1 : i32, i32, i32
  }
  func.func @transform_5(%arg0: i32, %arg1: i32, %arg2: i32) -> (i32, i32, i32) {
    %c0_i32 = arith.constant 0 : i32
    %c0_i32_0 = arith.constant 0 : i32
    return %arg0, %c0_i32, %arg1 : i32, i32, i32
  }
}

module attributes {stable_mosaic.version = 11 : i64} {
  func.func @_conv_kernel(%arg0: i32, %arg1: i32, %arg2: i32, %arg3: memref<1x28x256xbf16, #tpu.memory_space<vmem>>, %arg4: memref<4x256x128xbf16, #tpu.memory_space<vmem>>, %arg5: memref<1x128xf32, #tpu.memory_space<vmem>>, %arg6: memref<1x16x128xf32, #tpu.memory_space<vmem>>) attributes {dimension_semantics = [#tpu.dimension_semantics<parallel>, #tpu.dimension_semantics<parallel>, #tpu.dimension_semantics<parallel>], iteration_bounds = array<i64: 2, 1, 1>, scalar_prefetch = 0 : i64, scratch_operands = 0 : i64, tpu.core_type = #tpu.core_type<tc>, window_params = [{transform_indices = @transform_0, window_bounds = array<i64: 1, 28, 256>}, {transform_indices = @transform_1, window_bounds = array<i64: 4, 256, 128>}, {transform_indices = @transform_2, window_bounds = array<i64: 1, 128>}, {transform_indices = @transform_3, window_bounds = array<i64: 1, 16, 128>}]} {
    %c0 = arith.constant 0 : index
    %c0_0 = arith.constant 0 : index
    %c0_1 = arith.constant 0 : index
    %0 = vector.load %arg3[%c0, %c0_0, %c0_1] : memref<1x28x256xbf16, #tpu.memory_space<vmem>>, vector<1x16x256xbf16>
    %1 = vector.shape_cast %0 : vector<1x16x256xbf16> to vector<16x256xbf16>
    %c0_2 = arith.constant 0 : index
    %c0_3 = arith.constant 0 : index
    %c0_4 = arith.constant 0 : index
    %2 = vector.load %arg4[%c0_2, %c0_3, %c0_4] : memref<4x256x128xbf16, #tpu.memory_space<vmem>>, vector<1x256x128xbf16>
    %3 = vector.shape_cast %2 : vector<1x256x128xbf16> to vector<256x128xbf16>
    %cst = arith.constant dense<0.000000e+00> : vector<16x128xf32>
    %4 = tpu.matmul %1, %3, %cst {dimension_numbers = #tpu.dot_dimension_numbers<[1], [0], [0], [1], [0, 0, 1, 1], [], []>} : vector<16x256xbf16>, vector<256x128xbf16>, vector<16x128xf32> -> vector<16x128xf32>
    %c0_5 = arith.constant 0 : index
    %c4 = arith.constant 4 : index
    %c0_6 = arith.constant 0 : index
    %5 = vector.load %arg3[%c0_5, %c4, %c0_6] : memref<1x28x256xbf16, #tpu.memory_space<vmem>>, vector<1x16x256xbf16>
    %6 = vector.shape_cast %5 : vector<1x16x256xbf16> to vector<16x256xbf16>
    %c1 = arith.constant 1 : index
    %c0_7 = arith.constant 0 : index
    %c0_8 = arith.constant 0 : index
    %7 = vector.load %arg4[%c1, %c0_7, %c0_8] : memref<4x256x128xbf16, #tpu.memory_space<vmem>>, vector<1x256x128xbf16>
    %8 = vector.shape_cast %7 : vector<1x256x128xbf16> to vector<256x128xbf16>
    %cst_9 = arith.constant dense<0.000000e+00> : vector<16x128xf32>
    %9 = tpu.matmul %6, %8, %cst_9 {dimension_numbers = #tpu.dot_dimension_numbers<[1], [0], [0], [1], [0, 0, 1, 1], [], []>} : vector<16x256xbf16>, vector<256x128xbf16>, vector<16x128xf32> -> vector<16x128xf32>
    %10 = arith.addf %4, %9 : vector<16x128xf32>
    %c0_10 = arith.constant 0 : index
    %c8 = arith.constant 8 : index
    %c0_11 = arith.constant 0 : index
    %11 = vector.load %arg3[%c0_10, %c8, %c0_11] : memref<1x28x256xbf16, #tpu.memory_space<vmem>>, vector<1x16x256xbf16>
    %12 = vector.shape_cast %11 : vector<1x16x256xbf16> to vector<16x256xbf16>
    %c2 = arith.constant 2 : index
    %c0_12 = arith.constant 0 : index
    %c0_13 = arith.constant 0 : index
    %13 = vector.load %arg4[%c2, %c0_12, %c0_13] : memref<4x256x128xbf16, #tpu.memory_space<vmem>>, vector<1x256x128xbf16>
    %14 = vector.shape_cast %13 : vector<1x256x128xbf16> to vector<256x128xbf16>
    %cst_14 = arith.constant dense<0.000000e+00> : vector<16x128xf32>
    %15 = tpu.matmul %12, %14, %cst_14 {dimension_numbers = #tpu.dot_dimension_numbers<[1], [0], [0], [1], [0, 0, 1, 1], [], []>} : vector<16x256xbf16>, vector<256x128xbf16>, vector<16x128xf32> -> vector<16x128xf32>
    %16 = arith.addf %10, %15 : vector<16x128xf32>
    %c0_15 = arith.constant 0 : index
    %c12 = arith.constant 12 : index
    %c0_16 = arith.constant 0 : index
    %17 = vector.load %arg3[%c0_15, %c12, %c0_16] : memref<1x28x256xbf16, #tpu.memory_space<vmem>>, vector<1x16x256xbf16>
    %18 = vector.shape_cast %17 : vector<1x16x256xbf16> to vector<16x256xbf16>
    %c3 = arith.constant 3 : index
    %c0_17 = arith.constant 0 : index
    %c0_18 = arith.constant 0 : index
    %19 = vector.load %arg4[%c3, %c0_17, %c0_18] : memref<4x256x128xbf16, #tpu.memory_space<vmem>>, vector<1x256x128xbf16>
    %20 = vector.shape_cast %19 : vector<1x256x128xbf16> to vector<256x128xbf16>
    %cst_19 = arith.constant dense<0.000000e+00> : vector<16x128xf32>
    %21 = tpu.matmul %18, %20, %cst_19 {dimension_numbers = #tpu.dot_dimension_numbers<[1], [0], [0], [1], [0, 0, 1, 1], [], []>} : vector<16x256xbf16>, vector<256x128xbf16>, vector<16x128xf32> -> vector<16x128xf32>
    %22 = arith.addf %16, %21 : vector<16x128xf32>
    %c0_20 = arith.constant 0 : index
    %c0_21 = arith.constant 0 : index
    %23 = vector.load %arg5[%c0_20, %c0_21] : memref<1x128xf32, #tpu.memory_space<vmem>>, vector<1x128xf32>
    %24 = vector.broadcast %23 : vector<1x128xf32> to vector<16x128xf32>
    %25 = arith.addf %22, %24 : vector<16x128xf32>
    %c0_22 = arith.constant 0 : index
    %c0_23 = arith.constant 0 : index
    %c0_24 = arith.constant 0 : index
    %26 = vector.load %arg6[%c0_22, %c0_23, %c0_24] : memref<1x16x128xf32, #tpu.memory_space<vmem>>, vector<1x16x128xf32>
    %27 = vector.shape_cast %26 : vector<1x16x128xf32> to vector<16x128xf32>
    %28 = vector.shape_cast %25 : vector<16x128xf32> to vector<1x16x128xf32>
    tpu.vector_store %arg6[%c0_22, %c0_23, %c0_24], %28 {strides = array<i32>} : memref<1x16x128xf32, #tpu.memory_space<vmem>>, vector<1x16x128xf32>,
    return
  }
  func.func @transform_0(%arg0: i32, %arg1: i32, %arg2: i32) -> (i32, i32, i32) {
    %c0_i32 = arith.constant 0 : i32
    %c0_i32_0 = arith.constant 0 : i32
    %c0_i32_1 = arith.constant 0 : i32
    return %arg0, %c0_i32, %c0_i32_0 : i32, i32, i32
  }
  func.func @transform_1(%arg0: i32, %arg1: i32, %arg2: i32) -> (i32, i32, i32) {
    %c0_i32 = arith.constant 0 : i32
    %c0_i32_0 = arith.constant 0 : i32
    %c0_i32_1 = arith.constant 0 : i32
    return %c0_i32, %c0_i32_0, %arg1 : i32, i32, i32
  }
  func.func @transform_2(%arg0: i32, %arg1: i32, %arg2: i32) -> (i32, i32) {
    %c0_i32 = arith.constant 0 : i32
    %c0_i32_0 = arith.constant 0 : i32
    return %c0_i32, %arg1 : i32, i32
  }
  func.func @transform_3(%arg0: i32, %arg1: i32, %arg2: i32) -> (i32, i32, i32) {
    %c0_i32 = arith.constant 0 : i32
    return %arg0, %arg2, %arg1 : i32, i32, i32
  }
}

</mosaic_0001>

<llo_original>
// kernel: tpu_custom_call.1
$region0: #{tpu_custom_call.1}
  #allocation0 [shape = 'u32[]', space=smem, size = 0x4, offset = 0x4, fixed_abs, tag = 'smem constant byte address 0x4 - core index']
  #allocation1 [shape = 'u32[144,128]{1,0:T(1,128)}', space=vmem, size = 0x12000, scoped, tag = 'internal scratch']
  %s0 = inlined_call_operand.hbm [shape: f32[8,128], index: 0, kind: input, shape index: {}]
  %s1 = inlined_call_operand.hbm [shape: f32[8,128], index: 1, kind: output, shape index: {}]
  %s2 = sld [smem:[#allocation0]]
  $region18: #{tpu_custom_call.1} parent=0
    _
  %s4 = ssub.s32 1, %s2
  %s5 = scalar_select 0, %s4, %s2
  $region1: #{tpu_custom_call.1} parent=0
    #allocation2 [shape = 'u8[4096]{0}', space=vmem, size = 0x1000, scoped, tag = 'input window, operand 0, single buffered']
    #allocation3 [shape = 's32[1]{0}', space=sflag, size = 0x4, scoped, tag = 'scoped memory for tpu_custom_call.1']
    #allocation4 [shape = 's32[1]{0}', space=sflag, size = 0x4, scoped, tag = 'scoped memory for tpu_custom_call.1']
    #allocation5 [shape = 'u8[4096]{0}', space=vmem, size = 0x1000, scoped, tag = 'output window, operand 0, single buffered']
    %6 = vsyncpa [#allocation3], 0
    %7 = vsyncpa [#allocation4], 0
    // Predicated region
    $region2: #{tpu_custom_call.1} parent=1 // pred_check
      _
    $region3: #{tpu_custom_call.1} parent=1 // pred_check_branch
      %9 = sbr.rel (0) target = $region5
    $region4: #{tpu_custom_call.1} parent=1 // pred_region
      %s11 = ssub.s32 128, 128
      %12 = vsyncadd [#allocation3], %s11
      %s14 = sshll.u32 [#allocation2], 4
      %s15 = int_to_ptr.vmem [resolvable:$true] %s14
      %17 = dma.hbm_to_vmem [thread:$0]  %s0, 128, %s15, [#allocation3]
    $region5: #{tpu_custom_call.1} parent=1 // pred_fallthru
      _
    // Predicated region
    $region6: #{tpu_custom_call.1} parent=1 // pred_check
      _
    $region7: #{tpu_custom_call.1} parent=1 // pred_check_branch
      %19 = sbr.rel (0) target = $region9
    $region8: #{tpu_custom_call.1} parent=1 // pred_region
      %20 = dma.done [#allocation3], 128
    $region9: #{tpu_custom_call.1} parent=1 // pred_fallthru
      _
    %v21 = vld [vmem:[#allocation2] sm:$0xff]
    %v22 = vadd.f32 %v21, 1.0
    %23 = vst [vmem:[#allocation5] sm:$0xff] %v22
    // Predicated region
    $region10: #{tpu_custom_call.1} parent=1 // pred_check
      _
    $region11: #{tpu_custom_call.1} parent=1 // pred_check_branch
      %25 = sbr.rel (0) target = $region13
    $region12: #{tpu_custom_call.1} parent=1 // pred_region
      %s27 = ssub.s32 128, 128
      %28 = vsyncadd [#allocation4], %s27
      %s30 = sshll.u32 [#allocation5], 4
      %s31 = int_to_ptr.vmem [resolvable:$true] %s30
      %33 = dma.vmem_to_hbm [thread:$0]  %s31, 128, %s1, [#allocation4]
    $region13: #{tpu_custom_call.1} parent=1 // pred_fallthru
      _
    // Predicated region
    $region14: #{tpu_custom_call.1} parent=1 // pred_check
      _
    $region15: #{tpu_custom_call.1} parent=1 // pred_check_branch
      %35 = sbr.rel (0) target = $region17
    $region16: #{tpu_custom_call.1} parent=1 // pred_region
      %36 = dma.done [#allocation4], 128
    $region17: #{tpu_custom_call.1} parent=1 // pred_fallthru
      _
    %37 = vsyncpa [#allocation3], 1
    %38 = vsyncpa [#allocation4], 1

// kernel: _lambda_.5
$region0: #{_lambda_.5}
  #allocation0 [shape = 'u32[]', space=smem, size = 0x4, offset = 0x4, fixed_abs, tag = 'smem constant byte address 0x4 - core index']
  #allocation1 [shape = 'u32[144,128]{1,0:T(1,128)}', space=vmem, size = 0x12000, scoped, tag = 'internal scratch']
  %s0 = inlined_call_operand.vmem [shape: bf16[2,1056,24], index: 0, kind: input, shape index: {}]
  %s1 = inlined_call_operand.vmem [shape: bf16[2,24,128], index: 1, kind: input, shape index: {}]
  %s2 = inlined_call_operand.vmem [shape: f32[1,128], index: 2, kind: input, shape index: {}]
  %s3 = inlined_call_operand.vmem [shape: bf16[2,1024,128], index: 3, kind: output, shape index: {}]
  %s4 = sld [smem:[#allocation0]]
  $region45: #{_lambda_.5} parent=0
    _
  %s6 = ssub.s32 1, %s4
  %s7 = scalar_select 0, %s6, %s4
  loop: start=0, step=1, limit=10
  $region2: #{_lambda_.5} parent=0 // loop_pre_header
    _
  $region3: #{_lambda_.5} parent=0 // loop_header
    %s9 = sphi 0, %s13
    %p10 = scmp.ge.s32.totalorder %s9, 10
    %s16 = sphi 0, %s35
    %s17 = sphi 0, %s31
    %s18 = sphi 0, %s27
    %s19 = sphi 0, %s16
    %s20 = sphi 0, %s17
    %s21 = sphi 0, %s18
    %s22 = sphi 0, %s19
    %s23 = sphi 0, %s20
    %s24 = sphi 0, %s21
    %s38 = sphi 0, %s40
    %s41 = sphi 0, %s38
    %s42 = sphi 0, %s41
    %s58 = sphi 0, %s42
    %s64 = sphi 0, %s66
    %s67 = sphi 0, %s64
    %s68 = sphi 0, %s67
    %s84 = sphi 0, %s68
    %s90 = sphi 0, %s92
    %s93 = sphi 0, %s90
    %s94 = sphi 0, %s93
    %s110 = sphi 0, %s94
    %s120 = sphi 0, %s122
    %s123 = sphi 0, %s120
    %s124 = sphi 0, %s123
    %s140 = sphi 0, %s124
  $region4: #{_lambda_.5} parent=0 // loop_header_branch
    %12 = sbr.rel (%p10) target = $region8
  $region5: #{_lambda_.5} parent=0 // loop_body
    %s14 = ssub.s32 %s9, 1
    %s15 = ssub.s32 %s9, 2
    %s25 = sadd.s32 1, %s18
    %p26 = scmp.ge.s32.totalorder %s25, 4
    %s27 = scalar_select %p26, 0, %s25
    %s28 = sadd.s32 1, %s17
    %s29 = scalar_select %p26, %s28, %s17
    %p30 = scmp.ge.s32.totalorder %s29, 1
    %s31 = scalar_select %p30, 0, %s29
    %s32 = sadd.s32 1, %s16
    %s33 = scalar_select %p30, %s32, %s16
    %p34 = scmp.ge.s32.totalorder %s33, 2
    %s35 = scalar_select %p34, 0, %s33
    %s36 = ssub.s32 %s16, %s35
    %p37 = scmp.eq.s32.totalorder %s36, 0
    %s39 = sadd.s32 %s38, 1
    %s40 = scalar_select %p37, %s38, %s39
    %p43 = pneg %p37
    %p44 = scmp.eq.s32.totalorder %s9, 7
    %p45 = por %p43, %p44
    %p46 = scmp.ne.s32.totalorder %s38, %s41
    %p47 = scmp.eq.s32.totalorder %s9, 0
    %p48 = por %p46, %p47
    %p49 = scmp.ne.s32.totalorder %s38, %s41
    %p50 = scmp.eq.s32.totalorder %s14, 7
    %p51 = por %p49, %p50
    %p52 = scmp.ne.s32.totalorder %s41, %s42
    %p53 = scmp.eq.s32.totalorder %s14, 0
    %p54 = por %p52, %p53
    %p55 = scmp.ne.s32.totalorder %s41, %s42
    %p56 = scmp.eq.s32.totalorder %s15, 7
    %p57 = por %p55, %p56
    %p59 = scmp.ne.s32.totalorder %s42, %s58
    %p60 = scmp.eq.s32.totalorder %s15, 0
    %p61 = por %p59, %p60
    %s62 = ssub.s32 %s17, %s31
    %p63 = scmp.eq.s32.totalorder %s62, 0
    %s65 = sadd.s32 %s64, 1
    %s66 = scalar_select %p63, %s64, %s65
    %p69 = pneg %p63
    %p70 = scmp.eq.s32.totalorder %s9, 7
    %p71 = por %p69, %p70
    %p72 = scmp.ne.s32.totalorder %s64, %s67
    %p73 = scmp.eq.s32.totalorder %s9, 0
    %p74 = por %p72, %p73
    %p75 = scmp.ne.s32.totalorder %s64, %s67
    %p76 = scmp.eq.s32.totalorder %s14, 7
    %p77 = por %p75, %p76
    %p78 = scmp.ne.s32.totalorder %s67, %s68
    %p79 = scmp.eq.s32.totalorder %s14, 0
    %p80 = por %p78, %p79
    %p81 = scmp.ne.s32.totalorder %s67, %s68
    %p82 = scmp.eq.s32.totalorder %s15, 7
    %p83 = por %p81, %p82
    %p85 = scmp.ne.s32.totalorder %s68, %s84
    %p86 = scmp.eq.s32.totalorder %s15, 0
    %p87 = por %p85, %p86
    %s88 = ssub.s32 %s17, %s31
    %p89 = scmp.eq.s32.totalorder %s88, 0
    %s91 = sadd.s32 %s90, 1
    %s92 = scalar_select %p89, %s90, %s91
    %p95 = pneg %p89
    %p96 = scmp.eq.s32.totalorder %s9, 7
    %p97 = por %p95, %p96
    %p98 = scmp.ne.s32.totalorder %s90, %s93
    %p99 = scmp.eq.s32.totalorder %s9, 0
    %p100 = por %p98, %p99
    %p101 = scmp.ne.s32.totalorder %s90, %s93
    %p102 = scmp.eq.s32.totalorder %s14, 7
    %p103 = por %p101, %p102
    %p104 = scmp.ne.s32.totalorder %s93, %s94
    %p105 = scmp.eq.s32.totalorder %s14, 0
    %p106 = por %p104, %p105
    %p107 = scmp.ne.s32.totalorder %s93, %s94
    %p108 = scmp.eq.s32.totalorder %s15, 7
    %p109 = por %p107, %p108
    %p111 = scmp.ne.s32.totalorder %s94, %s110
    %p112 = scmp.eq.s32.totalorder %s15, 0
    %p113 = por %p111, %p112
    %s114 = ssub.s32 %s16, %s35
    %s115 = ssub.s32 %s18, %s27
    %s116 = sor.u32 %s114, %s115
    %s117 = ssub.s32 %s17, %s31
    %s118 = sor.u32 %s116, %s117
    %p119 = scmp.eq.s32.totalorder %s118, 0
    %s121 = sadd.s32 %s120, 1
    %s122 = scalar_select %p119, %s120, %s121
    %p125 = pneg %p119
    %p126 = scmp.eq.s32.totalorder %s9, 7
    %p127 = por %p125, %p126
    %p128 = scmp.ne.s32.totalorder %s120, %s123
    %p129 = scmp.eq.s32.totalorder %s9, 0
    %p130 = por %p128, %p129
    %p131 = scmp.ne.s32.totalorder %s120, %s123
    %p132 = scmp.eq.s32.totalorder %s14, 7
    %p133 = por %p131, %p132
    %p134 = scmp.ne.s32.totalorder %s123, %s124
    %p135 = scmp.eq.s32.totalorder %s14, 0
    %p136 = por %p134, %p135
    %p137 = scmp.ne.s32.totalorder %s123, %s124
    %p138 = scmp.eq.s32.totalorder %s15, 7
    %p139 = por %p137, %p138
    %p141 = scmp.ne.s32.totalorder %s124, %s140
    %p142 = scmp.eq.s32.totalorder %s15, 0
    %p143 = por %p141, %p142
    %p144 = scmp.le.s32.totalorder 1, %s9
    %p145 = scmp.lt.s32.totalorder %s9, 9
    %p146 = pnand %p144, %p145
    %p147 = pneg %p146
    // Predicated region
    $region9: #{_lambda_.5} parent=5 // pred_check
      _
    $region10: #{_lambda_.5} parent=5 // pred_check_branch
      %149 = sbr.rel (%p146) target = $region12
    $region11: #{_lambda_.5} parent=5 // pred_region
      %s150 = ssub.s32 %s9, 1
      // Predicated region
      $region13: #{_lambda_.5} parent=11 // pred_check
        %p151 = pneg %p80
      $region14: #{_lambda_.5} parent=11 // pred_check_branch
        %153 = sbr.rel (%p151) target = $region16
      $region15: #{_lambda_.5} parent=11 // pred_region
        %p154 = scmp.lt.s32.totalorder %s20, 0
        %s155 = scalar_select %p154, %s20, 0
        %s156 = smul.addr %s155, 4
        %s157 = scalar_lea.vmem %s1, %s156
      $region16: #{_lambda_.5} parent=11 // pred_fallthru
        _
      // Predicated region
      $region17: #{_lambda_.5} parent=11 // pred_check
        %p158 = pneg %p106
      $region18: #{_lambda_.5} parent=11 // pred_check_branch
        %160 = sbr.rel (%p158) target = $region20
      $region19: #{_lambda_.5} parent=11 // pred_region
        %p161 = scmp.lt.s32.totalorder %s20, 0
        %s162 = scalar_select %p161, %s20, 0
        %s163 = scalar_lea.vmem %s2, %s162
      $region20: #{_lambda_.5} parent=11 // pred_fallthru
        _
    $region12: #{_lambda_.5} parent=5 // pred_fallthru
      _
    %p164 = scmp.lt.s32.totalorder %s9, 8
    // Predicated region
    $region21: #{_lambda_.5} parent=5 // pred_check
      %p165 = pneg %p164
    $region22: #{_lambda_.5} parent=5 // pred_check_branch
      %167 = sbr.rel (%p165) target = $region24
    $region23: #{_lambda_.5} parent=5 // pred_region
      // Predicated region
      $region25: #{_lambda_.5} parent=23 // pred_check
        %p168 = pneg %p48
      $region26: #{_lambda_.5} parent=23 // pred_check_branch
        %170 = sbr.rel (%p168) target = $region28
      $region27: #{_lambda_.5} parent=23 // pred_region
        %p171 = scmp.lt.s32.totalorder %s16, 1
        %s172 = scalar_select %p171, %s16, 1
        %s173 = smul.addr %s172, 132
        %s174 = smul.addr %s173, 4
        %s175 = scalar_lea.vmem %s0, %s174
      $region28: #{_lambda_.5} parent=23 // pred_fallthru
        _
    $region24: #{_lambda_.5} parent=5 // pred_fallthru
      _
    %p176 = scmp.le.s32.totalorder 1, %s9
    %p177 = scmp.lt.s32.totalorder %s9, 9
    %p178 = pnand %p176, %p177
    %p179 = pneg %p178
    // Predicated region
    $region29: #{_lambda_.5} parent=5 // pred_check
      _
    $region30: #{_lambda_.5} parent=5 // pred_check_branch
      %181 = sbr.rel (%p178) target = $region32
    $region31: #{_lambda_.5} parent=5 // pred_region
      %s182 = ssub.s32 %s9, 1
      %p183 = scmp.lt.s32.totalorder %s19, 1
      %s184 = scalar_select %p183, %s19, 1
      %s185 = smul.addr %s184, 132
      %s186 = smul.addr %s185, 4
      %s187 = scalar_lea.vmem %s0, %s186
      %p188 = pneg %p54
      %p189 = pneg %p51
      %p190 = scmp.lt.s32.totalorder %s20, 0
      %s191 = scalar_select %p190, %s20, 0
      %s192 = smul.addr %s191, 4
      %s193 = scalar_lea.vmem %s1, %s192
      %p194 = pneg %p80
      %p195 = pneg %p77
      %p196 = scmp.lt.s32.totalorder %s20, 0
      %s197 = scalar_select %p196, %s20, 0
      %s198 = scalar_lea.vmem %s2, %s197
      %p199 = pneg %p106
      %p200 = pneg %p103
      %p201 = pneg %p136
      %p202 = pneg %p133
      %s203 = smul.u32 32, %s21
      %p204 = scmp.lt.s32.totalorder %s19, 1
      %s205 = scalar_select %p204, %s19, 1
      %p206 = scmp.lt.s32.totalorder %s203, 127
      %s207 = scalar_select %p206, %s203, 127
      %p208 = scmp.lt.s32.totalorder %s20, 0
      %s209 = scalar_select %p208, %s20, 0
      %s210 = sadd.s32 %s209, %s207
      %s211 = smul.addr %s205, 128
      %s212 = sadd.s32 %s210, %s211
      %s213 = smul.addr %s212, 4
      %s214 = scalar_lea.vmem %s3, %s213
      %p215 = scmp.lt.s32.totalorder %s19, 1
      %s216 = scalar_select %p215, %s19, 1
      %s217 = smul.addr %s216, 132
      %s218 = smul.addr %s217, 4
      %s219 = scalar_lea.vmem %s0, %s218
      %p220 = scmp.lt.s32.totalorder %s20, 0
      %s221 = scalar_select %p220, %s20, 0
      %s222 = smul.addr %s221, 4
      %s223 = scalar_lea.vmem %s1, %s222
      %p224 = scmp.lt.s32.totalorder %s20, 0
      %s225 = scalar_select %p224, %s20, 0
      %s226 = scalar_lea.vmem %s2, %s225
      %s227 = smul.u32 32, %s21
      %p228 = scmp.lt.s32.totalorder %s19, 1
      %s229 = scalar_select %p228, %s19, 1
      %p230 = scmp.lt.s32.totalorder %s227, 127
      %s231 = scalar_select %p230, %s227, 127
      %p232 = scmp.lt.s32.totalorder %s20, 0
      %s233 = scalar_select %p232, %s20, 0
      %s234 = sadd.s32 %s233, %s231
      %s235 = smul.addr %s229, 128
      %s236 = sadd.s32 %s234, %s235
      %s237 = smul.addr %s236, 4
      %s238 = scalar_lea.vmem %s3, %s237
      %s239 = smul.u32 32, %s21
      %s241 = smul.u32 %s21, 256
      %s242 = sshra.s32 %s241, 3
      %s243 = sand.u32 %s241, 7
      %s244 = smul.addr %s242, 4
      %s245 = scalar_lea.vmem %s219, %s244
      %v246 = vld [vmem:[%s245] sm:$0xf]
      %v247 = vld [vmem:[%s245 + $0x4] sm:$0xf]
      %v248 = vld [vmem:[%s245 + $0x8] sm:$0xf]
      %v249 = vld [vmem:[%s245 + $0xc] sm:$0xf]
      %v250 = vld [vmem:[%s245 + $0x10] sm:$0xf]
      %v251 = vld [vmem:[%s245 + $0x14] sm:$0xf]
      %v252 = vld [vmem:[%s245 + $0x18] sm:$0xf]
      %v253 = vld [vmem:[%s245 + $0x1c] sm:$0xf]
      %v254 = vld [vmem:[%s245 + $0x20] sm:$0xf]
      %v255 = vld [vmem:[%s245 + $0x24] sm:$0xf]
      %v256 = vld [vmem:[%s245 + $0x28] sm:$0xf]
      %v257 = vld [vmem:[%s245 + $0x2c] sm:$0xf]
      %v258 = vld [vmem:[%s245 + $0x30] sm:$0xf]
      %v259 = vld [vmem:[%s245 + $0x34] sm:$0xf]
      %v260 = vld [vmem:[%s245 + $0x38] sm:$0xf]
      %v261 = vld [vmem:[%s245 + $0x3c] sm:$0xf]
      %v262 = vld [vmem:[%s245 + $0x40] sm:$0xf]
      %v263 = vld [vmem:[%s245 + $0x44] sm:$0xf]
      %v264 = vld [vmem:[%s245 + $0x48] sm:$0xf]
      %v265 = vld [vmem:[%s245 + $0x4c] sm:$0xf]
      %v266 = vld [vmem:[%s245 + $0x50] sm:$0xf]
      %v267 = vld [vmem:[%s245 + $0x54] sm:$0xf]
      %v268 = vld [vmem:[%s245 + $0x58] sm:$0xf]
      %v269 = vld [vmem:[%s245 + $0x5c] sm:$0xf]
      %v270 = vld [vmem:[%s245 + $0x60] sm:$0xf]
      %v271 = vld [vmem:[%s245 + $0x64] sm:$0xf]
      %v272 = vld [vmem:[%s245 + $0x68] sm:$0xf]
      %v273 = vld [vmem:[%s245 + $0x6c] sm:$0xf]
      %v274 = vld [vmem:[%s245 + $0x70] sm:$0xf]
      %v275 = vld [vmem:[%s245 + $0x74] sm:$0xf]
      %v276 = vld [vmem:[%s245 + $0x78] sm:$0xf]
      %v277 = vld [vmem:[%s245 + $0x7c] sm:$0xf]
      %v278 = vld [vmem:[%s223] sm:$0xf]
      %v279 = vld [vmem:[%s223 + $0x4] sm:$0xf]
      %v280 = vld [vmem:[%s223 + $0x8] sm:$0xf]
      %s281 = sadd.s32 %s241, 32
      %s282 = sshra.s32 %s281, 3
      %s283 = sand.u32 %s281, 7
      %s284 = smul.addr %s282, 4
      %s285 = scalar_lea.vmem %s219, %s284
      %v286 = vld [vmem:[%s285] sm:$0xf]
      %v287 = vld [vmem:[%s285 + $0x4] sm:$0xf]
      %v288 = vld [vmem:[%s285 + $0x8] sm:$0xf]
      %v289 = vld [vmem:[%s285 + $0xc] sm:$0xf]
      %v290 = vld [vmem:[%s285 + $0x10] sm:$0xf]
      %v291 = vld [vmem:[%s285 + $0x14] sm:$0xf]
      %v292 = vld [vmem:[%s285 + $0x18] sm:$0xf]
      %v293 = vld [vmem:[%s285 + $0x1c] sm:$0xf]
      %v294 = vld [vmem:[%s285 + $0x20] sm:$0xf]
      %v295 = vld [vmem:[%s285 + $0x24] sm:$0xf]
      %v296 = vld [vmem:[%s285 + $0x28] sm:$0xf]
      %v297 = vld [vmem:[%s285 + $0x2c] sm:$0xf]
      %v298 = vld [vmem:[%s285 + $0x30] sm:$0xf]
      %v299 = vld [vmem:[%s285 + $0x34] sm:$0xf]
      %v300 = vld [vmem:[%s285 + $0x38] sm:$0xf]
      %v301 = vld [vmem:[%s285 + $0x3c] sm:$0xf]
      %v302 = vld [vmem:[%s285 + $0x40] sm:$0xf]
      %v303 = vld [vmem:[%s285 + $0x44] sm:$0xf]
      %v304 = vld [vmem:[%s285 + $0x48] sm:$0xf]
      %v305 = vld [vmem:[%s285 + $0x4c] sm:$0xf]
      %v306 = vld [vmem:[%s285 + $0x50] sm:$0xf]
      %v307 = vld [vmem:[%s285 + $0x54] sm:$0xf]
      %v308 = vld [vmem:[%s285 + $0x58] sm:$0xf]
      %v309 = vld [vmem:[%s285 + $0x5c] sm:$0xf]
      %v310 = vld [vmem:[%s285 + $0x60] sm:$0xf]
      %v311 = vld [vmem:[%s285 + $0x64] sm:$0xf]
      %v312 = vld [vmem:[%s285 + $0x68] sm:$0xf]
      %v313 = vld [vmem:[%s285 + $0x6c] sm:$0xf]
      %v314 = vld [vmem:[%s285 + $0x70] sm:$0xf]
      %v315 = vld [vmem:[%s285 + $0x74] sm:$0xf]
      %v316 = vld [vmem:[%s285 + $0x78] sm:$0xf]
      %v317 = vld [vmem:[%s285 + $0x7c] sm:$0xf]
      %s318 = scalar_lea.vmem %s223, 12
      %v319 = vld [vmem:[%s318] sm:$0xf]
      %v320 = vld [vmem:[%s318 + $0x4] sm:$0xf]
      %v321 = vld [vmem:[%s318 + $0x8] sm:$0xf]
      %v354 = vunpack.c.l.b16 %v286
      %v355 = vunpack.c.l.b16 %v287
      %v356 = vunpack.c.l.b16 %v288
      %v357 = vunpack.c.l.b16 %v289
      %v358 = vunpack.c.l.b16 %v290
      %v359 = vunpack.c.l.b16 %v291
      %v360 = vunpack.c.l.b16 %v292
      %v361 = vunpack.c.l.b16 %v293
      %v362 = vunpack.c.l.b16 %v294
      %v363 = vunpack.c.l.b16 %v295
      %v364 = vunpack.c.l.b16 %v296
      %v365 = vunpack.c.l.b16 %v297
      %v366 = vunpack.c.l.b16 %v298
      %v367 = vunpack.c.l.b16 %v299
      %v368 = vunpack.c.l.b16 %v300
      %v369 = vunpack.c.l.b16 %v301
      %v370 = vunpack.c.l.b16 %v302
      %v371 = vunpack.c.l.b16 %v303
      %v372 = vunpack.c.l.b16 %v304
      %v373 = vunpack.c.l.b16 %v305
      %v374 = vunpack.c.l.b16 %v306
      %v375 = vunpack.c.l.b16 %v307
      %v376 = vunpack.c.l.b16 %v308
      %v377 = vunpack.c.l.b16 %v309
      %v378 = vunpack.c.l.b16 %v310
      %v379 = vunpack.c.l.b16 %v311
      %v380 = vunpack.c.l.b16 %v312
      %v381 = vunpack.c.l.b16 %v313
      %v382 = vunpack.c.l.b16 %v314
      %v383 = vunpack.c.l.b16 %v315
      %v384 = vunpack.c.l.b16 %v316
      %v385 = vunpack.c.l.b16 %v317
      %v386 = vpack.c.b16 %v355, %v354
      %v387 = vpack.c.b16 %v357, %v356
      %v388 = vpack.c.b16 %v359, %v358
      %v389 = vpack.c.b16 %v361, %v360
      %v390 = vpack.c.b16 %v363, %v362
      %v391 = vpack.c.b16 %v365, %v364
      %v392 = vpack.c.b16 %v367, %v366
      %v393 = vpack.c.b16 %v369, %v368
      %v394 = vpack.c.b16 %v371, %v370
      %v395 = vpack.c.b16 %v373, %v372
      %v396 = vpack.c.b16 %v375, %v374
      %v397 = vpack.c.b16 %v377, %v376
      %v398 = vpack.c.b16 %v379, %v378
      %v399 = vpack.c.b16 %v381, %v380
      %v400 = vpack.c.b16 %v383, %v382
      %v401 = vpack.c.b16 %v385, %v384
      %v405 = vunpack.c.l.b16 %v319
      %v406 = vunpack.c.l.b16 %v320
      %v407 = vunpack.c.l.b16 %v321
      %v408 = vpack.c.b16 %v406, %v405
      %v409 = vpack.c.b16 %v407, %v407
      %vm411 = vcmask 195584
      %v413 = vsel %vm411, %v386, 0
      %v416 = vsel %vm411, %v387, 0
      %v419 = vsel %vm411, %v388, 0
      %v422 = vsel %vm411, %v389, 0
      %v425 = vsel %vm411, %v390, 0
      %v428 = vsel %vm411, %v391, 0
      %v431 = vsel %vm411, %v392, 0
      %v434 = vsel %vm411, %v393, 0
      %v437 = vsel %vm411, %v394, 0
      %v440 = vsel %vm411, %v395, 0
      %v443 = vsel %vm411, %v396, 0
      %v446 = vsel %vm411, %v397, 0
      %v449 = vsel %vm411, %v398, 0
      %v452 = vsel %vm411, %v399, 0
      %v455 = vsel %vm411, %v400, 0
      %v458 = vsel %vm411, %v401, 0
      %vm460 = vcmask 1043456
      %v462 = vsel %vm460, %v409, 0
      %464 = vmatprep.subr.bf16.mxu0 0
      %465 = vmatpush1.bf16.msra.mxu0 %v408
      %466 = vmatprep.subr.bf16.mxu0 0
      %467 = vmatpush1.bf16.msra.mxu0 %v462
      %468 = vmatprep.subr.bf16.mxu0 0
      %469 = vmatpush1.bf16.msra.mxu0 0
      %470 = vmatprep.subr.bf16.mxu0 0
      %471 = vmatpush1.bf16.msra.mxu0 0
      %472 = vmatprep.subr.bf16.mxu0 0
      %473 = vmatpush1.bf16.msra.mxu0 0
      %474 = vmatprep.subr.bf16.mxu0 0
      %475 = vmatpush1.bf16.msra.mxu0 0
      %476 = vmatprep.subr.bf16.mxu0 0
      %477 = vmatpush1.bf16.msra.mxu0 0
      %478 = vmatprep.subr.bf16.mxu0 0
      %479 = vmatpush1.bf16.msra.mxu0 0
      %480 = vmatprep.subr.bf16.mxu0 0
      %481 = vmatpush1.bf16.msra.mxu0 0
      %482 = vmatprep.subr.bf16.mxu0 0
      %483 = vmatpush1.bf16.msra.mxu0 0
      %484 = vmatprep.subr.bf16.mxu0 0
      %485 = vmatpush1.bf16.msra.mxu0 0
      %486 = vmatprep.subr.bf16.mxu0 0
      %487 = vmatpush1.bf16.msra.mxu0 0
      %488 = vmatprep.subr.bf16.mxu0 0
      %489 = vmatpush1.bf16.msra.mxu0 0
      %490 = vmatprep.subr.bf16.mxu0 0
      %491 = vmatpush1.bf16.msra.mxu0 0
      %492 = vmatprep.subr.bf16.mxu0 0
      %493 = vmatpush1.bf16.msra.mxu0 0
      %494 = vmatprep.subr.bf16.mxu0 0
      %495 = vmatpush1.bf16.msra.mxu0 0
      %496 = vmatprep.mubr.bf16.mxu0 0
      %497 = vmatmul.mubr.bf16.gmra.mrb[0].mxu0 %v413
      %v498 = vpop.f32.mrb[0].mxu0
      %v499 = vadd.f32 0.0, %v498
      %v500 = vpop.f32.mrb[0].mxu0
      %v501 = vpop.f32.mrb[0].mxu0
      %v502 = vadd.f32 0.0, %v501
      %v503 = vpop.f32.mrb[0].mxu0
      %504 = vmatprep.mubr.bf16.mxu0 0
      %505 = vmatmul.mubr.bf16.gmra.mrb[0].mxu0 %v416
      %v506 = vpop.f32.mrb[0].mxu0
      %v507 = vadd.f32 0.0, %v506
      %v508 = vpop.f32.mrb[0].mxu0
      %v509 = vpop.f32.mrb[0].mxu0
      %v510 = vadd.f32 0.0, %v509
      %v511 = vpop.f32.mrb[0].mxu0
      %512 = vmatprep.mubr.bf16.mxu0 0
      %513 = vmatmul.mubr.bf16.gmra.mrb[0].mxu0 %v419
      %v514 = vpop.f32.mrb[0].mxu0
      %v515 = vadd.f32 0.0, %v514
      %v516 = vpop.f32.mrb[0].mxu0
      %v517 = vpop.f32.mrb[0].mxu0
      %v518 = vadd.f32 0.0, %v517
      %v519 = vpop.f32.mrb[0].mxu0
      %520 = vmatprep.mubr.bf16.mxu0 0
      %521 = vmatmul.mubr.bf16.gmra.mrb[0].mxu0 %v422
      %v522 = vpop.f32.mrb[0].mxu0
      %v523 = vadd.f32 0.0, %v522
      %v524 = vpop.f32.mrb[0].mxu0
      %v525 = vpop.f32.mrb[0].mxu0
      %v526 = vadd.f32 0.0, %v525
      %v527 = vpop.f32.mrb[0].mxu0
      %528 = vmatprep.mubr.bf16.mxu0 0
      %529 = vmatmul.mubr.bf16.gmra.mrb[0].mxu0 %v425
      %v530 = vpop.f32.mrb[0].mxu0
      %v531 = vadd.f32 0.0, %v530
      %v532 = vpop.f32.mrb[0].mxu0
      %v533 = vpop.f32.mrb[0].mxu0
      %v534 = vadd.f32 0.0, %v533
      %v535 = vpop.f32.mrb[0].mxu0
      %536 = vmatprep.mubr.bf16.mxu0 0
      %537 = vmatmul.mubr.bf16.gmra.mrb[0].mxu0 %v428
      %v538 = vpop.f32.mrb[0].mxu0
      %v539 = vadd.f32 0.0, %v538
      %v540 = vpop.f32.mrb[0].mxu0
      %v541 = vpop.f32.mrb[0].mxu0
      %v542 = vadd.f32 0.0, %v541
      %v543 = vpop.f32.mrb[0].mxu0
      %544 = vmatprep.mubr.bf16.mxu0 0
      %545 = vmatmul.mubr.bf16.gmra.mrb[0].mxu0 %v431
      %v546 = vpop.f32.mrb[0].mxu0
      %v547 = vadd.f32 0.0, %v546
      %v548 = vpop.f32.mrb[0].mxu0
      %v549 = vpop.f32.mrb[0].mxu0
      %v550 = vadd.f32 0.0, %v549
      %v551 = vpop.f32.mrb[0].mxu0
      %552 = vmatprep.mubr.bf16.mxu0 0
      %553 = vmatmul.mubr.bf16.gmra.mrb[0].mxu0 %v434
      %v554 = vpop.f32.mrb[0].mxu0
      %v555 = vadd.f32 0.0, %v554
      %v556 = vpop.f32.mrb[0].mxu0
      %v557 = vpop.f32.mrb[0].mxu0
      %v558 = vadd.f32 0.0, %v557
      %v559 = vpop.f32.mrb[0].mxu0
      %560 = vmatprep.mubr.bf16.mxu0 0
      %561 = vmatmul.mubr.bf16.gmra.mrb[0].mxu0 %v437
      %v562 = vpop.f32.mrb[0].mxu0
      %v563 = vadd.f32 0.0, %v562
      %v564 = vpop.f32.mrb[0].mxu0
      %v565 = vpop.f32.mrb[0].mxu0
      %v566 = vadd.f32 0.0, %v565
      %v567 = vpop.f32.mrb[0].mxu0
      %568 = vmatprep.mubr.bf16.mxu0 0
      %569 = vmatmul.mubr.bf16.gmra.mrb[0].mxu0 %v440
      %v570 = vpop.f32.mrb[0].mxu0
      %v571 = vadd.f32 0.0, %v570
      %v572 = vpop.f32.mrb[0].mxu0
      %v573 = vpop.f32.mrb[0].mxu0
      %v574 = vadd.f32 0.0, %v573
      %v575 = vpop.f32.mrb[0].mxu0
      %576 = vmatprep.mubr.bf16.mxu0 0
      %577 = vmatmul.mubr.bf16.gmra.mrb[0].mxu0 %v443
      %v578 = vpop.f32.mrb[0].mxu0
      %v579 = vadd.f32 0.0, %v578
      %v580 = vpop.f32.mrb[0].mxu0
      %v581 = vpop.f32.mrb[0].mxu0
      %v582 = vadd.f32 0.0, %v581
      %v583 = vpop.f32.mrb[0].mxu0
      %584 = vmatprep.mubr.bf16.mxu0 0
      %585 = vmatmul.mubr.bf16.gmra.mrb[0].mxu0 %v446
      %v586 = vpop.f32.mrb[0].mxu0
      %v587 = vadd.f32 0.0, %v586
      %v588 = vpop.f32.mrb[0].mxu0
      %v589 = vpop.f32.mrb[0].mxu0
      %v590 = vadd.f32 0.0, %v589
      %v591 = vpop.f32.mrb[0].mxu0
      %592 = vmatprep.mubr.bf16.mxu0 0
      %593 = vmatmul.mubr.bf16.gmra.mrb[0].mxu0 %v449
      %v594 = vpop.f32.mrb[0].mxu0
      %v595 = vadd.f32 0.0, %v594
      %v596 = vpop.f32.mrb[0].mxu0
      %v597 = vpop.f32.mrb[0].mxu0
      %v598 = vadd.f32 0.0, %v597
      %v599 = vpop.f32.mrb[0].mxu0
      %600 = vmatprep.mubr.bf16.mxu0 0
      %601 = vmatmul.mubr.bf16.gmra.mrb[0].mxu0 %v452
      %v602 = vpop.f32.mrb[0].mxu0
      %v603 = vadd.f32 0.0, %v602
      %v604 = vpop.f32.mrb[0].mxu0
      %v605 = vpop.f32.mrb[0].mxu0
      %v606 = vadd.f32 0.0, %v605
      %v607 = vpop.f32.mrb[0].mxu0
      %608 = vmatprep.mubr.bf16.mxu0 0
      %609 = vmatmul.mubr.bf16.gmra.mrb[0].mxu0 %v455
      %v610 = vpop.f32.mrb[0].mxu0
      %v611 = vadd.f32 0.0, %v610
      %v612 = vpop.f32.mrb[0].mxu0
      %v613 = vpop.f32.mrb[0].mxu0
      %v614 = vadd.f32 0.0, %v613
      %v615 = vpop.f32.mrb[0].mxu0
      %616 = vmatprep.mubr.bf16.mxu0 0
      %617 = vmatmul.mubr.bf16.gmra.mrb[0].mxu0 %v458
      %v618 = vpop.f32.mrb[0].mxu0
      %v619 = vadd.f32 0.0, %v618
      %v620 = vpop.f32.mrb[0].mxu0
      %v621 = vpop.f32.mrb[0].mxu0
      %v622 = vadd.f32 0.0, %v621
      %v623 = vpop.f32.mrb[0].mxu0
      %624 = vdwg.mxu0
      %v657 = vunpack.c.l.b16 %v246
      %v658 = vunpack.c.l.b16 %v247
      %v659 = vunpack.c.l.b16 %v248
      %v660 = vunpack.c.l.b16 %v249
      %v661 = vunpack.c.l.b16 %v250
      %v662 = vunpack.c.l.b16 %v251
      %v663 = vunpack.c.l.b16 %v252
      %v664 = vunpack.c.l.b16 %v253
      %v665 = vunpack.c.l.b16 %v254
      %v666 = vunpack.c.l.b16 %v255
      %v667 = vunpack.c.l.b16 %v256
      %v668 = vunpack.c.l.b16 %v257
      %v669 = vunpack.c.l.b16 %v258
      %v670 = vunpack.c.l.b16 %v259
      %v671 = vunpack.c.l.b16 %v260
      %v672 = vunpack.c.l.b16 %v261
      %v673 = vunpack.c.l.b16 %v262
      %v674 = vunpack.c.l.b16 %v263
      %v675 = vunpack.c.l.b16 %v264
      %v676 = vunpack.c.l.b16 %v265
      %v677 = vunpack.c.l.b16 %v266
      %v678 = vunpack.c.l.b16 %v267
      %v679 = vunpack.c.l.b16 %v268
      %v680 = vunpack.c.l.b16 %v269
      %v681 = vunpack.c.l.b16 %v270
      %v682 = vunpack.c.l.b16 %v271
      %v683 = vunpack.c.l.b16 %v272
      %v684 = vunpack.c.l.b16 %v273
      %v685 = vunpack.c.l.b16 %v274
      %v686 = vunpack.c.l.b16 %v275
      %v687 = vunpack.c.l.b16 %v276
      %v688 = vunpack.c.l.b16 %v277
      %v689 = vpack.c.b16 %v658, %v657
      %v690 = vpack.c.b16 %v660, %v659
      %v691 = vpack.c.b16 %v662, %v661
      %v692 = vpack.c.b16 %v664, %v663
      %v693 = vpack.c.b16 %v666, %v665
      %v694 = vpack.c.b16 %v668, %v667
      %v695 = vpack.c.b16 %v670, %v669
      %v696 = vpack.c.b16 %v672, %v671
      %v697 = vpack.c.b16 %v674, %v673
      %v698 = vpack.c.b16 %v676, %v675
      %v699 = vpack.c.b16 %v678, %v677
      %v700 = vpack.c.b16 %v680, %v679
      %v701 = vpack.c.b16 %v682, %v681
      %v702 = vpack.c.b16 %v684, %v683
      %v703 = vpack.c.b16 %v686, %v685
      %v704 = vpack.c.b16 %v688, %v687
      %v708 = vunpack.c.l.b16 %v278
      %v709 = vunpack.c.l.b16 %v279
      %v710 = vunpack.c.l.b16 %v280
      %v711 = vpack.c.b16 %v709, %v708
      %v712 = vpack.c.b16 %v710, %v710
      %v715 = vsel %vm411, %v689, 0
      %v718 = vsel %vm411, %v690, 0
      %v721 = vsel %vm411, %v691, 0
      %v724 = vsel %vm411, %v692, 0
      %v727 = vsel %vm411, %v693, 0
      %v730 = vsel %vm411, %v694, 0
      %v733 = vsel %vm411, %v695, 0
      %v736 = vsel %vm411, %v696, 0
      %v739 = vsel %vm411, %v697, 0
      %v742 = vsel %vm411, %v698, 0
      %v745 = vsel %vm411, %v699, 0
      %v748 = vsel %vm411, %v700, 0
      %v751 = vsel %vm411, %v701, 0
      %v754 = vsel %vm411, %v702, 0
      %v757 = vsel %vm411, %v703, 0
      %v760 = vsel %vm411, %v704, 0
      %v763 = vsel %vm460, %v712, 0
      %765 = vmatprep.subr.bf16.mxu0 0
      %766 = vmatpush1.bf16.msra.mxu0 %v711
      %767 = vmatprep.subr.bf16.mxu0 0
      %768 = vmatpush1.bf16.msra.mxu0 %v763
      %769 = vmatprep.subr.bf16.mxu0 0
      %770 = vmatpush1.bf16.msra.mxu0 0
      %771 = vmatprep.subr.bf16.mxu0 0
      %772 = vmatpush1.bf16.msra.mxu0 0
      %773 = vmatprep.subr.bf16.mxu0 0
      %774 = vmatpush1.bf16.msra.mxu0 0
      %775 = vmatprep.subr.bf16.mxu0 0
      %776 = vmatpush1.bf16.msra.mxu0 0
      %777 = vmatprep.subr.bf16.mxu0 0
      %778 = vmatpush1.bf16.msra.mxu0 0
      %779 = vmatprep.subr.bf16.mxu0 0
      %780 = vmatpush1.bf16.msra.mxu0 0
      %781 = vmatprep.subr.bf16.mxu0 0
      %782 = vmatpush1.bf16.msra.mxu0 0
      %783 = vmatprep.subr.bf16.mxu0 0
      %784 = vmatpush1.bf16.msra.mxu0 0
      %785 = vmatprep.subr.bf16.mxu0 0
      %786 = vmatpush1.bf16.msra.mxu0 0
      %787 = vmatprep.subr.bf16.mxu0 0
      %788 = vmatpush1.bf16.msra.mxu0 0
      %789 = vmatprep.subr.bf16.mxu0 0
      %790 = vmatpush1.bf16.msra.mxu0 0
      %791 = vmatprep.subr.bf16.mxu0 0
      %792 = vmatpush1.bf16.msra.mxu0 0
      %793 = vmatprep.subr.bf16.mxu0 0
      %794 = vmatpush1.bf16.msra.mxu0 0
      %795 = vmatprep.subr.bf16.mxu0 0
      %796 = vmatpush1.bf16.msra.mxu0 0
      %797 = vmatprep.mubr.bf16.mxu0 0
      %798 = vmatmul.mubr.bf16.gmra.mrb[0].mxu0 %v715
      %v799 = vpop.f32.mrb[0].mxu0
      %v800 = vadd.f32 %v499, %v799
      %v801 = vpop.f32.mrb[0].mxu0
      %v802 = vpop.f32.mrb[0].mxu0
      %v803 = vadd.f32 %v502, %v802
      %v804 = vpop.f32.mrb[0].mxu0
      %805 = vmatprep.mubr.bf16.mxu0 0
      %806 = vmatmul.mubr.bf16.gmra.mrb[0].mxu0 %v718
      %v807 = vpop.f32.mrb[0].mxu0
      %v808 = vadd.f32 %v507, %v807
      %v809 = vpop.f32.mrb[0].mxu0
      %v810 = vpop.f32.mrb[0].mxu0
      %v811 = vadd.f32 %v510, %v810
      %v812 = vpop.f32.mrb[0].mxu0
      %813 = vmatprep.mubr.bf16.mxu0 0
      %814 = vmatmul.mubr.bf16.gmra.mrb[0].mxu0 %v721
      %v815 = vpop.f32.mrb[0].mxu0
      %v816 = vadd.f32 %v515, %v815
      %v817 = vpop.f32.mrb[0].mxu0
      %v818 = vpop.f32.mrb[0].mxu0
      %v819 = vadd.f32 %v518, %v818
      %v820 = vpop.f32.mrb[0].mxu0
      %821 = vmatprep.mubr.bf16.mxu0 0
      %822 = vmatmul.mubr.bf16.gmra.mrb[0].mxu0 %v724
      %v823 = vpop.f32.mrb[0].mxu0
      %v824 = vadd.f32 %v523, %v823
      %v825 = vpop.f32.mrb[0].mxu0
      %v826 = vpop.f32.mrb[0].mxu0
      %v827 = vadd.f32 %v526, %v826
      %v828 = vpop.f32.mrb[0].mxu0
      %829 = vmatprep.mubr.bf16.mxu0 0
      %830 = vmatmul.mubr.bf16.gmra.mrb[0].mxu0 %v727
      %v831 = vpop.f32.mrb[0].mxu0
      %v832 = vadd.f32 %v531, %v831
      %v833 = vpop.f32.mrb[0].mxu0
      %v834 = vpop.f32.mrb[0].mxu0
      %v835 = vadd.f32 %v534, %v834
      %v836 = vpop.f32.mrb[0].mxu0
      %837 = vmatprep.mubr.bf16.mxu0 0
      %838 = vmatmul.mubr.bf16.gmra.mrb[0].mxu0 %v730
      %v839 = vpop.f32.mrb[0].mxu0
      %v840 = vadd.f32 %v539, %v839
      %v841 = vpop.f32.mrb[0].mxu0
      %v842 = vpop.f32.mrb[0].mxu0
      %v843 = vadd.f32 %v542, %v842
      %v844 = vpop.f32.mrb[0].mxu0
      %845 = vmatprep.mubr.bf16.mxu0 0
      %846 = vmatmul.mubr.bf16.gmra.mrb[0].mxu0 %v733
      %v847 = vpop.f32.mrb[0].mxu0
      %v848 = vadd.f32 %v547, %v847
      %v849 = vpop.f32.mrb[0].mxu0
      %v850 = vpop.f32.mrb[0].mxu0
      %v851 = vadd.f32 %v550, %v850
      %v852 = vpop.f32.mrb[0].mxu0
      %853 = vmatprep.mubr.bf16.mxu0 0
      %854 = vmatmul.mubr.bf16.gmra.mrb[0].mxu0 %v736
      %v855 = vpop.f32.mrb[0].mxu0
      %v856 = vadd.f32 %v555, %v855
      %v857 = vpop.f32.mrb[0].mxu0
      %v858 = vpop.f32.mrb[0].mxu0
      %v859 = vadd.f32 %v558, %v858
      %v860 = vpop.f32.mrb[0].mxu0
      %861 = vmatprep.mubr.bf16.mxu0 0
      %862 = vmatmul.mubr.bf16.gmra.mrb[0].mxu0 %v739
      %v863 = vpop.f32.mrb[0].mxu0
      %v864 = vadd.f32 %v563, %v863
      %v865 = vpop.f32.mrb[0].mxu0
      %v866 = vpop.f32.mrb[0].mxu0
      %v867 = vadd.f32 %v566, %v866
      %v868 = vpop.f32.mrb[0].mxu0
      %869 = vmatprep.mubr.bf16.mxu0 0
      %870 = vmatmul.mubr.bf16.gmra.mrb[0].mxu0 %v742
      %v871 = vpop.f32.mrb[0].mxu0
      %v872 = vadd.f32 %v571, %v871
      %v873 = vpop.f32.mrb[0].mxu0
      %v874 = vpop.f32.mrb[0].mxu0
      %v875 = vadd.f32 %v574, %v874
      %v876 = vpop.f32.mrb[0].mxu0
      %877 = vmatprep.mubr.bf16.mxu0 0
      %878 = vmatmul.mubr.bf16.gmra.mrb[0].mxu0 %v745
      %v879 = vpop.f32.mrb[0].mxu0
      %v880 = vadd.f32 %v579, %v879
      %v881 = vpop.f32.mrb[0].mxu0
      %v882 = vpop.f32.mrb[0].mxu0
      %v883 = vadd.f32 %v582, %v882
      %v884 = vpop.f32.mrb[0].mxu0
      %885 = vmatprep.mubr.bf16.mxu0 0
      %886 = vmatmul.mubr.bf16.gmra.mrb[0].mxu0 %v748
      %v887 = vpop.f32.mrb[0].mxu0
      %v888 = vadd.f32 %v587, %v887
      %v889 = vpop.f32.mrb[0].mxu0
      %v890 = vpop.f32.mrb[0].mxu0
      %v891 = vadd.f32 %v590, %v890
      %v892 = vpop.f32.mrb[0].mxu0
      %893 = vmatprep.mubr.bf16.mxu0 0
      %894 = vmatmul.mubr.bf16.gmra.mrb[0].mxu0 %v751
      %v895 = vpop.f32.mrb[0].mxu0
      %v896 = vadd.f32 %v595, %v895
      %v897 = vpop.f32.mrb[0].mxu0
      %v898 = vpop.f32.mrb[0].mxu0
      %v899 = vadd.f32 %v598, %v898
      %v900 = vpop.f32.mrb[0].mxu0
      %901 = vmatprep.mubr.bf16.mxu0 0
      %902 = vmatmul.mubr.bf16.gmra.mrb[0].mxu0 %v754
      %v903 = vpop.f32.mrb[0].mxu0
      %v904 = vadd.f32 %v603, %v903
      %v905 = vpop.f32.mrb[0].mxu0
      %v906 = vpop.f32.mrb[0].mxu0
      %v907 = vadd.f32 %v606, %v906
      %v908 = vpop.f32.mrb[0].mxu0
      %909 = vmatprep.mubr.bf16.mxu0 0
      %910 = vmatmul.mubr.bf16.gmra.mrb[0].mxu0 %v757
      %v911 = vpop.f32.mrb[0].mxu0
      %v912 = vadd.f32 %v611, %v911
      %v913 = vpop.f32.mrb[0].mxu0
      %v914 = vpop.f32.mrb[0].mxu0
      %v915 = vadd.f32 %v614, %v914
      %v916 = vpop.f32.mrb[0].mxu0
      %917 = vmatprep.mubr.bf16.mxu0 0
      %918 = vmatmul.mubr.bf16.gmra.mrb[0].mxu0 %v760
      %v919 = vpop.f32.mrb[0].mxu0
      %v920 = vadd.f32 %v619, %v919
      %v921 = vpop.f32.mrb[0].mxu0
      %v922 = vpop.f32.mrb[0].mxu0
      %v923 = vadd.f32 %v622, %v922
      %v924 = vpop.f32.mrb[0].mxu0
      %925 = vdwg.mxu0
      %v926 = vld [vmem:[%s226] sm:$0x1]
      %v928 = vlaneseq
      %v929 = vshrl.u32 %v928, 7
      %v930 = vsub.s32 0, %v929
      %v931 = vrot.slane %v926, %v930
      %v933 = vadd.f32 %v800, %v931
      %v934 = vadd.f32 %v803, %v931
      %v935 = vadd.f32 %v808, %v931
      %v936 = vadd.f32 %v811, %v931
      %v937 = vadd.f32 %v816, %v931
      %v938 = vadd.f32 %v819, %v931
      %v939 = vadd.f32 %v824, %v931
      %v940 = vadd.f32 %v827, %v931
      %v941 = vadd.f32 %v832, %v931
      %v942 = vadd.f32 %v835, %v931
      %v943 = vadd.f32 %v840, %v931
      %v944 = vadd.f32 %v843, %v931
      %v945 = vadd.f32 %v848, %v931
      %v946 = vadd.f32 %v851, %v931
      %v947 = vadd.f32 %v856, %v931
      %v948 = vadd.f32 %v859, %v931
      %v949 = vadd.f32 %v864, %v931
      %v950 = vadd.f32 %v867, %v931
      %v951 = vadd.f32 %v872, %v931
      %v952 = vadd.f32 %v875, %v931
      %v953 = vadd.f32 %v880, %v931
      %v954 = vadd.f32 %v883, %v931
      %v955 = vadd.f32 %v888, %v931
      %v956 = vadd.f32 %v891, %v931
      %v957 = vadd.f32 %v896, %v931
      %v958 = vadd.f32 %v899, %v931
      %v959 = vadd.f32 %v904, %v931
      %v960 = vadd.f32 %v907, %v931
      %v961 = vadd.f32 %v912, %v931
      %v962 = vadd.f32 %v915, %v931
      %v963 = vadd.f32 %v920, %v931
      %v964 = vadd.f32 %v923, %v931
      %vm965 = vcmp.gt.f32.partialorder %v933, 0.0
      %vm966 = vcmp.gt.f32.partialorder %v934, 0.0
      %vm967 = vcmp.gt.f32.partialorder %v935, 0.0
      %vm968 = vcmp.gt.f32.partialorder %v936, 0.0
      %vm969 = vcmp.gt.f32.partialorder %v937, 0.0
      %vm970 = vcmp.gt.f32.partialorder %v938, 0.0
      %vm971 = vcmp.gt.f32.partialorder %v939, 0.0
      %vm972 = vcmp.gt.f32.partialorder %v940, 0.0
      %vm973 = vcmp.gt.f32.partialorder %v941, 0.0
      %vm974 = vcmp.gt.f32.partialorder %v942, 0.0
      %vm975 = vcmp.gt.f32.partialorder %v943, 0.0
      %vm976 = vcmp.gt.f32.partialorder %v944, 0.0
      %vm977 = vcmp.gt.f32.partialorder %v945, 0.0
      %vm978 = vcmp.gt.f32.partialorder %v946, 0.0
      %vm979 = vcmp.gt.f32.partialorder %v947, 0.0
      %vm980 = vcmp.gt.f32.partialorder %v948, 0.0
      %vm981 = vcmp.gt.f32.partialorder %v949, 0.0
      %vm982 = vcmp.gt.f32.partialorder %v950, 0.0
      %vm983 = vcmp.gt.f32.partialorder %v951, 0.0
      %vm984 = vcmp.gt.f32.partialorder %v952, 0.0
      %vm985 = vcmp.gt.f32.partialorder %v953, 0.0
      %vm986 = vcmp.gt.f32.partialorder %v954, 0.0
      %vm987 = vcmp.gt.f32.partialorder %v955, 0.0
      %vm988 = vcmp.gt.f32.partialorder %v956, 0.0
      %vm989 = vcmp.gt.f32.partialorder %v957, 0.0
      %vm990 = vcmp.gt.f32.partialorder %v958, 0.0
      %vm991 = vcmp.gt.f32.partialorder %v959, 0.0
      %vm992 = vcmp.gt.f32.partialorder %v960, 0.0
      %vm993 = vcmp.gt.f32.partialorder %v961, 0.0
      %vm994 = vcmp.gt.f32.partialorder %v962, 0.0
      %vm995 = vcmp.gt.f32.partialorder %v963, 0.0
      %vm996 = vcmp.gt.f32.partialorder %v964, 0.0
      %v997 = vmul.f32 %v933, 0.2
      %v998 = vmul.f32 %v934, 0.2
      %v999 = vmul.f32 %v935, 0.2
      %v1000 = vmul.f32 %v936, 0.2
      %v1001 = vmul.f32 %v937, 0.2
      %v1002 = vmul.f32 %v938, 0.2
      %v1003 = vmul.f32 %v939, 0.2
      %v1004 = vmul.f32 %v940, 0.2
      %v1005 = vmul.f32 %v941, 0.2
      %v1006 = vmul.f32 %v942, 0.2
      %v1007 = vmul.f32 %v943, 0.2
      %v1008 = vmul.f32 %v944, 0.2
      %v1009 = vmul.f32 %v945, 0.2
      %v1010 = vmul.f32 %v946, 0.2
      %v1011 = vmul.f32 %v947, 0.2
      %v1012 = vmul.f32 %v948, 0.2
      %v1013 = vmul.f32 %v949, 0.2
      %v1014 = vmul.f32 %v950, 0.2
      %v1015 = vmul.f32 %v951, 0.2
      %v1016 = vmul.f32 %v952, 0.2
      %v1017 = vmul.f32 %v953, 0.2
      %v1018 = vmul.f32 %v954, 0.2
      %v1019 = vmul.f32 %v955, 0.2
      %v1020 = vmul.f32 %v956, 0.2
      %v1021 = vmul.f32 %v957, 0.2
      %v1022 = vmul.f32 %v958, 0.2
      %v1023 = vmul.f32 %v959, 0.2
      %v1024 = vmul.f32 %v960, 0.2
      %v1025 = vmul.f32 %v961, 0.2
      %v1026 = vmul.f32 %v962, 0.2
      %v1027 = vmul.f32 %v963, 0.2
      %v1028 = vmul.f32 %v964, 0.2
      %v1029 = vsel %vm965, %v933, %v997
      %v1030 = vsel %vm966, %v934, %v998
      %v1031 = vsel %vm967, %v935, %v999
      %v1032 = vsel %vm968, %v936, %v1000
      %v1033 = vsel %vm969, %v937, %v1001
      %v1034 = vsel %vm970, %v938, %v1002
      %v1035 = vsel %vm971, %v939, %v1003
      %v1036 = vsel %vm972, %v940, %v1004
      %v1037 = vsel %vm973, %v941, %v1005
      %v1038 = vsel %vm974, %v942, %v1006
      %v1039 = vsel %vm975, %v943, %v1007
      %v1040 = vsel %vm976, %v944, %v1008
      %v1041 = vsel %vm977, %v945, %v1009
      %v1042 = vsel %vm978, %v946, %v1010
      %v1043 = vsel %vm979, %v947, %v1011
      %v1044 = vsel %vm980, %v948, %v1012
      %v1045 = vsel %vm981, %v949, %v1013
      %v1046 = vsel %vm982, %v950, %v1014
      %v1047 = vsel %vm983, %v951, %v1015
      %v1048 = vsel %vm984, %v952, %v1016
      %v1049 = vsel %vm985, %v953, %v1017
      %v1050 = vsel %vm986, %v954, %v1018
      %v1051 = vsel %vm987, %v955, %v1019
      %v1052 = vsel %vm988, %v956, %v1020
      %v1053 = vsel %vm989, %v957, %v1021
      %v1054 = vsel %vm990, %v958, %v1022
      %v1055 = vsel %vm991, %v959, %v1023
      %v1056 = vsel %vm992, %v960, %v1024
      %v1057 = vsel %vm993, %v961, %v1025
      %v1058 = vsel %vm994, %v962, %v1026
      %v1059 = vsel %vm995, %v963, %v1027
      %v1060 = vsel %vm996, %v964, %v1028
      %v1061 = vpack.c.bf16 %v1030, %v1029
      %v1062 = vpack.c.bf16 %v1032, %v1031
      %v1063 = vpack.c.bf16 %v1034, %v1033
      %v1064 = vpack.c.bf16 %v1036, %v1035
      %v1065 = vpack.c.bf16 %v1038, %v1037
      %v1066 = vpack.c.bf16 %v1040, %v1039
      %v1067 = vpack.c.bf16 %v1042, %v1041
      %v1068 = vpack.c.bf16 %v1044, %v1043
      %v1069 = vpack.c.bf16 %v1046, %v1045
      %v1070 = vpack.c.bf16 %v1048, %v1047
      %v1071 = vpack.c.bf16 %v1050, %v1049
      %v1072 = vpack.c.bf16 %v1052, %v1051
      %v1073 = vpack.c.bf16 %v1054, %v1053
      %v1074 = vpack.c.bf16 %v1056, %v1055
      %v1075 = vpack.c.bf16 %v1058, %v1057
      %v1076 = vpack.c.bf16 %v1060, %v1059
      %v1093 = vunpack.c.l.b16 %v1061
      %v1094 = vunpack.c.h.b16 %v1061
      %v1095 = vunpack.c.l.b16 %v1062
      %v1096 = vunpack.c.h.b16 %v1062
      %v1097 = vunpack.c.l.b16 %v1063
      %v1098 = vunpack.c.h.b16 %v1063
      %v1099 = vunpack.c.l.b16 %v1064
      %v1100 = vunpack.c.h.b16 %v1064
      %v1101 = vunpack.c.l.b16 %v1065
      %v1102 = vunpack.c.h.b16 %v1065
      %v1103 = vunpack.c.l.b16 %v1066
      %v1104 = vunpack.c.h.b16 %v1066
      %v1105 = vunpack.c.l.b16 %v1067
      %v1106 = vunpack.c.h.b16 %v1067
      %v1107 = vunpack.c.l.b16 %v1068
      %v1108 = vunpack.c.h.b16 %v1068
      %v1109 = vunpack.c.l.b16 %v1069
      %v1110 = vunpack.c.h.b16 %v1069
      %v1111 = vunpack.c.l.b16 %v1070
      %v1112 = vunpack.c.h.b16 %v1070
      %v1113 = vunpack.c.l.b16 %v1071
      %v1114 = vunpack.c.h.b16 %v1071
      %v1115 = vunpack.c.l.b16 %v1072
      %v1116 = vunpack.c.h.b16 %v1072
      %v1117 = vunpack.c.l.b16 %v1073
      %v1118 = vunpack.c.h.b16 %v1073
      %v1119 = vunpack.c.l.b16 %v1074
      %v1120 = vunpack.c.h.b16 %v1074
      %v1121 = vunpack.c.l.b16 %v1075
      %v1122 = vunpack.c.h.b16 %v1075
      %v1123 = vunpack.c.l.b16 %v1076
      %v1124 = vunpack.c.h.b16 %v1076
      %v1125 = vpack.c.b16 %v1093, %v1093
      %v1126 = vpack.c.b16 %v1094, %v1094
      %v1127 = vpack.c.b16 %v1095, %v1095
      %v1128 = vpack.c.b16 %v1096, %v1096
      %v1129 = vpack.c.b16 %v1097, %v1097
      %v1130 = vpack.c.b16 %v1098, %v1098
      %v1131 = vpack.c.b16 %v1099, %v1099
      %v1132 = vpack.c.b16 %v1100, %v1100
      %v1133 = vpack.c.b16 %v1101, %v1101
      %v1134 = vpack.c.b16 %v1102, %v1102
      %v1135 = vpack.c.b16 %v1103, %v1103
      %v1136 = vpack.c.b16 %v1104, %v1104
      %v1137 = vpack.c.b16 %v1105, %v1105
      %v1138 = vpack.c.b16 %v1106, %v1106
      %v1139 = vpack.c.b16 %v1107, %v1107
      %v1140 = vpack.c.b16 %v1108, %v1108
      %v1141 = vpack.c.b16 %v1109, %v1109
      %v1142 = vpack.c.b16 %v1110, %v1110
      %v1143 = vpack.c.b16 %v1111, %v1111
      %v1144 = vpack.c.b16 %v1112, %v1112
      %v1145 = vpack.c.b16 %v1113, %v1113
      %v1146 = vpack.c.b16 %v1114, %v1114
      %v1147 = vpack.c.b16 %v1115, %v1115
      %v1148 = vpack.c.b16 %v1116, %v1116
      %v1149 = vpack.c.b16 %v1117, %v1117
      %v1150 = vpack.c.b16 %v1118, %v1118
      %v1151 = vpack.c.b16 %v1119, %v1119
      %v1152 = vpack.c.b16 %v1120, %v1120
      %v1153 = vpack.c.b16 %v1121, %v1121
      %v1154 = vpack.c.b16 %v1122, %v1122
      %v1155 = vpack.c.b16 %v1123, %v1123
      %v1156 = vpack.c.b16 %v1124, %v1124
      %1189 = vst [vmem:[%s238] sm:$0xf] %v1125
      %1190 = vst [vmem:[%s238 + $0x4] sm:$0xf] %v1126
      %1191 = vst [vmem:[%s238 + $0x8] sm:$0xf] %v1127
      %1192 = vst [vmem:[%s238 + $0xc] sm:$0xf] %v1128
      %1193 = vst [vmem:[%s238 + $0x10] sm:$0xf] %v1129
      %1194 = vst [vmem:[%s238 + $0x14] sm:$0xf] %v1130
      %1195 = vst [vmem:[%s238 + $0x18] sm:$0xf] %v1131
      %1196 = vst [vmem:[%s238 + $0x1c] sm:$0xf] %v1132
      %1197 = vst [vmem:[%s238 + $0x20] sm:$0xf] %v1133
      %1198 = vst [vmem:[%s238 + $0x24] sm:$0xf] %v1134
      %1199 = vst [vmem:[%s238 + $0x28] sm:$0xf] %v1135
      %1200 = vst [vmem:[%s238 + $0x2c] sm:$0xf] %v1136
      %1201 = vst [vmem:[%s238 + $0x30] sm:$0xf] %v1137
      %1202 = vst [vmem:[%s238 + $0x34] sm:$0xf] %v1138
      %1203 = vst [vmem:[%s238 + $0x38] sm:$0xf] %v1139
      %1204 = vst [vmem:[%s238 + $0x3c] sm:$0xf] %v1140
      %1205 = vst [vmem:[%s238 + $0x40] sm:$0xf] %v1141
      %1206 = vst [vmem:[%s238 + $0x44] sm:$0xf] %v1142
      %1207 = vst [vmem:[%s238 + $0x48] sm:$0xf] %v1143
      %1208 = vst [vmem:[%s238 + $0x4c] sm:$0xf] %v1144
      %1209 = vst [vmem:[%s238 + $0x50] sm:$0xf] %v1145
      %1210 = vst [vmem:[%s238 + $0x54] sm:$0xf] %v1146
      %1211 = vst [vmem:[%s238 + $0x58] sm:$0xf] %v1147
      %1212 = vst [vmem:[%s238 + $0x5c] sm:$0xf] %v1148
      %1213 = vst [vmem:[%s238 + $0x60] sm:$0xf] %v1149
      %1214 = vst [vmem:[%s238 + $0x64] sm:$0xf] %v1150
      %1215 = vst [vmem:[%s238 + $0x68] sm:$0xf] %v1151
      %1216 = vst [vmem:[%s238 + $0x6c] sm:$0xf] %v1152
      %1217 = vst [vmem:[%s238 + $0x70] sm:$0xf] %v1153
      %1218 = vst [vmem:[%s238 + $0x74] sm:$0xf] %v1154
      %1219 = vst [vmem:[%s238 + $0x78] sm:$0xf] %v1155
      %1220 = vst [vmem:[%s238 + $0x7c] sm:$0xf] %v1156
      %s1221 = smul.u32 32, %s21
      %p1222 = scmp.lt.s32.totalorder %s19, 1
      %s1223 = scalar_select %p1222, %s19, 1
      %p1224 = scmp.lt.s32.totalorder %s1221, 127
      %s1225 = scalar_select %p1224, %s1221, 127
      %p1226 = scmp.lt.s32.totalorder %s20, 0
      %s1227 = scalar_select %p1226, %s20, 0
      %s1228 = sadd.s32 %s1227, %s1225
      %s1229 = smul.addr %s1223, 128
      %s1230 = sadd.s32 %s1228, %s1229
      %s1231 = smul.addr %s1230, 4
      %s1232 = scalar_lea.vmem %s3, %s1231
      // Predicated region
      $region33: #{_lambda_.5} parent=31 // pred_check
        %p1233 = pneg %p133
      $region34: #{_lambda_.5} parent=31 // pred_check_branch
        %1235 = sbr.rel (%p1233) target = $region36
      $region35: #{_lambda_.5} parent=31 // pred_region
        %s1236 = smul.u32 32, %s21
      $region36: #{_lambda_.5} parent=31 // pred_fallthru
        _
    $region32: #{_lambda_.5} parent=5 // pred_fallthru
      _
    %p1237 = scmp.le.s32.totalorder 2, %s9
    // Predicated region
    $region37: #{_lambda_.5} parent=5 // pred_check
      %p1238 = pneg %p1237
    $region38: #{_lambda_.5} parent=5 // pred_check_branch
      %1240 = sbr.rel (%p1238) target = $region40
    $region39: #{_lambda_.5} parent=5 // pred_region
      %s1241 = ssub.s32 %s9, 2
      // Predicated region
      $region41: #{_lambda_.5} parent=39 // pred_check
        %p1242 = pneg %p139
      $region42: #{_lambda_.5} parent=39 // pred_check_branch
        %1244 = sbr.rel (%p1242) target = $region44
      $region43: #{_lambda_.5} parent=39 // pred_region
        %s1245 = smul.u32 32, %s24
        %p1246 = scmp.lt.s32.totalorder %s22, 1
        %s1247 = scalar_select %p1246, %s22, 1
        %p1248 = scmp.lt.s32.totalorder %s1245, 127
        %s1249 = scalar_select %p1248, %s1245, 127
        %p1250 = scmp.lt.s32.totalorder %s23, 0
        %s1251 = scalar_select %p1250, %s23, 0
        %s1252 = sadd.s32 %s1251, %s1249
        %s1253 = smul.addr %s1247, 128
        %s1254 = sadd.s32 %s1252, %s1253
        %s1255 = smul.addr %s1254, 4
        %s1256 = scalar_lea.vmem %s3, %s1255
      $region44: #{_lambda_.5} parent=39 // pred_fallthru
        _
    $region40: #{_lambda_.5} parent=5 // pred_fallthru
      _
  $region6: #{_lambda_.5} parent=0 // loop_footer
    %s13 = sadd.s32 1, %s9
  $region7: #{_lambda_.5} parent=0 // loop_footer_branch
    %8 = sbr.rel target = $region3
  $region8: #{_lambda_.5} parent=0 // loop_exit
    _

// kernel: _lambda_.6
$region0: #{_lambda_.6}
  #allocation0 [shape = 'u32[]', space=smem, size = 0x4, offset = 0x4, fixed_abs, tag = 'smem constant byte address 0x4 - core index']
  #allocation1 [shape = 'u32[144,128]{1,0:T(1,128)}', space=vmem, size = 0x12000, scoped, tag = 'internal scratch']
  %s0 = inlined_call_operand.vmem [shape: bf16[2,272,64], index: 0, kind: input, shape index: {}]
  %s1 = inlined_call_operand.vmem [shape: bf16[2,64,128], index: 1, kind: input, shape index: {}]
  %s2 = inlined_call_operand.vmem [shape: f32[1,128], index: 2, kind: input, shape index: {}]
  %s3 = inlined_call_operand.vmem [shape: bf16[2,256,128], index: 3, kind: output, shape index: {0}]
  %s4 = inlined_call_operand.vmem [shape: f32[2,1,128], index: 4, kind: output, shape index: {1}]
  %s5 = inlined_call_operand.vmem [shape: f32[2,1,128], index: 5, kind: output, shape index: {2}]
  %6 = xla_tuple %s3, %s4, %s5
  %s7 = sld [smem:[#allocation0]]
  $region65: #{_lambda_.6} parent=0
    _
  %s9 = ssub.s32 1, %s7
  %s10 = scalar_select 0, %s9, %s7
  loop: start=0, step=1, limit=4
  $region2: #{_lambda_.6} parent=0 // loop_pre_header
    _
  $region3: #{_lambda_.6} parent=0 // loop_header
    %s12 = sphi 0, %s16
    %p13 = scmp.ge.s32.totalorder %s12, 4
    %s19 = sphi 0, %s38
    %s20 = sphi 0, %s34
    %s21 = sphi 0, %s30
    %s22 = sphi 0, %s19
    %s23 = sphi 0, %s20
    %s24 = sphi 0, %s21
    %s25 = sphi 0, %s22
    %s26 = sphi 0, %s23
    %s27 = sphi 0, %s24
    %s41 = sphi 0, %s43
    %s44 = sphi 0, %s41
    %s45 = sphi 0, %s44
    %s61 = sphi 0, %s45
    %s67 = sphi 0, %s69
    %s70 = sphi 0, %s67
    %s71 = sphi 0, %s70
    %s87 = sphi 0, %s71
    %s93 = sphi 0, %s95
    %s96 = sphi 0, %s93
    %s97 = sphi 0, %s96
    %s113 = sphi 0, %s97
    %s123 = sphi 0, %s125
    %s126 = sphi 0, %s123
    %s127 = sphi 0, %s126
    %s143 = sphi 0, %s127
    %s151 = sphi 0, %s153
    %s154 = sphi 0, %s151
    %s155 = sphi 0, %s154
    %s171 = sphi 0, %s155
    %s179 = sphi 0, %s181
    %s182 = sphi 0, %s179
    %s183 = sphi 0, %s182
    %s199 = sphi 0, %s183
  $region4: #{_lambda_.6} parent=0 // loop_header_branch
    %15 = sbr.rel (%p13) target = $region8
  $region5: #{_lambda_.6} parent=0 // loop_body
    %s17 = ssub.s32 %s12, 1
    %s18 = ssub.s32 %s12, 2
    %s28 = sadd.s32 1, %s21
    %p29 = scmp.ge.s32.totalorder %s28, 1
    %s30 = scalar_select %p29, 0, %s28
    %s31 = sadd.s32 1, %s20
    %s32 = scalar_select %p29, %s31, %s20
    %p33 = scmp.ge.s32.totalorder %s32, 1
    %s34 = scalar_select %p33, 0, %s32
    %s35 = sadd.s32 1, %s19
    %s36 = scalar_select %p33, %s35, %s19
    %p37 = scmp.ge.s32.totalorder %s36, 2
    %s38 = scalar_select %p37, 0, %s36
    %s39 = ssub.s32 %s19, %s38
    %p40 = scmp.eq.s32.totalorder %s39, 0
    %s42 = sadd.s32 %s41, 1
    %s43 = scalar_select %p40, %s41, %s42
    %p46 = pneg %p40
    %p47 = scmp.eq.s32.totalorder %s12, 1
    %p48 = por %p46, %p47
    %p49 = scmp.ne.s32.totalorder %s41, %s44
    %p50 = scmp.eq.s32.totalorder %s12, 0
    %p51 = por %p49, %p50
    %p52 = scmp.ne.s32.totalorder %s41, %s44
    %p53 = scmp.eq.s32.totalorder %s17, 1
    %p54 = por %p52, %p53
    %p55 = scmp.ne.s32.totalorder %s44, %s45
    %p56 = scmp.eq.s32.totalorder %s17, 0
    %p57 = por %p55, %p56
    %p58 = scmp.ne.s32.totalorder %s44, %s45
    %p59 = scmp.eq.s32.totalorder %s18, 1
    %p60 = por %p58, %p59
    %p62 = scmp.ne.s32.totalorder %s45, %s61
    %p63 = scmp.eq.s32.totalorder %s18, 0
    %p64 = por %p62, %p63
    %s65 = ssub.s32 %s20, %s34
    %p66 = scmp.eq.s32.totalorder %s65, 0
    %s68 = sadd.s32 %s67, 1
    %s69 = scalar_select %p66, %s67, %s68
    %p72 = pneg %p66
    %p73 = scmp.eq.s32.totalorder %s12, 1
    %p74 = por %p72, %p73
    %p75 = scmp.ne.s32.totalorder %s67, %s70
    %p76 = scmp.eq.s32.totalorder %s12, 0
    %p77 = por %p75, %p76
    %p78 = scmp.ne.s32.totalorder %s67, %s70
    %p79 = scmp.eq.s32.totalorder %s17, 1
    %p80 = por %p78, %p79
    %p81 = scmp.ne.s32.totalorder %s70, %s71
    %p82 = scmp.eq.s32.totalorder %s17, 0
    %p83 = por %p81, %p82
    %p84 = scmp.ne.s32.totalorder %s70, %s71
    %p85 = scmp.eq.s32.totalorder %s18, 1
    %p86 = por %p84, %p85
    %p88 = scmp.ne.s32.totalorder %s71, %s87
    %p89 = scmp.eq.s32.totalorder %s18, 0
    %p90 = por %p88, %p89
    %s91 = ssub.s32 %s20, %s34
    %p92 = scmp.eq.s32.totalorder %s91, 0
    %s94 = sadd.s32 %s93, 1
    %s95 = scalar_select %p92, %s93, %s94
    %p98 = pneg %p92
    %p99 = scmp.eq.s32.totalorder %s12, 1
    %p100 = por %p98, %p99
    %p101 = scmp.ne.s32.totalorder %s93, %s96
    %p102 = scmp.eq.s32.totalorder %s12, 0
    %p103 = por %p101, %p102
    %p104 = scmp.ne.s32.totalorder %s93, %s96
    %p105 = scmp.eq.s32.totalorder %s17, 1
    %p106 = por %p104, %p105
    %p107 = scmp.ne.s32.totalorder %s96, %s97
    %p108 = scmp.eq.s32.totalorder %s17, 0
    %p109 = por %p107, %p108
    %p110 = scmp.ne.s32.totalorder %s96, %s97
    %p111 = scmp.eq.s32.totalorder %s18, 1
    %p112 = por %p110, %p111
    %p114 = scmp.ne.s32.totalorder %s97, %s113
    %p115 = scmp.eq.s32.totalorder %s18, 0
    %p116 = por %p114, %p115
    %s117 = ssub.s32 %s19, %s38
    %s118 = ssub.s32 %s21, %s30
    %s119 = sor.u32 %s117, %s118
    %s120 = ssub.s32 %s20, %s34
    %s121 = sor.u32 %s119, %s120
    %p122 = scmp.eq.s32.totalorder %s121, 0
    %s124 = sadd.s32 %s123, 1
    %s125 = scalar_select %p122, %s123, %s124
    %p128 = pneg %p122
    %p129 = scmp.eq.s32.totalorder %s12, 1
    %p130 = por %p128, %p129
    %p131 = scmp.ne.s32.totalorder %s123, %s126
    %p132 = scmp.eq.s32.totalorder %s12, 0
    %p133 = por %p131, %p132
    %p134 = scmp.ne.s32.totalorder %s123, %s126
    %p135 = scmp.eq.s32.totalorder %s17, 1
    %p136 = por %p134, %p135
    %p137 = scmp.ne.s32.totalorder %s126, %s127
    %p138 = scmp.eq.s32.totalorder %s17, 0
    %p139 = por %p137, %p138
    %p140 = scmp.ne.s32.totalorder %s126, %s127
    %p141 = scmp.eq.s32.totalorder %s18, 1
    %p142 = por %p140, %p141
    %p144 = scmp.ne.s32.totalorder %s127, %s143
    %p145 = scmp.eq.s32.totalorder %s18, 0
    %p146 = por %p144, %p145
    %s147 = ssub.s32 %s19, %s38
    %s148 = ssub.s32 %s20, %s34
    %s149 = sor.u32 %s147, %s148
    %p150 = scmp.eq.s32.totalorder %s149, 0
    %s152 = sadd.s32 %s151, 1
    %s153 = scalar_select %p150, %s151, %s152
    %p156 = pneg %p150
    %p157 = scmp.eq.s32.totalorder %s12, 1
    %p158 = por %p156, %p157
    %p159 = scmp.ne.s32.totalorder %s151, %s154
    %p160 = scmp.eq.s32.totalorder %s12, 0
    %p161 = por %p159, %p160
    %p162 = scmp.ne.s32.totalorder %s151, %s154
    %p163 = scmp.eq.s32.totalorder %s17, 1
    %p164 = por %p162, %p163
    %p165 = scmp.ne.s32.totalorder %s154, %s155
    %p166 = scmp.eq.s32.totalorder %s17, 0
    %p167 = por %p165, %p166
    %p168 = scmp.ne.s32.totalorder %s154, %s155
    %p169 = scmp.eq.s32.totalorder %s18, 1
    %p170 = por %p168, %p169
    %p172 = scmp.ne.s32.totalorder %s155, %s171
    %p173 = scmp.eq.s32.totalorder %s18, 0
    %p174 = por %p172, %p173
    %s175 = ssub.s32 %s19, %s38
    %s176 = ssub.s32 %s20, %s34
    %s177 = sor.u32 %s175, %s176
    %p178 = scmp.eq.s32.totalorder %s177, 0
    %s180 = sadd.s32 %s179, 1
    %s181 = scalar_select %p178, %s179, %s180
    %p184 = pneg %p178
    %p185 = scmp.eq.s32.totalorder %s12, 1
    %p186 = por %p184, %p185
    %p187 = scmp.ne.s32.totalorder %s179, %s182
    %p188 = scmp.eq.s32.totalorder %s12, 0
    %p189 = por %p187, %p188
    %p190 = scmp.ne.s32.totalorder %s179, %s182
    %p191 = scmp.eq.s32.totalorder %s17, 1
    %p192 = por %p190, %p191
    %p193 = scmp.ne.s32.totalorder %s182, %s183
    %p194 = scmp.eq.s32.totalorder %s17, 0
    %p195 = por %p193, %p194
    %p196 = scmp.ne.s32.totalorder %s182, %s183
    %p197 = scmp.eq.s32.totalorder %s18, 1
    %p198 = por %p196, %p197
    %p200 = scmp.ne.s32.totalorder %s183, %s199
    %p201 = scmp.eq.s32.totalorder %s18, 0
    %p202 = por %p200, %p201
    %p203 = scmp.le.s32.totalorder 1, %s12
    %p204 = scmp.lt.s32.totalorder %s12, 3
    %p205 = pnand %p203, %p204
    %p206 = pneg %p205
    // Predicated region
    $region9: #{_lambda_.6} parent=5 // pred_check
      _
    $region10: #{_lambda_.6} parent=5 // pred_check_branch
      %208 = sbr.rel (%p205) target = $region12
    $region11: #{_lambda_.6} parent=5 // pred_region
      %s209 = ssub.s32 %s12, 1
      // Predicated region
      $region13: #{_lambda_.6} parent=11 // pred_check
        %p210 = pneg %p83
      $region14: #{_lambda_.6} parent=11 // pred_check_branch
        %212 = sbr.rel (%p210) target = $region16
      $region15: #{_lambda_.6} parent=11 // pred_region
        %p213 = scmp.lt.s32.totalorder %s23, 0
        %s214 = scalar_select %p213, %s23, 0
        %s215 = smul.addr %s214, 4
        %s216 = scalar_lea.vmem %s1, %s215
      $region16: #{_lambda_.6} parent=11 // pred_fallthru
        _
      // Predicated region
      $region17: #{_lambda_.6} parent=11 // pred_check
        %p217 = pneg %p109
      $region18: #{_lambda_.6} parent=11 // pred_check_branch
        %219 = sbr.rel (%p217) target = $region20
      $region19: #{_lambda_.6} parent=11 // pred_region
        %p220 = scmp.lt.s32.totalorder %s23, 0
        %s221 = scalar_select %p220, %s23, 0
        %s222 = scalar_lea.vmem %s2, %s221
      $region20: #{_lambda_.6} parent=11 // pred_fallthru
        _
    $region12: #{_lambda_.6} parent=5 // pred_fallthru
      _
    %p223 = scmp.lt.s32.totalorder %s12, 2
    // Predicated region
    $region21: #{_lambda_.6} parent=5 // pred_check
      %p224 = pneg %p223
    $region22: #{_lambda_.6} parent=5 // pred_check_branch
      %226 = sbr.rel (%p224) target = $region24
    $region23: #{_lambda_.6} parent=5 // pred_region
      // Predicated region
      $region25: #{_lambda_.6} parent=23 // pred_check
        %p227 = pneg %p51
      $region26: #{_lambda_.6} parent=23 // pred_check_branch
        %229 = sbr.rel (%p227) target = $region28
      $region27: #{_lambda_.6} parent=23 // pred_region
        %p230 = scmp.lt.s32.totalorder %s19, 1
        %s231 = scalar_select %p230, %s19, 1
        %s232 = smul.addr %s231, 34
        %s233 = smul.addr %s232, 4
        %s234 = scalar_lea.vmem %s0, %s233
      $region28: #{_lambda_.6} parent=23 // pred_fallthru
        _
    $region24: #{_lambda_.6} parent=5 // pred_fallthru
      _
    %p235 = scmp.le.s32.totalorder 1, %s12
    %p236 = scmp.lt.s32.totalorder %s12, 3
    %p237 = pnand %p235, %p236
    %p238 = pneg %p237
    // Predicated region
    $region29: #{_lambda_.6} parent=5 // pred_check
      _
    $region30: #{_lambda_.6} parent=5 // pred_check_branch
      %240 = sbr.rel (%p237) target = $region32
    $region31: #{_lambda_.6} parent=5 // pred_region
      %s241 = ssub.s32 %s12, 1
      %p242 = scmp.lt.s32.totalorder %s22, 1
      %s243 = scalar_select %p242, %s22, 1
      %s244 = smul.addr %s243, 34
      %s245 = smul.addr %s244, 4
      %s246 = scalar_lea.vmem %s0, %s245
      %p247 = pneg %p57
      %p248 = pneg %p54
      %p249 = scmp.lt.s32.totalorder %s23, 0
      %s250 = scalar_select %p249, %s23, 0
      %s251 = smul.addr %s250, 4
      %s252 = scalar_lea.vmem %s1, %s251
      %p253 = pneg %p83
      %p254 = pneg %p80
      %p255 = scmp.lt.s32.totalorder %s23, 0
      %s256 = scalar_select %p255, %s23, 0
      %s257 = scalar_lea.vmem %s2, %s256
      %p258 = pneg %p109
      %p259 = pneg %p106
      %p260 = pneg %p139
      %p261 = pneg %p136
      %s262 = smul.u32 32, %s24
      %p263 = scmp.lt.s32.totalorder %s22, 1
      %s264 = scalar_select %p263, %s22, 1
      %p265 = scmp.lt.s32.totalorder %s262, 31
      %s266 = scalar_select %p265, %s262, 31
      %p267 = scmp.lt.s32.totalorder %s23, 0
      %s268 = scalar_select %p267, %s23, 0
      %s269 = sadd.s32 %s268, %s266
      %s270 = smul.addr %s264, 32
      %s271 = sadd.s32 %s269, %s270
      %s272 = smul.addr %s271, 4
      %s273 = scalar_lea.vmem %s3, %s272
      %p274 = pneg %p167
      %p275 = pneg %p164
      %p276 = scmp.lt.s32.totalorder %s22, 1
      %s277 = scalar_select %p276, %s22, 1
      %p278 = scmp.lt.s32.totalorder %s23, 0
      %s279 = scalar_select %p278, %s23, 0
      %s280 = sadd.s32 %s279, %s277
      %s281 = scalar_lea.vmem %s4, %s280
      %p282 = pneg %p195
      %p283 = pneg %p192
      %p284 = scmp.lt.s32.totalorder %s22, 1
      %s285 = scalar_select %p284, %s22, 1
      %p286 = scmp.lt.s32.totalorder %s23, 0
      %s287 = scalar_select %p286, %s23, 0
      %s288 = sadd.s32 %s287, %s285
      %s289 = scalar_lea.vmem %s5, %s288
      %p290 = scmp.lt.s32.totalorder %s22, 1
      %s291 = scalar_select %p290, %s22, 1
      %s292 = smul.addr %s291, 34
      %s293 = smul.addr %s292, 4
      %s294 = scalar_lea.vmem %s0, %s293
      %p295 = scmp.lt.s32.totalorder %s23, 0
      %s296 = scalar_select %p295, %s23, 0
      %s297 = smul.addr %s296, 4
      %s298 = scalar_lea.vmem %s1, %s297
      %p299 = scmp.lt.s32.totalorder %s23, 0
      %s300 = scalar_select %p299, %s23, 0
      %s301 = scalar_lea.vmem %s2, %s300
      %s302 = smul.u32 32, %s24
      %p303 = scmp.lt.s32.totalorder %s22, 1
      %s304 = scalar_select %p303, %s22, 1
      %p305 = scmp.lt.s32.totalorder %s302, 31
      %s306 = scalar_select %p305, %s302, 31
      %p307 = scmp.lt.s32.totalorder %s23, 0
      %s308 = scalar_select %p307, %s23, 0
      %s309 = sadd.s32 %s308, %s306
      %s310 = smul.addr %s304, 32
      %s311 = sadd.s32 %s309, %s310
      %s312 = smul.addr %s311, 4
      %s313 = scalar_lea.vmem %s3, %s312
      %s314 = smul.u32 32, %s24
      %p315 = scmp.lt.s32.totalorder %s22, 1
      %s316 = scalar_select %p315, %s22, 1
      %p317 = scmp.lt.s32.totalorder %s23, 0
      %s318 = scalar_select %p317, %s23, 0
      %s319 = sadd.s32 %s318, %s316
      %s320 = scalar_lea.vmem %s4, %s319
      %p321 = scmp.lt.s32.totalorder %s22, 1
      %s322 = scalar_select %p321, %s22, 1
      %p323 = scmp.lt.s32.totalorder %s23, 0
      %s324 = scalar_select %p323, %s23, 0
      %s325 = sadd.s32 %s324, %s322
      %s326 = scalar_lea.vmem %s5, %s325
      %v328 = vld [vmem:[%s294] sm:$0xf]
      %v329 = vld [vmem:[%s294 + $0x4] sm:$0xf]
      %v330 = vld [vmem:[%s294 + $0x8] sm:$0xf]
      %v331 = vld [vmem:[%s294 + $0xc] sm:$0xf]
      %v332 = vld [vmem:[%s294 + $0x10] sm:$0xf]
      %v333 = vld [vmem:[%s294 + $0x14] sm:$0xf]
      %v334 = vld [vmem:[%s294 + $0x18] sm:$0xf]
      %v335 = vld [vmem:[%s294 + $0x1c] sm:$0xf]
      %v336 = vld [vmem:[%s294 + $0x20] sm:$0xf]
      %v337 = vld [vmem:[%s294 + $0x24] sm:$0xf]
      %v338 = vld [vmem:[%s294 + $0x28] sm:$0xf]
      %v339 = vld [vmem:[%s294 + $0x2c] sm:$0xf]
      %v340 = vld [vmem:[%s294 + $0x30] sm:$0xf]
      %v341 = vld [vmem:[%s294 + $0x34] sm:$0xf]
      %v342 = vld [vmem:[%s294 + $0x38] sm:$0xf]
      %v343 = vld [vmem:[%s294 + $0x3c] sm:$0xf]
      %v344 = vld [vmem:[%s294 + $0x40] sm:$0xf]
      %v345 = vld [vmem:[%s294 + $0x44] sm:$0xf]
      %v346 = vld [vmem:[%s294 + $0x48] sm:$0xf]
      %v347 = vld [vmem:[%s294 + $0x4c] sm:$0xf]
      %v348 = vld [vmem:[%s294 + $0x50] sm:$0xf]
      %v349 = vld [vmem:[%s294 + $0x54] sm:$0xf]
      %v350 = vld [vmem:[%s294 + $0x58] sm:$0xf]
      %v351 = vld [vmem:[%s294 + $0x5c] sm:$0xf]
      %v352 = vld [vmem:[%s294 + $0x60] sm:$0xf]
      %v353 = vld [vmem:[%s294 + $0x64] sm:$0xf]
      %v354 = vld [vmem:[%s294 + $0x68] sm:$0xf]
      %v355 = vld [vmem:[%s294 + $0x6c] sm:$0xf]
      %v356 = vld [vmem:[%s294 + $0x70] sm:$0xf]
      %v357 = vld [vmem:[%s294 + $0x74] sm:$0xf]
      %v358 = vld [vmem:[%s294 + $0x78] sm:$0xf]
      %v359 = vld [vmem:[%s294 + $0x7c] sm:$0xf]
      %v360 = vld [vmem:[%s298] sm:$0xf]
      %v361 = vld [vmem:[%s298 + $0x4] sm:$0xf]
      %v362 = vld [vmem:[%s298 + $0x8] sm:$0xf]
      %v363 = vld [vmem:[%s298 + $0xc] sm:$0xf]
      %v364 = vld [vmem:[%s298 + $0x10] sm:$0xf]
      %v365 = vld [vmem:[%s298 + $0x14] sm:$0xf]
      %v366 = vld [vmem:[%s298 + $0x18] sm:$0xf]
      %v367 = vld [vmem:[%s298 + $0x1c] sm:$0xf]
      %v368 = vld [vmem:[%s294 + $0x80] sm:$0xf]
      %v369 = vld [vmem:[%s294 + $0x84] sm:$0xf]
      %s370 = scalar_lea.vmem %s298, 32
      %v371 = vld [vmem:[%s370] sm:$0xf]
      %v372 = vld [vmem:[%s370 + $0x4] sm:$0xf]
      %v373 = vld [vmem:[%s370 + $0x8] sm:$0xf]
      %v374 = vld [vmem:[%s370 + $0xc] sm:$0xf]
      %v375 = vld [vmem:[%s370 + $0x10] sm:$0xf]
      %v376 = vld [vmem:[%s370 + $0x14] sm:$0xf]
      %v377 = vld [vmem:[%s370 + $0x18] sm:$0xf]
      %v378 = vld [vmem:[%s370 + $0x1c] sm:$0xf]
      %v411 = vunpack.c.l.b16 %v330
      %v412 = vunpack.c.l.b16 %v331
      %v413 = vunpack.c.l.b16 %v332
      %v414 = vunpack.c.l.b16 %v333
      %v415 = vunpack.c.l.b16 %v334
      %v416 = vunpack.c.l.b16 %v335
      %v417 = vunpack.c.l.b16 %v336
      %v418 = vunpack.c.l.b16 %v337
      %v419 = vunpack.c.l.b16 %v338
      %v420 = vunpack.c.l.b16 %v339
      %v421 = vunpack.c.l.b16 %v340
      %v422 = vunpack.c.l.b16 %v341
      %v423 = vunpack.c.l.b16 %v342
      %v424 = vunpack.c.l.b16 %v343
      %v425 = vunpack.c.l.b16 %v344
      %v426 = vunpack.c.l.b16 %v345
      %v427 = vunpack.c.l.b16 %v346
      %v428 = vunpack.c.l.b16 %v347
      %v429 = vunpack.c.l.b16 %v348
      %v430 = vunpack.c.l.b16 %v349
      %v431 = vunpack.c.l.b16 %v350
      %v432 = vunpack.c.l.b16 %v351
      %v433 = vunpack.c.l.b16 %v352
      %v434 = vunpack.c.l.b16 %v353
      %v435 = vunpack.c.l.b16 %v354
      %v436 = vunpack.c.l.b16 %v355
      %v437 = vunpack.c.l.b16 %v356
      %v438 = vunpack.c.l.b16 %v357
      %v439 = vunpack.c.l.b16 %v358
      %v440 = vunpack.c.l.b16 %v359
      %v441 = vunpack.c.l.b16 %v368
      %v442 = vunpack.c.l.b16 %v369
      %v443 = vpack.c.b16 %v412, %v411
      %v444 = vpack.c.b16 %v414, %v413
      %v445 = vpack.c.b16 %v416, %v415
      %v446 = vpack.c.b16 %v418, %v417
      %v447 = vpack.c.b16 %v420, %v419
      %v448 = vpack.c.b16 %v422, %v421
      %v449 = vpack.c.b16 %v424, %v423
      %v450 = vpack.c.b16 %v426, %v425
      %v451 = vpack.c.b16 %v428, %v427
      %v452 = vpack.c.b16 %v430, %v429
      %v453 = vpack.c.b16 %v432, %v431
      %v454 = vpack.c.b16 %v434, %v433
      %v455 = vpack.c.b16 %v436, %v435
      %v456 = vpack.c.b16 %v438, %v437
      %v457 = vpack.c.b16 %v440, %v439
      %v458 = vpack.c.b16 %v442, %v441
      %v467 = vunpack.c.l.b16 %v371
      %v468 = vunpack.c.l.b16 %v372
      %v469 = vunpack.c.l.b16 %v373
      %v470 = vunpack.c.l.b16 %v374
      %v471 = vunpack.c.l.b16 %v375
      %v472 = vunpack.c.l.b16 %v376
      %v473 = vunpack.c.l.b16 %v377
      %v474 = vunpack.c.l.b16 %v378
      %v475 = vpack.c.b16 %v468, %v467
      %v476 = vpack.c.b16 %v470, %v469
      %v477 = vpack.c.b16 %v472, %v471
      %v478 = vpack.c.b16 %v474, %v473
      %vm483 = vcmask 523264
      %v485 = vsel %vm483, %v443, 0
      %v488 = vsel %vm483, %v444, 0
      %v491 = vsel %vm483, %v445, 0
      %v494 = vsel %vm483, %v446, 0
      %v497 = vsel %vm483, %v447, 0
      %v500 = vsel %vm483, %v448, 0
      %v503 = vsel %vm483, %v449, 0
      %v506 = vsel %vm483, %v450, 0
      %v509 = vsel %vm483, %v451, 0
      %v512 = vsel %vm483, %v452, 0
      %v515 = vsel %vm483, %v453, 0
      %v518 = vsel %vm483, %v454, 0
      %v521 = vsel %vm483, %v455, 0
      %v524 = vsel %vm483, %v456, 0
      %v527 = vsel %vm483, %v457, 0
      %v530 = vsel %vm483, %v458, 0
      %532 = vmatprep.subr.bf16.mxu0 0
      %533 = vmatpush1.bf16.msra.mxu0 %v475
      %534 = vmatprep.subr.bf16.mxu0 0
      %535 = vmatpush1.bf16.msra.mxu0 %v476
      %536 = vmatprep.subr.bf16.mxu0 0
      %537 = vmatpush1.bf16.msra.mxu0 %v477
      %538 = vmatprep.subr.bf16.mxu0 0
      %539 = vmatpush1.bf16.msra.mxu0 %v478
      %540 = vmatprep.subr.bf16.mxu0 0
      %541 = vmatpush1.bf16.msra.mxu0 0
      %542 = vmatprep.subr.bf16.mxu0 0
      %543 = vmatpush1.bf16.msra.mxu0 0
      %544 = vmatprep.subr.bf16.mxu0 0
      %545 = vmatpush1.bf16.msra.mxu0 0
      %546 = vmatprep.subr.bf16.mxu0 0
      %547 = vmatpush1.bf16.msra.mxu0 0
      %548 = vmatprep.subr.bf16.mxu0 0
      %549 = vmatpush1.bf16.msra.mxu0 0
      %550 = vmatprep.subr.bf16.mxu0 0
      %551 = vmatpush1.bf16.msra.mxu0 0
      %552 = vmatprep.subr.bf16.mxu0 0
      %553 = vmatpush1.bf16.msra.mxu0 0
      %554 = vmatprep.subr.bf16.mxu0 0
      %555 = vmatpush1.bf16.msra.mxu0 0
      %556 = vmatprep.subr.bf16.mxu0 0
      %557 = vmatpush1.bf16.msra.mxu0 0
      %558 = vmatprep.subr.bf16.mxu0 0
      %559 = vmatpush1.bf16.msra.mxu0 0
      %560 = vmatprep.subr.bf16.mxu0 0
      %561 = vmatpush1.bf16.msra.mxu0 0
      %562 = vmatprep.subr.bf16.mxu0 0
      %563 = vmatpush1.bf16.msra.mxu0 0
      %564 = vmatprep.mubr.bf16.mxu0 0
      %565 = vmatmul.mubr.bf16.gmra.mrb[0].mxu0 %v485
      %v566 = vpop.f32.mrb[0].mxu0
      %v567 = vadd.f32 0.0, %v566
      %v568 = vpop.f32.mrb[0].mxu0
      %v569 = vpop.f32.mrb[0].mxu0
      %v570 = vadd.f32 0.0, %v569
      %v571 = vpop.f32.mrb[0].mxu0
      %572 = vmatprep.mubr.bf16.mxu0 0
      %573 = vmatmul.mubr.bf16.gmra.mrb[0].mxu0 %v488
      %v574 = vpop.f32.mrb[0].mxu0
      %v575 = vadd.f32 0.0, %v574
      %v576 = vpop.f32.mrb[0].mxu0
      %v577 = vpop.f32.mrb[0].mxu0
      %v578 = vadd.f32 0.0, %v577
      %v579 = vpop.f32.mrb[0].mxu0
      %580 = vmatprep.mubr.bf16.mxu0 0
      %581 = vmatmul.mubr.bf16.gmra.mrb[0].mxu0 %v491
      %v582 = vpop.f32.mrb[0].mxu0
      %v583 = vadd.f32 0.0, %v582
      %v584 = vpop.f32.mrb[0].mxu0
      %v585 = vpop.f32.mrb[0].mxu0
      %v586 = vadd.f32 0.0, %v585
      %v587 = vpop.f32.mrb[0].mxu0
      %588 = vmatprep.mubr.bf16.mxu0 0
      %589 = vmatmul.mubr.bf16.gmra.mrb[0].mxu0 %v494
      %v590 = vpop.f32.mrb[0].mxu0
      %v591 = vadd.f32 0.0, %v590
      %v592 = vpop.f32.mrb[0].mxu0
      %v593 = vpop.f32.mrb[0].mxu0
      %v594 = vadd.f32 0.0, %v593
      %v595 = vpop.f32.mrb[0].mxu0
      %596 = vmatprep.mubr.bf16.mxu0 0
      %597 = vmatmul.mubr.bf16.gmra.mrb[0].mxu0 %v497
      %v598 = vpop.f32.mrb[0].mxu0
      %v599 = vadd.f32 0.0, %v598
      %v600 = vpop.f32.mrb[0].mxu0
      %v601 = vpop.f32.mrb[0].mxu0
      %v602 = vadd.f32 0.0, %v601
      %v603 = vpop.f32.mrb[0].mxu0
      %604 = vmatprep.mubr.bf16.mxu0 0
      %605 = vmatmul.mubr.bf16.gmra.mrb[0].mxu0 %v500
      %v606 = vpop.f32.mrb[0].mxu0
      %v607 = vadd.f32 0.0, %v606
      %v608 = vpop.f32.mrb[0].mxu0
      %v609 = vpop.f32.mrb[0].mxu0
      %v610 = vadd.f32 0.0, %v609
      %v611 = vpop.f32.mrb[0].mxu0
      %612 = vmatprep.mubr.bf16.mxu0 0
      %613 = vmatmul.mubr.bf16.gmra.mrb[0].mxu0 %v503
      %v614 = vpop.f32.mrb[0].mxu0
      %v615 = vadd.f32 0.0, %v614
      %v616 = vpop.f32.mrb[0].mxu0
      %v617 = vpop.f32.mrb[0].mxu0
      %v618 = vadd.f32 0.0, %v617
      %v619 = vpop.f32.mrb[0].mxu0
      %620 = vmatprep.mubr.bf16.mxu0 0
      %621 = vmatmul.mubr.bf16.gmra.mrb[0].mxu0 %v506
      %v622 = vpop.f32.mrb[0].mxu0
      %v623 = vadd.f32 0.0, %v622
      %v624 = vpop.f32.mrb[0].mxu0
      %v625 = vpop.f32.mrb[0].mxu0
      %v626 = vadd.f32 0.0, %v625
      %v627 = vpop.f32.mrb[0].mxu0
      %628 = vmatprep.mubr.bf16.mxu0 0
      %629 = vmatmul.mubr.bf16.gmra.mrb[0].mxu0 %v509
      %v630 = vpop.f32.mrb[0].mxu0
      %v631 = vadd.f32 0.0, %v630
      %v632 = vpop.f32.mrb[0].mxu0
      %v633 = vpop.f32.mrb[0].mxu0
      %v634 = vadd.f32 0.0, %v633
      %v635 = vpop.f32.mrb[0].mxu0
      %636 = vmatprep.mubr.bf16.mxu0 0
      %637 = vmatmul.mubr.bf16.gmra.mrb[0].mxu0 %v512
      %v638 = vpop.f32.mrb[0].mxu0
      %v639 = vadd.f32 0.0, %v638
      %v640 = vpop.f32.mrb[0].mxu0
      %v641 = vpop.f32.mrb[0].mxu0
      %v642 = vadd.f32 0.0, %v641
      %v643 = vpop.f32.mrb[0].mxu0
      %644 = vmatprep.mubr.bf16.mxu0 0
      %645 = vmatmul.mubr.bf16.gmra.mrb[0].mxu0 %v515
      %v646 = vpop.f32.mrb[0].mxu0
      %v647 = vadd.f32 0.0, %v646
      %v648 = vpop.f32.mrb[0].mxu0
      %v649 = vpop.f32.mrb[0].mxu0
      %v650 = vadd.f32 0.0, %v649
      %v651 = vpop.f32.mrb[0].mxu0
      %652 = vmatprep.mubr.bf16.mxu0 0
      %653 = vmatmul.mubr.bf16.gmra.mrb[0].mxu0 %v518
      %v654 = vpop.f32.mrb[0].mxu0
      %v655 = vadd.f32 0.0, %v654
      %v656 = vpop.f32.mrb[0].mxu0
      %v657 = vpop.f32.mrb[0].mxu0
      %v658 = vadd.f32 0.0, %v657
      %v659 = vpop.f32.mrb[0].mxu0
      %660 = vmatprep.mubr.bf16.mxu0 0
      %661 = vmatmul.mubr.bf16.gmra.mrb[0].mxu0 %v521
      %v662 = vpop.f32.mrb[0].mxu0
      %v663 = vadd.f32 0.0, %v662
      %v664 = vpop.f32.mrb[0].mxu0
      %v665 = vpop.f32.mrb[0].mxu0
      %v666 = vadd.f32 0.0, %v665
      %v667 = vpop.f32.mrb[0].mxu0
      %668 = vmatprep.mubr.bf16.mxu0 0
      %669 = vmatmul.mubr.bf16.gmra.mrb[0].mxu0 %v524
      %v670 = vpop.f32.mrb[0].mxu0
      %v671 = vadd.f32 0.0, %v670
      %v672 = vpop.f32.mrb[0].mxu0
      %v673 = vpop.f32.mrb[0].mxu0
      %v674 = vadd.f32 0.0, %v673
      %v675 = vpop.f32.mrb[0].mxu0
      %676 = vmatprep.mubr.bf16.mxu0 0
      %677 = vmatmul.mubr.bf16.gmra.mrb[0].mxu0 %v527
      %v678 = vpop.f32.mrb[0].mxu0
      %v679 = vadd.f32 0.0, %v678
      %v680 = vpop.f32.mrb[0].mxu0
      %v681 = vpop.f32.mrb[0].mxu0
      %v682 = vadd.f32 0.0, %v681
      %v683 = vpop.f32.mrb[0].mxu0
      %684 = vmatprep.mubr.bf16.mxu0 0
      %685 = vmatmul.mubr.bf16.gmra.mrb[0].mxu0 %v530
      %v686 = vpop.f32.mrb[0].mxu0
      %v687 = vadd.f32 0.0, %v686
      %v688 = vpop.f32.mrb[0].mxu0
      %v689 = vpop.f32.mrb[0].mxu0
      %v690 = vadd.f32 0.0, %v689
      %v691 = vpop.f32.mrb[0].mxu0
      %692 = vdwg.mxu0
      %v695 = vunpack.c.l.b16 %v328
      %v696 = vunpack.c.l.b16 %v329
      %v697 = vpack.c.b16 %v696, %v695
      %v706 = vunpack.c.l.b16 %v360
      %v707 = vunpack.c.l.b16 %v361
      %v708 = vunpack.c.l.b16 %v362
      %v709 = vunpack.c.l.b16 %v363
      %v710 = vunpack.c.l.b16 %v364
      %v711 = vunpack.c.l.b16 %v365
      %v712 = vunpack.c.l.b16 %v366
      %v713 = vunpack.c.l.b16 %v367
      %v714 = vpack.c.b16 %v707, %v706
      %v715 = vpack.c.b16 %v709, %v708
      %v716 = vpack.c.b16 %v711, %v710
      %v717 = vpack.c.b16 %v713, %v712
      %v723 = vsel %vm483, %v697, 0
      %725 = vmatprep.subr.bf16.mxu0 0
      %726 = vmatpush1.bf16.msra.mxu0 %v714
      %727 = vmatprep.subr.bf16.mxu0 0
      %728 = vmatpush1.bf16.msra.mxu0 %v715
      %729 = vmatprep.subr.bf16.mxu0 0
      %730 = vmatpush1.bf16.msra.mxu0 %v716
      %731 = vmatprep.subr.bf16.mxu0 0
      %732 = vmatpush1.bf16.msra.mxu0 %v717
      %733 = vmatprep.subr.bf16.mxu0 0
      %734 = vmatpush1.bf16.msra.mxu0 0
      %735 = vmatprep.subr.bf16.mxu0 0
      %736 = vmatpush1.bf16.msra.mxu0 0
      %737 = vmatprep.subr.bf16.mxu0 0
      %738 = vmatpush1.bf16.msra.mxu0 0
      %739 = vmatprep.subr.bf16.mxu0 0
      %740 = vmatpush1.bf16.msra.mxu0 0
      %741 = vmatprep.subr.bf16.mxu0 0
      %742 = vmatpush1.bf16.msra.mxu0 0
      %743 = vmatprep.subr.bf16.mxu0 0
      %744 = vmatpush1.bf16.msra.mxu0 0
      %745 = vmatprep.subr.bf16.mxu0 0
      %746 = vmatpush1.bf16.msra.mxu0 0
      %747 = vmatprep.subr.bf16.mxu0 0
      %748 = vmatpush1.bf16.msra.mxu0 0
      %749 = vmatprep.subr.bf16.mxu0 0
      %750 = vmatpush1.bf16.msra.mxu0 0
      %751 = vmatprep.subr.bf16.mxu0 0
      %752 = vmatpush1.bf16.msra.mxu0 0
      %753 = vmatprep.subr.bf16.mxu0 0
      %754 = vmatpush1.bf16.msra.mxu0 0
      %755 = vmatprep.subr.bf16.mxu0 0
      %756 = vmatpush1.bf16.msra.mxu0 0
      %757 = vmatprep.mubr.bf16.mxu0 0
      %758 = vmatmul.mubr.bf16.gmra.mrb[0].mxu0 %v723
      %v759 = vpop.f32.mrb[0].mxu0
      %v760 = vadd.f32 %v567, %v759
      %v761 = vpop.f32.mrb[0].mxu0
      %v762 = vpop.f32.mrb[0].mxu0
      %v763 = vadd.f32 %v570, %v762
      %v764 = vpop.f32.mrb[0].mxu0
      %765 = vmatprep.mubr.bf16.mxu0 0
      %766 = vmatmul.mubr.bf16.gmra.mrb[0].mxu0 %v485
      %v767 = vpop.f32.mrb[0].mxu0
      %v768 = vadd.f32 %v575, %v767
      %v769 = vpop.f32.mrb[0].mxu0
      %v770 = vpop.f32.mrb[0].mxu0
      %v771 = vadd.f32 %v578, %v770
      %v772 = vpop.f32.mrb[0].mxu0
      %773 = vmatprep.mubr.bf16.mxu0 0
      %774 = vmatmul.mubr.bf16.gmra.mrb[0].mxu0 %v488
      %v775 = vpop.f32.mrb[0].mxu0
      %v776 = vadd.f32 %v583, %v775
      %v777 = vpop.f32.mrb[0].mxu0
      %v778 = vpop.f32.mrb[0].mxu0
      %v779 = vadd.f32 %v586, %v778
      %v780 = vpop.f32.mrb[0].mxu0
      %781 = vmatprep.mubr.bf16.mxu0 0
      %782 = vmatmul.mubr.bf16.gmra.mrb[0].mxu0 %v491
      %v783 = vpop.f32.mrb[0].mxu0
      %v784 = vadd.f32 %v591, %v783
      %v785 = vpop.f32.mrb[0].mxu0
      %v786 = vpop.f32.mrb[0].mxu0
      %v787 = vadd.f32 %v594, %v786
      %v788 = vpop.f32.mrb[0].mxu0
      %789 = vmatprep.mubr.bf16.mxu0 0
      %790 = vmatmul.mubr.bf16.gmra.mrb[0].mxu0 %v494
      %v791 = vpop.f32.mrb[0].mxu0
      %v792 = vadd.f32 %v599, %v791
      %v793 = vpop.f32.mrb[0].mxu0
      %v794 = vpop.f32.mrb[0].mxu0
      %v795 = vadd.f32 %v602, %v794
      %v796 = vpop.f32.mrb[0].mxu0
      %797 = vmatprep.mubr.bf16.mxu0 0
      %798 = vmatmul.mubr.bf16.gmra.mrb[0].mxu0 %v497
      %v799 = vpop.f32.mrb[0].mxu0
      %v800 = vadd.f32 %v607, %v799
      %v801 = vpop.f32.mrb[0].mxu0
      %v802 = vpop.f32.mrb[0].mxu0
      %v803 = vadd.f32 %v610, %v802
      %v804 = vpop.f32.mrb[0].mxu0
      %805 = vmatprep.mubr.bf16.mxu0 0
      %806 = vmatmul.mubr.bf16.gmra.mrb[0].mxu0 %v500
      %v807 = vpop.f32.mrb[0].mxu0
      %v808 = vadd.f32 %v615, %v807
      %v809 = vpop.f32.mrb[0].mxu0
      %v810 = vpop.f32.mrb[0].mxu0
      %v811 = vadd.f32 %v618, %v810
      %v812 = vpop.f32.mrb[0].mxu0
      %813 = vmatprep.mubr.bf16.mxu0 0
      %814 = vmatmul.mubr.bf16.gmra.mrb[0].mxu0 %v503
      %v815 = vpop.f32.mrb[0].mxu0
      %v816 = vadd.f32 %v623, %v815
      %v817 = vpop.f32.mrb[0].mxu0
      %v818 = vpop.f32.mrb[0].mxu0
      %v819 = vadd.f32 %v626, %v818
      %v820 = vpop.f32.mrb[0].mxu0
      %821 = vmatprep.mubr.bf16.mxu0 0
      %822 = vmatmul.mubr.bf16.gmra.mrb[0].mxu0 %v506
      %v823 = vpop.f32.mrb[0].mxu0
      %v824 = vadd.f32 %v631, %v823
      %v825 = vpop.f32.mrb[0].mxu0
      %v826 = vpop.f32.mrb[0].mxu0
      %v827 = vadd.f32 %v634, %v826
      %v828 = vpop.f32.mrb[0].mxu0
      %829 = vmatprep.mubr.bf16.mxu0 0
      %830 = vmatmul.mubr.bf16.gmra.mrb[0].mxu0 %v509
      %v831 = vpop.f32.mrb[0].mxu0
      %v832 = vadd.f32 %v639, %v831
      %v833 = vpop.f32.mrb[0].mxu0
      %v834 = vpop.f32.mrb[0].mxu0
      %v835 = vadd.f32 %v642, %v834
      %v836 = vpop.f32.mrb[0].mxu0
      %837 = vmatprep.mubr.bf16.mxu0 0
      %838 = vmatmul.mubr.bf16.gmra.mrb[0].mxu0 %v512
      %v839 = vpop.f32.mrb[0].mxu0
      %v840 = vadd.f32 %v647, %v839
      %v841 = vpop.f32.mrb[0].mxu0
      %v842 = vpop.f32.mrb[0].mxu0
      %v843 = vadd.f32 %v650, %v842
      %v844 = vpop.f32.mrb[0].mxu0
      %845 = vmatprep.mubr.bf16.mxu0 0
      %846 = vmatmul.mubr.bf16.gmra.mrb[0].mxu0 %v515
      %v847 = vpop.f32.mrb[0].mxu0
      %v848 = vadd.f32 %v655, %v847
      %v849 = vpop.f32.mrb[0].mxu0
      %v850 = vpop.f32.mrb[0].mxu0
      %v851 = vadd.f32 %v658, %v850
      %v852 = vpop.f32.mrb[0].mxu0
      %853 = vmatprep.mubr.bf16.mxu0 0
      %854 = vmatmul.mubr.bf16.gmra.mrb[0].mxu0 %v518
      %v855 = vpop.f32.mrb[0].mxu0
      %v856 = vadd.f32 %v663, %v855
      %v857 = vpop.f32.mrb[0].mxu0
      %v858 = vpop.f32.mrb[0].mxu0
      %v859 = vadd.f32 %v666, %v858
      %v860 = vpop.f32.mrb[0].mxu0
      %861 = vmatprep.mubr.bf16.mxu0 0
      %862 = vmatmul.mubr.bf16.gmra.mrb[0].mxu0 %v521
      %v863 = vpop.f32.mrb[0].mxu0
      %v864 = vadd.f32 %v671, %v863
      %v865 = vpop.f32.mrb[0].mxu0
      %v866 = vpop.f32.mrb[0].mxu0
      %v867 = vadd.f32 %v674, %v866
      %v868 = vpop.f32.mrb[0].mxu0
      %869 = vmatprep.mubr.bf16.mxu0 0
      %870 = vmatmul.mubr.bf16.gmra.mrb[0].mxu0 %v524
      %v871 = vpop.f32.mrb[0].mxu0
      %v872 = vadd.f32 %v679, %v871
      %v873 = vpop.f32.mrb[0].mxu0
      %v874 = vpop.f32.mrb[0].mxu0
      %v875 = vadd.f32 %v682, %v874
      %v876 = vpop.f32.mrb[0].mxu0
      %877 = vmatprep.mubr.bf16.mxu0 0
      %878 = vmatmul.mubr.bf16.gmra.mrb[0].mxu0 %v527
      %v879 = vpop.f32.mrb[0].mxu0
      %v880 = vadd.f32 %v687, %v879
      %v881 = vpop.f32.mrb[0].mxu0
      %v882 = vpop.f32.mrb[0].mxu0
      %v883 = vadd.f32 %v690, %v882
      %v884 = vpop.f32.mrb[0].mxu0
      %885 = vdwg.mxu0
      %v886 = vld [vmem:[%s301] sm:$0x1]
      %v888 = vlaneseq
      %v889 = vshrl.u32 %v888, 7
      %v890 = vsub.s32 0, %v889
      %v891 = vrot.slane %v886, %v890
      %v893 = vadd.f32 %v760, %v891
      %v894 = vadd.f32 %v763, %v891
      %v895 = vadd.f32 %v768, %v891
      %v896 = vadd.f32 %v771, %v891
      %v897 = vadd.f32 %v776, %v891
      %v898 = vadd.f32 %v779, %v891
      %v899 = vadd.f32 %v784, %v891
      %v900 = vadd.f32 %v787, %v891
      %v901 = vadd.f32 %v792, %v891
      %v902 = vadd.f32 %v795, %v891
      %v903 = vadd.f32 %v800, %v891
      %v904 = vadd.f32 %v803, %v891
      %v905 = vadd.f32 %v808, %v891
      %v906 = vadd.f32 %v811, %v891
      %v907 = vadd.f32 %v816, %v891
      %v908 = vadd.f32 %v819, %v891
      %v909 = vadd.f32 %v824, %v891
      %v910 = vadd.f32 %v827, %v891
      %v911 = vadd.f32 %v832, %v891
      %v912 = vadd.f32 %v835, %v891
      %v913 = vadd.f32 %v840, %v891
      %v914 = vadd.f32 %v843, %v891
      %v915 = vadd.f32 %v848, %v891
      %v916 = vadd.f32 %v851, %v891
      %v917 = vadd.f32 %v856, %v891
      %v918 = vadd.f32 %v859, %v891
      %v919 = vadd.f32 %v864, %v891
      %v920 = vadd.f32 %v867, %v891
      %v921 = vadd.f32 %v872, %v891
      %v922 = vadd.f32 %v875, %v891
      %v923 = vadd.f32 %v880, %v891
      %v924 = vadd.f32 %v883, %v891
      %p925 = scmp.eq.s32.totalorder %s24, 0
      // Predicated region
      $region33: #{_lambda_.6} parent=31 // pred_check
        %p926 = pneg %p925
      $region34: #{_lambda_.6} parent=31 // pred_check_branch
        %928 = sbr.rel (%p926) target = $region36
      $region35: #{_lambda_.6} parent=31 // pred_region
        %929 = vst [vmem:[%s320] sm:$0x1] 0.0
        %930 = vst [vmem:[%s326] sm:$0x1] 0.0
      $region36: #{_lambda_.6} parent=31 // pred_fallthru
        _
      %v931 = vld [vmem:[%s320] sm:$0x1]
      %v932 = vadd.f32 %v893, %v894
      %v933 = vadd.f32 %v932, %v895
      %v934 = vadd.f32 %v933, %v896
      %v935 = vadd.f32 %v934, %v897
      %v936 = vadd.f32 %v935, %v898
      %v937 = vadd.f32 %v936, %v899
      %v938 = vadd.f32 %v937, %v900
      %v939 = vadd.f32 %v938, %v901
      %v940 = vadd.f32 %v939, %v902
      %v941 = vadd.f32 %v940, %v903
      %v942 = vadd.f32 %v941, %v904
      %v943 = vadd.f32 %v942, %v905
      %v944 = vadd.f32 %v943, %v906
      %v945 = vadd.f32 %v944, %v907
      %v946 = vadd.f32 %v945, %v908
      %v947 = vadd.f32 %v946, %v909
      %v948 = vadd.f32 %v947, %v910
      %v949 = vadd.f32 %v948, %v911
      %v950 = vadd.f32 %v949, %v912
      %v951 = vadd.f32 %v950, %v913
      %v952 = vadd.f32 %v951, %v914
      %v953 = vadd.f32 %v952, %v915
      %v954 = vadd.f32 %v953, %v916
      %v955 = vadd.f32 %v954, %v917
      %v956 = vadd.f32 %v955, %v918
      %v957 = vadd.f32 %v956, %v919
      %v958 = vadd.f32 %v957, %v920
      %v959 = vadd.f32 %v958, %v921
      %v960 = vadd.f32 %v959, %v922
      %v961 = vadd.f32 %v960, %v923
      %v962 = vadd.f32 %v961, %v924
      %v963 = vrot.slane %v962, 4
      %v964 = vadd.f32 %v962, %v963
      %v965 = vrot.slane %v964, 2
      %v966 = vadd.f32 %v964, %v965
      %v967 = vrot.slane %v966, 1
      %v968 = vadd.f32 %v966, %v967
      %v969 = vadd.f32 %v931, %v968
      %970 = vst [vmem:[%s320] sm:$0x1] %v969
      %v971 = vld [vmem:[%s326] sm:$0x1]
      %v972 = vmul.f32 %v893, %v893
      %v973 = vmul.f32 %v894, %v894
      %v974 = vmul.f32 %v895, %v895
      %v975 = vmul.f32 %v896, %v896
      %v976 = vmul.f32 %v897, %v897
      %v977 = vmul.f32 %v898, %v898
      %v978 = vmul.f32 %v899, %v899
      %v979 = vmul.f32 %v900, %v900
      %v980 = vmul.f32 %v901, %v901
      %v981 = vmul.f32 %v902, %v902
      %v982 = vmul.f32 %v903, %v903
      %v983 = vmul.f32 %v904, %v904
      %v984 = vmul.f32 %v905, %v905
      %v985 = vmul.f32 %v906, %v906
      %v986 = vmul.f32 %v907, %v907
      %v987 = vmul.f32 %v908, %v908
      %v988 = vmul.f32 %v909, %v909
      %v989 = vmul.f32 %v910, %v910
      %v990 = vmul.f32 %v911, %v911
      %v991 = vmul.f32 %v912, %v912
      %v992 = vmul.f32 %v913, %v913
      %v993 = vmul.f32 %v914, %v914
      %v994 = vmul.f32 %v915, %v915
      %v995 = vmul.f32 %v916, %v916
      %v996 = vmul.f32 %v917, %v917
      %v997 = vmul.f32 %v918, %v918
      %v998 = vmul.f32 %v919, %v919
      %v999 = vmul.f32 %v920, %v920
      %v1000 = vmul.f32 %v921, %v921
      %v1001 = vmul.f32 %v922, %v922
      %v1002 = vmul.f32 %v923, %v923
      %v1003 = vmul.f32 %v924, %v924
      %v1004 = vadd.f32 %v972, %v973
      %v1005 = vadd.f32 %v1004, %v974
      %v1006 = vadd.f32 %v1005, %v975
      %v1007 = vadd.f32 %v1006, %v976
      %v1008 = vadd.f32 %v1007, %v977
      %v1009 = vadd.f32 %v1008, %v978
      %v1010 = vadd.f32 %v1009, %v979
      %v1011 = vadd.f32 %v1010, %v980
      %v1012 = vadd.f32 %v1011, %v981
      %v1013 = vadd.f32 %v1012, %v982
      %v1014 = vadd.f32 %v1013, %v983
      %v1015 = vadd.f32 %v1014, %v984
      %v1016 = vadd.f32 %v1015, %v985
      %v1017 = vadd.f32 %v1016, %v986
      %v1018 = vadd.f32 %v1017, %v987
      %v1019 = vadd.f32 %v1018, %v988
      %v1020 = vadd.f32 %v1019, %v989
      %v1021 = vadd.f32 %v1020, %v990
      %v1022 = vadd.f32 %v1021, %v991
      %v1023 = vadd.f32 %v1022, %v992
      %v1024 = vadd.f32 %v1023, %v993
      %v1025 = vadd.f32 %v1024, %v994
      %v1026 = vadd.f32 %v1025, %v995
      %v1027 = vadd.f32 %v1026, %v996
      %v1028 = vadd.f32 %v1027, %v997
      %v1029 = vadd.f32 %v1028, %v998
      %v1030 = vadd.f32 %v1029, %v999
      %v1031 = vadd.f32 %v1030, %v1000
      %v1032 = vadd.f32 %v1031, %v1001
      %v1033 = vadd.f32 %v1032, %v1002
      %v1034 = vadd.f32 %v1033, %v1003
      %v1035 = vrot.slane %v1034, 4
      %v1036 = vadd.f32 %v1034, %v1035
      %v1037 = vrot.slane %v1036, 2
      %v1038 = vadd.f32 %v1036, %v1037
      %v1039 = vrot.slane %v1038, 1
      %v1040 = vadd.f32 %v1038, %v1039
      %v1041 = vadd.f32 %v971, %v1040
      %1042 = vst [vmem:[%s326] sm:$0x1] %v1041
      %v1043 = vpack.c.bf16 %v894, %v893
      %v1044 = vpack.c.bf16 %v896, %v895
      %v1045 = vpack.c.bf16 %v898, %v897
      %v1046 = vpack.c.bf16 %v900, %v899
      %v1047 = vpack.c.bf16 %v902, %v901
      %v1048 = vpack.c.bf16 %v904, %v903
      %v1049 = vpack.c.bf16 %v906, %v905
      %v1050 = vpack.c.bf16 %v908, %v907
      %v1051 = vpack.c.bf16 %v910, %v909
      %v1052 = vpack.c.bf16 %v912, %v911
      %v1053 = vpack.c.bf16 %v914, %v913
      %v1054 = vpack.c.bf16 %v916, %v915
      %v1055 = vpack.c.bf16 %v918, %v917
      %v1056 = vpack.c.bf16 %v920, %v919
      %v1057 = vpack.c.bf16 %v922, %v921
      %v1058 = vpack.c.bf16 %v924, %v923
      %v1075 = vunpack.c.l.b16 %v1043
      %v1076 = vunpack.c.h.b16 %v1043
      %v1077 = vunpack.c.l.b16 %v1044
      %v1078 = vunpack.c.h.b16 %v1044
      %v1079 = vunpack.c.l.b16 %v1045
      %v1080 = vunpack.c.h.b16 %v1045
      %v1081 = vunpack.c.l.b16 %v1046
      %v1082 = vunpack.c.h.b16 %v1046
      %v1083 = vunpack.c.l.b16 %v1047
      %v1084 = vunpack.c.h.b16 %v1047
      %v1085 = vunpack.c.l.b16 %v1048
      %v1086 = vunpack.c.h.b16 %v1048
      %v1087 = vunpack.c.l.b16 %v1049
      %v1088 = vunpack.c.h.b16 %v1049
      %v1089 = vunpack.c.l.b16 %v1050
      %v1090 = vunpack.c.h.b16 %v1050
      %v1091 = vunpack.c.l.b16 %v1051
      %v1092 = vunpack.c.h.b16 %v1051
      %v1093 = vunpack.c.l.b16 %v1052
      %v1094 = vunpack.c.h.b16 %v1052
      %v1095 = vunpack.c.l.b16 %v1053
      %v1096 = vunpack.c.h.b16 %v1053
      %v1097 = vunpack.c.l.b16 %v1054
      %v1098 = vunpack.c.h.b16 %v1054
      %v1099 = vunpack.c.l.b16 %v1055
      %v1100 = vunpack.c.h.b16 %v1055
      %v1101 = vunpack.c.l.b16 %v1056
      %v1102 = vunpack.c.h.b16 %v1056
      %v1103 = vunpack.c.l.b16 %v1057
      %v1104 = vunpack.c.h.b16 %v1057
      %v1105 = vunpack.c.l.b16 %v1058
      %v1106 = vunpack.c.h.b16 %v1058
      %v1107 = vpack.c.b16 %v1075, %v1075
      %v1108 = vpack.c.b16 %v1076, %v1076
      %v1109 = vpack.c.b16 %v1077, %v1077
      %v1110 = vpack.c.b16 %v1078, %v1078
      %v1111 = vpack.c.b16 %v1079, %v1079
      %v1112 = vpack.c.b16 %v1080, %v1080
      %v1113 = vpack.c.b16 %v1081, %v1081
      %v1114 = vpack.c.b16 %v1082, %v1082
      %v1115 = vpack.c.b16 %v1083, %v1083
      %v1116 = vpack.c.b16 %v1084, %v1084
      %v1117 = vpack.c.b16 %v1085, %v1085
      %v1118 = vpack.c.b16 %v1086, %v1086
      %v1119 = vpack.c.b16 %v1087, %v1087
      %v1120 = vpack.c.b16 %v1088, %v1088
      %v1121 = vpack.c.b16 %v1089, %v1089
      %v1122 = vpack.c.b16 %v1090, %v1090
      %v1123 = vpack.c.b16 %v1091, %v1091
      %v1124 = vpack.c.b16 %v1092, %v1092
      %v1125 = vpack.c.b16 %v1093, %v1093
      %v1126 = vpack.c.b16 %v1094, %v1094
      %v1127 = vpack.c.b16 %v1095, %v1095
      %v1128 = vpack.c.b16 %v1096, %v1096
      %v1129 = vpack.c.b16 %v1097, %v1097
      %v1130 = vpack.c.b16 %v1098, %v1098
      %v1131 = vpack.c.b16 %v1099, %v1099
      %v1132 = vpack.c.b16 %v1100, %v1100
      %v1133 = vpack.c.b16 %v1101, %v1101
      %v1134 = vpack.c.b16 %v1102, %v1102
      %v1135 = vpack.c.b16 %v1103, %v1103
      %v1136 = vpack.c.b16 %v1104, %v1104
      %v1137 = vpack.c.b16 %v1105, %v1105
      %v1138 = vpack.c.b16 %v1106, %v1106
      %1171 = vst [vmem:[%s313] sm:$0xf] %v1107
      %1172 = vst [vmem:[%s313 + $0x4] sm:$0xf] %v1108
      %1173 = vst [vmem:[%s313 + $0x8] sm:$0xf] %v1109
      %1174 = vst [vmem:[%s313 + $0xc] sm:$0xf] %v1110
      %1175 = vst [vmem:[%s313 + $0x10] sm:$0xf] %v1111
      %1176 = vst [vmem:[%s313 + $0x14] sm:$0xf] %v1112
      %1177 = vst [vmem:[%s313 + $0x18] sm:$0xf] %v1113
      %1178 = vst [vmem:[%s313 + $0x1c] sm:$0xf] %v1114
      %1179 = vst [vmem:[%s313 + $0x20] sm:$0xf] %v1115
      %1180 = vst [vmem:[%s313 + $0x24] sm:$0xf] %v1116
      %1181 = vst [vmem:[%s313 + $0x28] sm:$0xf] %v1117
      %1182 = vst [vmem:[%s313 + $0x2c] sm:$0xf] %v1118
      %1183 = vst [vmem:[%s313 + $0x30] sm:$0xf] %v1119
      %1184 = vst [vmem:[%s313 + $0x34] sm:$0xf] %v1120
      %1185 = vst [vmem:[%s313 + $0x38] sm:$0xf] %v1121
      %1186 = vst [vmem:[%s313 + $0x3c] sm:$0xf] %v1122
      %1187 = vst [vmem:[%s313 + $0x40] sm:$0xf] %v1123
      %1188 = vst [vmem:[%s313 + $0x44] sm:$0xf] %v1124
      %1189 = vst [vmem:[%s313 + $0x48] sm:$0xf] %v1125
      %1190 = vst [vmem:[%s313 + $0x4c] sm:$0xf] %v1126
      %1191 = vst [vmem:[%s313 + $0x50] sm:$0xf] %v1127
      %1192 = vst [vmem:[%s313 + $0x54] sm:$0xf] %v1128
      %1193 = vst [vmem:[%s313 + $0x58] sm:$0xf] %v1129
      %1194 = vst [vmem:[%s313 + $0x5c] sm:$0xf] %v1130
      %1195 = vst [vmem:[%s313 + $0x60] sm:$0xf] %v1131
      %1196 = vst [vmem:[%s313 + $0x64] sm:$0xf] %v1132
      %1197 = vst [vmem:[%s313 + $0x68] sm:$0xf] %v1133
      %1198 = vst [vmem:[%s313 + $0x6c] sm:$0xf] %v1134
      %1199 = vst [vmem:[%s313 + $0x70] sm:$0xf] %v1135
      %1200 = vst [vmem:[%s313 + $0x74] sm:$0xf] %v1136
      %1201 = vst [vmem:[%s313 + $0x78] sm:$0xf] %v1137
      %1202 = vst [vmem:[%s313 + $0x7c] sm:$0xf] %v1138
      %s1203 = smul.u32 32, %s24
      %p1204 = scmp.lt.s32.totalorder %s22, 1
      %s1205 = scalar_select %p1204, %s22, 1
      %p1206 = scmp.lt.s32.totalorder %s1203, 31
      %s1207 = scalar_select %p1206, %s1203, 31
      %p1208 = scmp.lt.s32.totalorder %s23, 0
      %s1209 = scalar_select %p1208, %s23, 0
      %s1210 = sadd.s32 %s1209, %s1207
      %s1211 = smul.addr %s1205, 32
      %s1212 = sadd.s32 %s1210, %s1211
      %s1213 = smul.addr %s1212, 4
      %s1214 = scalar_lea.vmem %s3, %s1213
      %p1215 = scmp.lt.s32.totalorder %s22, 1
      %s1216 = scalar_select %p1215, %s22, 1
      %p1217 = scmp.lt.s32.totalorder %s23, 0
      %s1218 = scalar_select %p1217, %s23, 0
      %s1219 = sadd.s32 %s1218, %s1216
      %s1220 = scalar_lea.vmem %s4, %s1219
      %p1221 = scmp.lt.s32.totalorder %s22, 1
      %s1222 = scalar_select %p1221, %s22, 1
      %p1223 = scmp.lt.s32.totalorder %s23, 0
      %s1224 = scalar_select %p1223, %s23, 0
      %s1225 = sadd.s32 %s1224, %s1222
      %s1226 = scalar_lea.vmem %s5, %s1225
      // Predicated region
      $region37: #{_lambda_.6} parent=31 // pred_check
        %p1227 = pneg %p136
      $region38: #{_lambda_.6} parent=31 // pred_check_branch
        %1229 = sbr.rel (%p1227) target = $region40
      $region39: #{_lambda_.6} parent=31 // pred_region
        %s1230 = smul.u32 32, %s24
      $region40: #{_lambda_.6} parent=31 // pred_fallthru
        _
      // Predicated region
      $region41: #{_lambda_.6} parent=31 // pred_check
        %p1231 = pneg %p164
      $region42: #{_lambda_.6} parent=31 // pred_check_branch
        %1233 = sbr.rel (%p1231) target = $region44
      $region43: #{_lambda_.6} parent=31 // pred_region
        _
      $region44: #{_lambda_.6} parent=31 // pred_fallthru
        _
      // Predicated region
      $region45: #{_lambda_.6} parent=31 // pred_check
        %p1234 = pneg %p192
      $region46: #{_lambda_.6} parent=31 // pred_check_branch
        %1236 = sbr.rel (%p1234) target = $region48
      $region47: #{_lambda_.6} parent=31 // pred_region
        _
      $region48: #{_lambda_.6} parent=31 // pred_fallthru
        _
    $region32: #{_lambda_.6} parent=5 // pred_fallthru
      _
    %p1237 = scmp.le.s32.totalorder 2, %s12
    // Predicated region
    $region49: #{_lambda_.6} parent=5 // pred_check
      %p1238 = pneg %p1237
    $region50: #{_lambda_.6} parent=5 // pred_check_branch
      %1240 = sbr.rel (%p1238) target = $region52
    $region51: #{_lambda_.6} parent=5 // pred_region
      %s1241 = ssub.s32 %s12, 2
      // Predicated region
      $region53: #{_lambda_.6} parent=51 // pred_check
        %p1242 = pneg %p142
      $region54: #{_lambda_.6} parent=51 // pred_check_branch
        %1244 = sbr.rel (%p1242) target = $region56
      $region55: #{_lambda_.6} parent=51 // pred_region
        %s1245 = smul.u32 32, %s27
        %p1246 = scmp.lt.s32.totalorder %s25, 1
        %s1247 = scalar_select %p1246, %s25, 1
        %p1248 = scmp.lt.s32.totalorder %s1245, 31
        %s1249 = scalar_select %p1248, %s1245, 31
        %p1250 = scmp.lt.s32.totalorder %s26, 0
        %s1251 = scalar_select %p1250, %s26, 0
        %s1252 = sadd.s32 %s1251, %s1249
        %s1253 = smul.addr %s1247, 32
        %s1254 = sadd.s32 %s1252, %s1253
        %s1255 = smul.addr %s1254, 4
        %s1256 = scalar_lea.vmem %s3, %s1255
      $region56: #{_lambda_.6} parent=51 // pred_fallthru
        _
      // Predicated region
      $region57: #{_lambda_.6} parent=51 // pred_check
        %p1257 = pneg %p170
      $region58: #{_lambda_.6} parent=51 // pred_check_branch
        %1259 = sbr.rel (%p1257) target = $region60
      $region59: #{_lambda_.6} parent=51 // pred_region
        %p1260 = scmp.lt.s32.totalorder %s25, 1
        %s1261 = scalar_select %p1260, %s25, 1
        %p1262 = scmp.lt.s32.totalorder %s26, 0
        %s1263 = scalar_select %p1262, %s26, 0
        %s1264 = sadd.s32 %s1263, %s1261
        %s1265 = scalar_lea.vmem %s4, %s1264
      $region60: #{_lambda_.6} parent=51 // pred_fallthru
        _
      // Predicated region
      $region61: #{_lambda_.6} parent=51 // pred_check
        %p1266 = pneg %p198
      $region62: #{_lambda_.6} parent=51 // pred_check_branch
        %1268 = sbr.rel (%p1266) target = $region64
      $region63: #{_lambda_.6} parent=51 // pred_region
        %p1269 = scmp.lt.s32.totalorder %s25, 1
        %s1270 = scalar_select %p1269, %s25, 1
        %p1271 = scmp.lt.s32.totalorder %s26, 0
        %s1272 = scalar_select %p1271, %s26, 0
        %s1273 = sadd.s32 %s1272, %s1270
        %s1274 = scalar_lea.vmem %s5, %s1273
      $region64: #{_lambda_.6} parent=51 // pred_fallthru
        _
    $region52: #{_lambda_.6} parent=5 // pred_fallthru
      _
  $region6: #{_lambda_.6} parent=0 // loop_footer
    %s16 = sadd.s32 1, %s12
  $region7: #{_lambda_.6} parent=0 // loop_footer_branch
    %11 = sbr.rel target = $region3
  $region8: #{_lambda_.6} parent=0 // loop_exit
    _

// kernel: _lambda_.7
$region0: #{_lambda_.7}
  #allocation0 [shape = 'u32[]', space=smem, size = 0x4, offset = 0x4, fixed_abs, tag = 'smem constant byte address 0x4 - core index']
  #allocation1 [shape = 'u32[144,128]{1,0:T(1,128)}', space=vmem, size = 0x12000, scoped, tag = 'internal scratch']
  %s0 = inlined_call_operand.vmem [shape: bf16[2,72,128], index: 0, kind: input, shape index: {}]
  %s1 = inlined_call_operand.vmem [shape: bf16[2,128,128], index: 1, kind: input, shape index: {}]
  %s2 = inlined_call_operand.vmem [shape: f32[1,128], index: 2, kind: input, shape index: {}]
  %s3 = inlined_call_operand.vmem [shape: bf16[2,64,128], index: 3, kind: output, shape index: {0}]
  %s4 = inlined_call_operand.vmem [shape: f32[2,1,128], index: 4, kind: output, shape index: {1}]
  %s5 = inlined_call_operand.vmem [shape: f32[2,1,128], index: 5, kind: output, shape index: {2}]
  %6 = xla_tuple %s3, %s4, %s5
  %s7 = sld [smem:[#allocation0]]
  $region65: #{_lambda_.7} parent=0
    _
  %s9 = ssub.s32 1, %s7
  %s10 = scalar_select 0, %s9, %s7
  loop: start=0, step=1, limit=4
  $region2: #{_lambda_.7} parent=0 // loop_pre_header
    _
  $region3: #{_lambda_.7} parent=0 // loop_header
    %s12 = sphi 0, %s16
    %p13 = scmp.ge.s32.totalorder %s12, 4
    %s19 = sphi 0, %s38
    %s20 = sphi 0, %s34
    %s21 = sphi 0, %s30
    %s22 = sphi 0, %s19
    %s23 = sphi 0, %s20
    %s24 = sphi 0, %s21
    %s25 = sphi 0, %s22
    %s26 = sphi 0, %s23
    %s27 = sphi 0, %s24
    %s41 = sphi 0, %s43
    %s44 = sphi 0, %s41
    %s45 = sphi 0, %s44
    %s61 = sphi 0, %s45
    %s67 = sphi 0, %s69
    %s70 = sphi 0, %s67
    %s71 = sphi 0, %s70
    %s87 = sphi 0, %s71
    %s93 = sphi 0, %s95
    %s96 = sphi 0, %s93
    %s97 = sphi 0, %s96
    %s113 = sphi 0, %s97
    %s123 = sphi 0, %s125
    %s126 = sphi 0, %s123
    %s127 = sphi 0, %s126
    %s143 = sphi 0, %s127
    %s151 = sphi 0, %s153
    %s154 = sphi 0, %s151
    %s155 = sphi 0, %s154
    %s171 = sphi 0, %s155
    %s179 = sphi 0, %s181
    %s182 = sphi 0, %s179
    %s183 = sphi 0, %s182
    %s199 = sphi 0, %s183
  $region4: #{_lambda_.7} parent=0 // loop_header_branch
    %15 = sbr.rel (%p13) target = $region8
  $region5: #{_lambda_.7} parent=0 // loop_body
    %s17 = ssub.s32 %s12, 1
    %s18 = ssub.s32 %s12, 2
    %s28 = sadd.s32 1, %s21
    %p29 = scmp.ge.s32.totalorder %s28, 1
    %s30 = scalar_select %p29, 0, %s28
    %s31 = sadd.s32 1, %s20
    %s32 = scalar_select %p29, %s31, %s20
    %p33 = scmp.ge.s32.totalorder %s32, 1
    %s34 = scalar_select %p33, 0, %s32
    %s35 = sadd.s32 1, %s19
    %s36 = scalar_select %p33, %s35, %s19
    %p37 = scmp.ge.s32.totalorder %s36, 2
    %s38 = scalar_select %p37, 0, %s36
    %s39 = ssub.s32 %s19, %s38
    %p40 = scmp.eq.s32.totalorder %s39, 0
    %s42 = sadd.s32 %s41, 1
    %s43 = scalar_select %p40, %s41, %s42
    %p46 = pneg %p40
    %p47 = scmp.eq.s32.totalorder %s12, 1
    %p48 = por %p46, %p47
    %p49 = scmp.ne.s32.totalorder %s41, %s44
    %p50 = scmp.eq.s32.totalorder %s12, 0
    %p51 = por %p49, %p50
    %p52 = scmp.ne.s32.totalorder %s41, %s44
    %p53 = scmp.eq.s32.totalorder %s17, 1
    %p54 = por %p52, %p53
    %p55 = scmp.ne.s32.totalorder %s44, %s45
    %p56 = scmp.eq.s32.totalorder %s17, 0
    %p57 = por %p55, %p56
    %p58 = scmp.ne.s32.totalorder %s44, %s45
    %p59 = scmp.eq.s32.totalorder %s18, 1
    %p60 = por %p58, %p59
    %p62 = scmp.ne.s32.totalorder %s45, %s61
    %p63 = scmp.eq.s32.totalorder %s18, 0
    %p64 = por %p62, %p63
    %s65 = ssub.s32 %s20, %s34
    %p66 = scmp.eq.s32.totalorder %s65, 0
    %s68 = sadd.s32 %s67, 1
    %s69 = scalar_select %p66, %s67, %s68
    %p72 = pneg %p66
    %p73 = scmp.eq.s32.totalorder %s12, 1
    %p74 = por %p72, %p73
    %p75 = scmp.ne.s32.totalorder %s67, %s70
    %p76 = scmp.eq.s32.totalorder %s12, 0
    %p77 = por %p75, %p76
    %p78 = scmp.ne.s32.totalorder %s67, %s70
    %p79 = scmp.eq.s32.totalorder %s17, 1
    %p80 = por %p78, %p79
    %p81 = scmp.ne.s32.totalorder %s70, %s71
    %p82 = scmp.eq.s32.totalorder %s17, 0
    %p83 = por %p81, %p82
    %p84 = scmp.ne.s32.totalorder %s70, %s71
    %p85 = scmp.eq.s32.totalorder %s18, 1
    %p86 = por %p84, %p85
    %p88 = scmp.ne.s32.totalorder %s71, %s87
    %p89 = scmp.eq.s32.totalorder %s18, 0
    %p90 = por %p88, %p89
    %s91 = ssub.s32 %s20, %s34
    %p92 = scmp.eq.s32.totalorder %s91, 0
    %s94 = sadd.s32 %s93, 1
    %s95 = scalar_select %p92, %s93, %s94
    %p98 = pneg %p92
    %p99 = scmp.eq.s32.totalorder %s12, 1
    %p100 = por %p98, %p99
    %p101 = scmp.ne.s32.totalorder %s93, %s96
    %p102 = scmp.eq.s32.totalorder %s12, 0
    %p103 = por %p101, %p102
    %p104 = scmp.ne.s32.totalorder %s93, %s96
    %p105 = scmp.eq.s32.totalorder %s17, 1
    %p106 = por %p104, %p105
    %p107 = scmp.ne.s32.totalorder %s96, %s97
    %p108 = scmp.eq.s32.totalorder %s17, 0
    %p109 = por %p107, %p108
    %p110 = scmp.ne.s32.totalorder %s96, %s97
    %p111 = scmp.eq.s32.totalorder %s18, 1
    %p112 = por %p110, %p111
    %p114 = scmp.ne.s32.totalorder %s97, %s113
    %p115 = scmp.eq.s32.totalorder %s18, 0
    %p116 = por %p114, %p115
    %s117 = ssub.s32 %s19, %s38
    %s118 = ssub.s32 %s21, %s30
    %s119 = sor.u32 %s117, %s118
    %s120 = ssub.s32 %s20, %s34
    %s121 = sor.u32 %s119, %s120
    %p122 = scmp.eq.s32.totalorder %s121, 0
    %s124 = sadd.s32 %s123, 1
    %s125 = scalar_select %p122, %s123, %s124
    %p128 = pneg %p122
    %p129 = scmp.eq.s32.totalorder %s12, 1
    %p130 = por %p128, %p129
    %p131 = scmp.ne.s32.totalorder %s123, %s126
    %p132 = scmp.eq.s32.totalorder %s12, 0
    %p133 = por %p131, %p132
    %p134 = scmp.ne.s32.totalorder %s123, %s126
    %p135 = scmp.eq.s32.totalorder %s17, 1
    %p136 = por %p134, %p135
    %p137 = scmp.ne.s32.totalorder %s126, %s127
    %p138 = scmp.eq.s32.totalorder %s17, 0
    %p139 = por %p137, %p138
    %p140 = scmp.ne.s32.totalorder %s126, %s127
    %p141 = scmp.eq.s32.totalorder %s18, 1
    %p142 = por %p140, %p141
    %p144 = scmp.ne.s32.totalorder %s127, %s143
    %p145 = scmp.eq.s32.totalorder %s18, 0
    %p146 = por %p144, %p145
    %s147 = ssub.s32 %s19, %s38
    %s148 = ssub.s32 %s20, %s34
    %s149 = sor.u32 %s147, %s148
    %p150 = scmp.eq.s32.totalorder %s149, 0
    %s152 = sadd.s32 %s151, 1
    %s153 = scalar_select %p150, %s151, %s152
    %p156 = pneg %p150
    %p157 = scmp.eq.s32.totalorder %s12, 1
    %p158 = por %p156, %p157
    %p159 = scmp.ne.s32.totalorder %s151, %s154
    %p160 = scmp.eq.s32.totalorder %s12, 0
    %p161 = por %p159, %p160
    %p162 = scmp.ne.s32.totalorder %s151, %s154
    %p163 = scmp.eq.s32.totalorder %s17, 1
    %p164 = por %p162, %p163
    %p165 = scmp.ne.s32.totalorder %s154, %s155
    %p166 = scmp.eq.s32.totalorder %s17, 0
    %p167 = por %p165, %p166
    %p168 = scmp.ne.s32.totalorder %s154, %s155
    %p169 = scmp.eq.s32.totalorder %s18, 1
    %p170 = por %p168, %p169
    %p172 = scmp.ne.s32.totalorder %s155, %s171
    %p173 = scmp.eq.s32.totalorder %s18, 0
    %p174 = por %p172, %p173
    %s175 = ssub.s32 %s19, %s38
    %s176 = ssub.s32 %s20, %s34
    %s177 = sor.u32 %s175, %s176
    %p178 = scmp.eq.s32.totalorder %s177, 0
    %s180 = sadd.s32 %s179, 1
    %s181 = scalar_select %p178, %s179, %s180
    %p184 = pneg %p178
    %p185 = scmp.eq.s32.totalorder %s12, 1
    %p186 = por %p184, %p185
    %p187 = scmp.ne.s32.totalorder %s179, %s182
    %p188 = scmp.eq.s32.totalorder %s12, 0
    %p189 = por %p187, %p188
    %p190 = scmp.ne.s32.totalorder %s179, %s182
    %p191 = scmp.eq.s32.totalorder %s17, 1
    %p192 = por %p190, %p191
    %p193 = scmp.ne.s32.totalorder %s182, %s183
    %p194 = scmp.eq.s32.totalorder %s17, 0
    %p195 = por %p193, %p194
    %p196 = scmp.ne.s32.totalorder %s182, %s183
    %p197 = scmp.eq.s32.totalorder %s18, 1
    %p198 = por %p196, %p197
    %p200 = scmp.ne.s32.totalorder %s183, %s199
    %p201 = scmp.eq.s32.totalorder %s18, 0
    %p202 = por %p200, %p201
    %p203 = scmp.le.s32.totalorder 1, %s12
    %p204 = scmp.lt.s32.totalorder %s12, 3
    %p205 = pnand %p203, %p204
    %p206 = pneg %p205
    // Predicated region
    $region9: #{_lambda_.7} parent=5 // pred_check
      _
    $region10: #{_lambda_.7} parent=5 // pred_check_branch
      %208 = sbr.rel (%p205) target = $region12
    $region11: #{_lambda_.7} parent=5 // pred_region
      %s209 = ssub.s32 %s12, 1
      // Predicated region
      $region13: #{_lambda_.7} parent=11 // pred_check
        %p210 = pneg %p83
      $region14: #{_lambda_.7} parent=11 // pred_check_branch
        %212 = sbr.rel (%p210) target = $region16
      $region15: #{_lambda_.7} parent=11 // pred_region
        %p213 = scmp.lt.s32.totalorder %s23, 0
        %s214 = scalar_select %p213, %s23, 0
        %s215 = smul.addr %s214, 4
        %s216 = scalar_lea.vmem %s1, %s215
      $region16: #{_lambda_.7} parent=11 // pred_fallthru
        _
      // Predicated region
      $region17: #{_lambda_.7} parent=11 // pred_check
        %p217 = pneg %p109
      $region18: #{_lambda_.7} parent=11 // pred_check_branch
        %219 = sbr.rel (%p217) target = $region20
      $region19: #{_lambda_.7} parent=11 // pred_region
        %p220 = scmp.lt.s32.totalorder %s23, 0
        %s221 = scalar_select %p220, %s23, 0
        %s222 = scalar_lea.vmem %s2, %s221
      $region20: #{_lambda_.7} parent=11 // pred_fallthru
        _
    $region12: #{_lambda_.7} parent=5 // pred_fallthru
      _
    %p223 = scmp.lt.s32.totalorder %s12, 2
    // Predicated region
    $region21: #{_lambda_.7} parent=5 // pred_check
      %p224 = pneg %p223
    $region22: #{_lambda_.7} parent=5 // pred_check_branch
      %226 = sbr.rel (%p224) target = $region24
    $region23: #{_lambda_.7} parent=5 // pred_region
      // Predicated region
      $region25: #{_lambda_.7} parent=23 // pred_check
        %p227 = pneg %p51
      $region26: #{_lambda_.7} parent=23 // pred_check_branch
        %229 = sbr.rel (%p227) target = $region28
      $region27: #{_lambda_.7} parent=23 // pred_region
        %p230 = scmp.lt.s32.totalorder %s19, 1
        %s231 = scalar_select %p230, %s19, 1
        %s232 = smul.addr %s231, 9
        %s233 = smul.addr %s232, 4
        %s234 = scalar_lea.vmem %s0, %s233
      $region28: #{_lambda_.7} parent=23 // pred_fallthru
        _
    $region24: #{_lambda_.7} parent=5 // pred_fallthru
      _
    %p235 = scmp.le.s32.totalorder 1, %s12
    %p236 = scmp.lt.s32.totalorder %s12, 3
    %p237 = pnand %p235, %p236
    %p238 = pneg %p237
    // Predicated region
    $region29: #{_lambda_.7} parent=5 // pred_check
      _
    $region30: #{_lambda_.7} parent=5 // pred_check_branch
      %240 = sbr.rel (%p237) target = $region32
    $region31: #{_lambda_.7} parent=5 // pred_region
      %s241 = ssub.s32 %s12, 1
      %p242 = scmp.lt.s32.totalorder %s22, 1
      %s243 = scalar_select %p242, %s22, 1
      %s244 = smul.addr %s243, 9
      %s245 = smul.addr %s244, 4
      %s246 = scalar_lea.vmem %s0, %s245
      %p247 = pneg %p57
      %p248 = pneg %p54
      %p249 = scmp.lt.s32.totalorder %s23, 0
      %s250 = scalar_select %p249, %s23, 0
      %s251 = smul.addr %s250, 4
      %s252 = scalar_lea.vmem %s1, %s251
      %p253 = pneg %p83
      %p254 = pneg %p80
      %p255 = scmp.lt.s32.totalorder %s23, 0
      %s256 = scalar_select %p255, %s23, 0
      %s257 = scalar_lea.vmem %s2, %s256
      %p258 = pneg %p109
      %p259 = pneg %p106
      %p260 = pneg %p139
      %p261 = pneg %p136
      %s262 = smul.u32 8, %s24
      %p263 = scmp.lt.s32.totalorder %s22, 1
      %s264 = scalar_select %p263, %s22, 1
      %p265 = scmp.lt.s32.totalorder %s262, 7
      %s266 = scalar_select %p265, %s262, 7
      %p267 = scmp.lt.s32.totalorder %s23, 0
      %s268 = scalar_select %p267, %s23, 0
      %s269 = sadd.s32 %s268, %s266
      %s270 = smul.addr %s264, 8
      %s271 = sadd.s32 %s269, %s270
      %s272 = smul.addr %s271, 4
      %s273 = scalar_lea.vmem %s3, %s272
      %p274 = pneg %p167
      %p275 = pneg %p164
      %p276 = scmp.lt.s32.totalorder %s22, 1
      %s277 = scalar_select %p276, %s22, 1
      %p278 = scmp.lt.s32.totalorder %s23, 0
      %s279 = scalar_select %p278, %s23, 0
      %s280 = sadd.s32 %s279, %s277
      %s281 = scalar_lea.vmem %s4, %s280
      %p282 = pneg %p195
      %p283 = pneg %p192
      %p284 = scmp.lt.s32.totalorder %s22, 1
      %s285 = scalar_select %p284, %s22, 1
      %p286 = scmp.lt.s32.totalorder %s23, 0
      %s287 = scalar_select %p286, %s23, 0
      %s288 = sadd.s32 %s287, %s285
      %s289 = scalar_lea.vmem %s5, %s288
      %p290 = scmp.lt.s32.totalorder %s22, 1
      %s291 = scalar_select %p290, %s22, 1
      %s292 = smul.addr %s291, 9
      %s293 = smul.addr %s292, 4
      %s294 = scalar_lea.vmem %s0, %s293
      %p295 = scmp.lt.s32.totalorder %s23, 0
      %s296 = scalar_select %p295, %s23, 0
      %s297 = smul.addr %s296, 4
      %s298 = scalar_lea.vmem %s1, %s297
      %p299 = scmp.lt.s32.totalorder %s23, 0
      %s300 = scalar_select %p299, %s23, 0
      %s301 = scalar_lea.vmem %s2, %s300
      %s302 = smul.u32 8, %s24
      %p303 = scmp.lt.s32.totalorder %s22, 1
      %s304 = scalar_select %p303, %s22, 1
      %p305 = scmp.lt.s32.totalorder %s302, 7
      %s306 = scalar_select %p305, %s302, 7
      %p307 = scmp.lt.s32.totalorder %s23, 0
      %s308 = scalar_select %p307, %s23, 0
      %s309 = sadd.s32 %s308, %s306
      %s310 = smul.addr %s304, 8
      %s311 = sadd.s32 %s309, %s310
      %s312 = smul.addr %s311, 4
      %s313 = scalar_lea.vmem %s3, %s312
      %s314 = smul.u32 8, %s24
      %p315 = scmp.lt.s32.totalorder %s22, 1
      %s316 = scalar_select %p315, %s22, 1
      %p317 = scmp.lt.s32.totalorder %s23, 0
      %s318 = scalar_select %p317, %s23, 0
      %s319 = sadd.s32 %s318, %s316
      %s320 = scalar_lea.vmem %s4, %s319
      %p321 = scmp.lt.s32.totalorder %s22, 1
      %s322 = scalar_select %p321, %s22, 1
      %p323 = scmp.lt.s32.totalorder %s23, 0
      %s324 = scalar_select %p323, %s23, 0
      %s325 = sadd.s32 %s324, %s322
      %s326 = scalar_lea.vmem %s5, %s325
      %v328 = vld [vmem:[%s294] sm:$0xf]
      %v329 = vld [vmem:[%s294 + $0x4] sm:$0xf]
      %v330 = vld [vmem:[%s294 + $0x8] sm:$0xf]
      %v331 = vld [vmem:[%s294 + $0xc] sm:$0xf]
      %v332 = vld [vmem:[%s294 + $0x10] sm:$0xf]
      %v333 = vld [vmem:[%s294 + $0x14] sm:$0xf]
      %v334 = vld [vmem:[%s294 + $0x18] sm:$0xf]
      %v335 = vld [vmem:[%s294 + $0x1c] sm:$0xf]
      %v336 = vld [vmem:[%s298] sm:$0xf]
      %v337 = vld [vmem:[%s298 + $0x4] sm:$0xf]
      %v338 = vld [vmem:[%s298 + $0x8] sm:$0xf]
      %v339 = vld [vmem:[%s298 + $0xc] sm:$0xf]
      %v340 = vld [vmem:[%s298 + $0x10] sm:$0xf]
      %v341 = vld [vmem:[%s298 + $0x14] sm:$0xf]
      %v342 = vld [vmem:[%s298 + $0x18] sm:$0xf]
      %v343 = vld [vmem:[%s298 + $0x1c] sm:$0xf]
      %v344 = vld [vmem:[%s298 + $0x20] sm:$0xf]
      %v345 = vld [vmem:[%s298 + $0x24] sm:$0xf]
      %v346 = vld [vmem:[%s298 + $0x28] sm:$0xf]
      %v347 = vld [vmem:[%s298 + $0x2c] sm:$0xf]
      %v348 = vld [vmem:[%s298 + $0x30] sm:$0xf]
      %v349 = vld [vmem:[%s298 + $0x34] sm:$0xf]
      %v350 = vld [vmem:[%s298 + $0x38] sm:$0xf]
      %v351 = vld [vmem:[%s298 + $0x3c] sm:$0xf]
      %v352 = vld [vmem:[%s294 + $0x4] sm:$0xf]
      %v353 = vld [vmem:[%s294 + $0x8] sm:$0xf]
      %v354 = vld [vmem:[%s294 + $0xc] sm:$0xf]
      %v355 = vld [vmem:[%s294 + $0x10] sm:$0xf]
      %v356 = vld [vmem:[%s294 + $0x14] sm:$0xf]
      %v357 = vld [vmem:[%s294 + $0x18] sm:$0xf]
      %v358 = vld [vmem:[%s294 + $0x1c] sm:$0xf]
      %v359 = vld [vmem:[%s294 + $0x20] sm:$0xf]
      %s360 = scalar_lea.vmem %s298, 64
      %v361 = vld [vmem:[%s360] sm:$0xf]
      %v362 = vld [vmem:[%s360 + $0x4] sm:$0xf]
      %v363 = vld [vmem:[%s360 + $0x8] sm:$0xf]
      %v364 = vld [vmem:[%s360 + $0xc] sm:$0xf]
      %v365 = vld [vmem:[%s360 + $0x10] sm:$0xf]
      %v366 = vld [vmem:[%s360 + $0x14] sm:$0xf]
      %v367 = vld [vmem:[%s360 + $0x18] sm:$0xf]
      %v368 = vld [vmem:[%s360 + $0x1c] sm:$0xf]
      %v369 = vld [vmem:[%s360 + $0x20] sm:$0xf]
      %v370 = vld [vmem:[%s360 + $0x24] sm:$0xf]
      %v371 = vld [vmem:[%s360 + $0x28] sm:$0xf]
      %v372 = vld [vmem:[%s360 + $0x2c] sm:$0xf]
      %v373 = vld [vmem:[%s360 + $0x30] sm:$0xf]
      %v374 = vld [vmem:[%s360 + $0x34] sm:$0xf]
      %v375 = vld [vmem:[%s360 + $0x38] sm:$0xf]
      %v376 = vld [vmem:[%s360 + $0x3c] sm:$0xf]
      %v385 = vunpack.c.l.b16 %v352
      %v386 = vunpack.c.l.b16 %v353
      %v387 = vunpack.c.l.b16 %v354
      %v388 = vunpack.c.l.b16 %v355
      %v389 = vunpack.c.l.b16 %v356
      %v390 = vunpack.c.l.b16 %v357
      %v391 = vunpack.c.l.b16 %v358
      %v392 = vunpack.c.l.b16 %v359
      %v393 = vpack.c.b16 %v386, %v385
      %v394 = vpack.c.b16 %v388, %v387
      %v395 = vpack.c.b16 %v390, %v389
      %v396 = vpack.c.b16 %v392, %v391
      %v417 = vunpack.c.l.b16 %v361
      %v418 = vunpack.c.l.b16 %v362
      %v419 = vunpack.c.l.b16 %v363
      %v420 = vunpack.c.l.b16 %v364
      %v421 = vunpack.c.l.b16 %v365
      %v422 = vunpack.c.l.b16 %v366
      %v423 = vunpack.c.l.b16 %v367
      %v424 = vunpack.c.l.b16 %v368
      %v425 = vunpack.c.l.b16 %v369
      %v426 = vunpack.c.l.b16 %v370
      %v427 = vunpack.c.l.b16 %v371
      %v428 = vunpack.c.l.b16 %v372
      %v429 = vunpack.c.l.b16 %v373
      %v430 = vunpack.c.l.b16 %v374
      %v431 = vunpack.c.l.b16 %v375
      %v432 = vunpack.c.l.b16 %v376
      %v433 = vpack.c.b16 %v418, %v417
      %v434 = vpack.c.b16 %v420, %v419
      %v435 = vpack.c.b16 %v422, %v421
      %v436 = vpack.c.b16 %v424, %v423
      %v437 = vpack.c.b16 %v426, %v425
      %v438 = vpack.c.b16 %v428, %v427
      %v439 = vpack.c.b16 %v430, %v429
      %v440 = vpack.c.b16 %v432, %v431
      %449 = vmatprep.subr.bf16.mxu0 0
      %450 = vmatpush1.bf16.msra.mxu0 %v433
      %451 = vmatprep.subr.bf16.mxu0 0
      %452 = vmatpush1.bf16.msra.mxu0 %v434
      %453 = vmatprep.subr.bf16.mxu0 0
      %454 = vmatpush1.bf16.msra.mxu0 %v435
      %455 = vmatprep.subr.bf16.mxu0 0
      %456 = vmatpush1.bf16.msra.mxu0 %v436
      %457 = vmatprep.subr.bf16.mxu0 0
      %458 = vmatpush1.bf16.msra.mxu0 %v437
      %459 = vmatprep.subr.bf16.mxu0 0
      %460 = vmatpush1.bf16.msra.mxu0 %v438
      %461 = vmatprep.subr.bf16.mxu0 0
      %462 = vmatpush1.bf16.msra.mxu0 %v439
      %463 = vmatprep.subr.bf16.mxu0 0
      %464 = vmatpush1.bf16.msra.mxu0 %v440
      %465 = vmatprep.subr.bf16.mxu0 0
      %466 = vmatpush1.bf16.msra.mxu0 0
      %467 = vmatprep.subr.bf16.mxu0 0
      %468 = vmatpush1.bf16.msra.mxu0 0
      %469 = vmatprep.subr.bf16.mxu0 0
      %470 = vmatpush1.bf16.msra.mxu0 0
      %471 = vmatprep.subr.bf16.mxu0 0
      %472 = vmatpush1.bf16.msra.mxu0 0
      %473 = vmatprep.subr.bf16.mxu0 0
      %474 = vmatpush1.bf16.msra.mxu0 0
      %475 = vmatprep.subr.bf16.mxu0 0
      %476 = vmatpush1.bf16.msra.mxu0 0
      %477 = vmatprep.subr.bf16.mxu0 0
      %478 = vmatpush1.bf16.msra.mxu0 0
      %479 = vmatprep.subr.bf16.mxu0 0
      %480 = vmatpush1.bf16.msra.mxu0 0
      %481 = vmatprep.mubr.bf16.mxu0 0
      %482 = vmatmul.mubr.bf16.gmra.mrb[0].mxu0 %v393
      %v483 = vpop.f32.mrb[0].mxu0
      %v484 = vadd.f32 0.0, %v483
      %v485 = vpop.f32.mrb[0].mxu0
      %v486 = vpop.f32.mrb[0].mxu0
      %v487 = vadd.f32 0.0, %v486
      %v488 = vpop.f32.mrb[0].mxu0
      %489 = vmatprep.mubr.bf16.mxu0 0
      %490 = vmatmul.mubr.bf16.gmra.mrb[0].mxu0 %v394
      %v491 = vpop.f32.mrb[0].mxu0
      %v492 = vadd.f32 0.0, %v491
      %v493 = vpop.f32.mrb[0].mxu0
      %v494 = vpop.f32.mrb[0].mxu0
      %v495 = vadd.f32 0.0, %v494
      %v496 = vpop.f32.mrb[0].mxu0
      %497 = vmatprep.mubr.bf16.mxu0 0
      %498 = vmatmul.mubr.bf16.gmra.mrb[0].mxu0 %v395
      %v499 = vpop.f32.mrb[0].mxu0
      %v500 = vadd.f32 0.0, %v499
      %v501 = vpop.f32.mrb[0].mxu0
      %v502 = vpop.f32.mrb[0].mxu0
      %v503 = vadd.f32 0.0, %v502
      %v504 = vpop.f32.mrb[0].mxu0
      %505 = vmatprep.mubr.bf16.mxu0 0
      %506 = vmatmul.mubr.bf16.gmra.mrb[0].mxu0 %v396
      %v507 = vpop.f32.mrb[0].mxu0
      %v508 = vadd.f32 0.0, %v507
      %v509 = vpop.f32.mrb[0].mxu0
      %v510 = vpop.f32.mrb[0].mxu0
      %v511 = vadd.f32 0.0, %v510
      %v512 = vpop.f32.mrb[0].mxu0
      %513 = vdwg.mxu0
      %v522 = vunpack.c.l.b16 %v328
      %v523 = vunpack.c.l.b16 %v329
      %v524 = vunpack.c.l.b16 %v330
      %v525 = vunpack.c.l.b16 %v331
      %v526 = vunpack.c.l.b16 %v332
      %v527 = vunpack.c.l.b16 %v333
      %v528 = vunpack.c.l.b16 %v334
      %v529 = vunpack.c.l.b16 %v335
      %v530 = vpack.c.b16 %v523, %v522
      %v531 = vpack.c.b16 %v525, %v524
      %v532 = vpack.c.b16 %v527, %v526
      %v533 = vpack.c.b16 %v529, %v528
      %v554 = vunpack.c.l.b16 %v336
      %v555 = vunpack.c.l.b16 %v337
      %v556 = vunpack.c.l.b16 %v338
      %v557 = vunpack.c.l.b16 %v339
      %v558 = vunpack.c.l.b16 %v340
      %v559 = vunpack.c.l.b16 %v341
      %v560 = vunpack.c.l.b16 %v342
      %v561 = vunpack.c.l.b16 %v343
      %v562 = vunpack.c.l.b16 %v344
      %v563 = vunpack.c.l.b16 %v345
      %v564 = vunpack.c.l.b16 %v346
      %v565 = vunpack.c.l.b16 %v347
      %v566 = vunpack.c.l.b16 %v348
      %v567 = vunpack.c.l.b16 %v349
      %v568 = vunpack.c.l.b16 %v350
      %v569 = vunpack.c.l.b16 %v351
      %v570 = vpack.c.b16 %v555, %v554
      %v571 = vpack.c.b16 %v557, %v556
      %v572 = vpack.c.b16 %v559, %v558
      %v573 = vpack.c.b16 %v561, %v560
      %v574 = vpack.c.b16 %v563, %v562
      %v575 = vpack.c.b16 %v565, %v564
      %v576 = vpack.c.b16 %v567, %v566
      %v577 = vpack.c.b16 %v569, %v568
      %586 = vmatprep.subr.bf16.mxu0 0
      %587 = vmatpush1.bf16.msra.mxu0 %v570
      %588 = vmatprep.subr.bf16.mxu0 0
      %589 = vmatpush1.bf16.msra.mxu0 %v571
      %590 = vmatprep.subr.bf16.mxu0 0
      %591 = vmatpush1.bf16.msra.mxu0 %v572
      %592 = vmatprep.subr.bf16.mxu0 0
      %593 = vmatpush1.bf16.msra.mxu0 %v573
      %594 = vmatprep.subr.bf16.mxu0 0
      %595 = vmatpush1.bf16.msra.mxu0 %v574
      %596 = vmatprep.subr.bf16.mxu0 0
      %597 = vmatpush1.bf16.msra.mxu0 %v575
      %598 = vmatprep.subr.bf16.mxu0 0
      %599 = vmatpush1.bf16.msra.mxu0 %v576
      %600 = vmatprep.subr.bf16.mxu0 0
      %601 = vmatpush1.bf16.msra.mxu0 %v577
      %602 = vmatprep.subr.bf16.mxu0 0
      %603 = vmatpush1.bf16.msra.mxu0 0
      %604 = vmatprep.subr.bf16.mxu0 0
      %605 = vmatpush1.bf16.msra.mxu0 0
      %606 = vmatprep.subr.bf16.mxu0 0
      %607 = vmatpush1.bf16.msra.mxu0 0
      %608 = vmatprep.subr.bf16.mxu0 0
      %609 = vmatpush1.bf16.msra.mxu0 0
      %610 = vmatprep.subr.bf16.mxu0 0
      %611 = vmatpush1.bf16.msra.mxu0 0
      %612 = vmatprep.subr.bf16.mxu0 0
      %613 = vmatpush1.bf16.msra.mxu0 0
      %614 = vmatprep.subr.bf16.mxu0 0
      %615 = vmatpush1.bf16.msra.mxu0 0
      %616 = vmatprep.subr.bf16.mxu0 0
      %617 = vmatpush1.bf16.msra.mxu0 0
      %618 = vmatprep.mubr.bf16.mxu0 0
      %619 = vmatmul.mubr.bf16.gmra.mrb[0].mxu0 %v530
      %v620 = vpop.f32.mrb[0].mxu0
      %v621 = vadd.f32 %v484, %v620
      %v622 = vpop.f32.mrb[0].mxu0
      %v623 = vpop.f32.mrb[0].mxu0
      %v624 = vadd.f32 %v487, %v623
      %v625 = vpop.f32.mrb[0].mxu0
      %626 = vmatprep.mubr.bf16.mxu0 0
      %627 = vmatmul.mubr.bf16.gmra.mrb[0].mxu0 %v531
      %v628 = vpop.f32.mrb[0].mxu0
      %v629 = vadd.f32 %v492, %v628
      %v630 = vpop.f32.mrb[0].mxu0
      %v631 = vpop.f32.mrb[0].mxu0
      %v632 = vadd.f32 %v495, %v631
      %v633 = vpop.f32.mrb[0].mxu0
      %634 = vmatprep.mubr.bf16.mxu0 0
      %635 = vmatmul.mubr.bf16.gmra.mrb[0].mxu0 %v532
      %v636 = vpop.f32.mrb[0].mxu0
      %v637 = vadd.f32 %v500, %v636
      %v638 = vpop.f32.mrb[0].mxu0
      %v639 = vpop.f32.mrb[0].mxu0
      %v640 = vadd.f32 %v503, %v639
      %v641 = vpop.f32.mrb[0].mxu0
      %642 = vmatprep.mubr.bf16.mxu0 0
      %643 = vmatmul.mubr.bf16.gmra.mrb[0].mxu0 %v533
      %v644 = vpop.f32.mrb[0].mxu0
      %v645 = vadd.f32 %v508, %v644
      %v646 = vpop.f32.mrb[0].mxu0
      %v647 = vpop.f32.mrb[0].mxu0
      %v648 = vadd.f32 %v511, %v647
      %v649 = vpop.f32.mrb[0].mxu0
      %650 = vdwg.mxu0
      %v651 = vld [vmem:[%s301] sm:$0x1]
      %v653 = vlaneseq
      %v654 = vshrl.u32 %v653, 7
      %v655 = vsub.s32 0, %v654
      %v656 = vrot.slane %v651, %v655
      %v658 = vadd.f32 %v621, %v656
      %v659 = vadd.f32 %v624, %v656
      %v660 = vadd.f32 %v629, %v656
      %v661 = vadd.f32 %v632, %v656
      %v662 = vadd.f32 %v637, %v656
      %v663 = vadd.f32 %v640, %v656
      %v664 = vadd.f32 %v645, %v656
      %v665 = vadd.f32 %v648, %v656
      %p666 = scmp.eq.s32.totalorder %s24, 0
      // Predicated region
      $region33: #{_lambda_.7} parent=31 // pred_check
        %p667 = pneg %p666
      $region34: #{_lambda_.7} parent=31 // pred_check_branch
        %669 = sbr.rel (%p667) target = $region36
      $region35: #{_lambda_.7} parent=31 // pred_region
        %670 = vst [vmem:[%s320] sm:$0x1] 0.0
        %671 = vst [vmem:[%s326] sm:$0x1] 0.0
      $region36: #{_lambda_.7} parent=31 // pred_fallthru
        _
      %v672 = vld [vmem:[%s320] sm:$0x1]
      %v673 = vadd.f32 %v658, %v659
      %v674 = vadd.f32 %v673, %v660
      %v675 = vadd.f32 %v674, %v661
      %v676 = vadd.f32 %v675, %v662
      %v677 = vadd.f32 %v676, %v663
      %v678 = vadd.f32 %v677, %v664
      %v679 = vadd.f32 %v678, %v665
      %v680 = vrot.slane %v679, 4
      %v681 = vadd.f32 %v679, %v680
      %v682 = vrot.slane %v681, 2
      %v683 = vadd.f32 %v681, %v682
      %v684 = vrot.slane %v683, 1
      %v685 = vadd.f32 %v683, %v684
      %v686 = vadd.f32 %v672, %v685
      %687 = vst [vmem:[%s320] sm:$0x1] %v686
      %v688 = vld [vmem:[%s326] sm:$0x1]
      %v689 = vmul.f32 %v658, %v658
      %v690 = vmul.f32 %v659, %v659
      %v691 = vmul.f32 %v660, %v660
      %v692 = vmul.f32 %v661, %v661
      %v693 = vmul.f32 %v662, %v662
      %v694 = vmul.f32 %v663, %v663
      %v695 = vmul.f32 %v664, %v664
      %v696 = vmul.f32 %v665, %v665
      %v697 = vadd.f32 %v689, %v690
      %v698 = vadd.f32 %v697, %v691
      %v699 = vadd.f32 %v698, %v692
      %v700 = vadd.f32 %v699, %v693
      %v701 = vadd.f32 %v700, %v694
      %v702 = vadd.f32 %v701, %v695
      %v703 = vadd.f32 %v702, %v696
      %v704 = vrot.slane %v703, 4
      %v705 = vadd.f32 %v703, %v704
      %v706 = vrot.slane %v705, 2
      %v707 = vadd.f32 %v705, %v706
      %v708 = vrot.slane %v707, 1
      %v709 = vadd.f32 %v707, %v708
      %v710 = vadd.f32 %v688, %v709
      %711 = vst [vmem:[%s326] sm:$0x1] %v710
      %v712 = vpack.c.bf16 %v659, %v658
      %v713 = vpack.c.bf16 %v661, %v660
      %v714 = vpack.c.bf16 %v663, %v662
      %v715 = vpack.c.bf16 %v665, %v664
      %v720 = vunpack.c.l.b16 %v712
      %v721 = vunpack.c.h.b16 %v712
      %v722 = vunpack.c.l.b16 %v713
      %v723 = vunpack.c.h.b16 %v713
      %v724 = vunpack.c.l.b16 %v714
      %v725 = vunpack.c.h.b16 %v714
      %v726 = vunpack.c.l.b16 %v715
      %v727 = vunpack.c.h.b16 %v715
      %v728 = vpack.c.b16 %v720, %v720
      %v729 = vpack.c.b16 %v721, %v721
      %v730 = vpack.c.b16 %v722, %v722
      %v731 = vpack.c.b16 %v723, %v723
      %v732 = vpack.c.b16 %v724, %v724
      %v733 = vpack.c.b16 %v725, %v725
      %v734 = vpack.c.b16 %v726, %v726
      %v735 = vpack.c.b16 %v727, %v727
      %744 = vst [vmem:[%s313] sm:$0xf] %v728
      %745 = vst [vmem:[%s313 + $0x4] sm:$0xf] %v729
      %746 = vst [vmem:[%s313 + $0x8] sm:$0xf] %v730
      %747 = vst [vmem:[%s313 + $0xc] sm:$0xf] %v731
      %748 = vst [vmem:[%s313 + $0x10] sm:$0xf] %v732
      %749 = vst [vmem:[%s313 + $0x14] sm:$0xf] %v733
      %750 = vst [vmem:[%s313 + $0x18] sm:$0xf] %v734
      %751 = vst [vmem:[%s313 + $0x1c] sm:$0xf] %v735
      %s752 = smul.u32 8, %s24
      %p753 = scmp.lt.s32.totalorder %s22, 1
      %s754 = scalar_select %p753, %s22, 1
      %p755 = scmp.lt.s32.totalorder %s752, 7
      %s756 = scalar_select %p755, %s752, 7
      %p757 = scmp.lt.s32.totalorder %s23, 0
      %s758 = scalar_select %p757, %s23, 0
      %s759 = sadd.s32 %s758, %s756
      %s760 = smul.addr %s754, 8
      %s761 = sadd.s32 %s759, %s760
      %s762 = smul.addr %s761, 4
      %s763 = scalar_lea.vmem %s3, %s762
      %p764 = scmp.lt.s32.totalorder %s22, 1
      %s765 = scalar_select %p764, %s22, 1
      %p766 = scmp.lt.s32.totalorder %s23, 0
      %s767 = scalar_select %p766, %s23, 0
      %s768 = sadd.s32 %s767, %s765
      %s769 = scalar_lea.vmem %s4, %s768
      %p770 = scmp.lt.s32.totalorder %s22, 1
      %s771 = scalar_select %p770, %s22, 1
      %p772 = scmp.lt.s32.totalorder %s23, 0
      %s773 = scalar_select %p772, %s23, 0
      %s774 = sadd.s32 %s773, %s771
      %s775 = scalar_lea.vmem %s5, %s774
      // Predicated region
      $region37: #{_lambda_.7} parent=31 // pred_check
        %p776 = pneg %p136
      $region38: #{_lambda_.7} parent=31 // pred_check_branch
        %778 = sbr.rel (%p776) target = $region40
      $region39: #{_lambda_.7} parent=31 // pred_region
        %s779 = smul.u32 8, %s24
      $region40: #{_lambda_.7} parent=31 // pred_fallthru
        _
      // Predicated region
      $region41: #{_lambda_.7} parent=31 // pred_check
        %p780 = pneg %p164
      $region42: #{_lambda_.7} parent=31 // pred_check_branch
        %782 = sbr.rel (%p780) target = $region44
      $region43: #{_lambda_.7} parent=31 // pred_region
        _
      $region44: #{_lambda_.7} parent=31 // pred_fallthru
        _
      // Predicated region
      $region45: #{_lambda_.7} parent=31 // pred_check
        %p783 = pneg %p192
      $region46: #{_lambda_.7} parent=31 // pred_check_branch
        %785 = sbr.rel (%p783) target = $region48
      $region47: #{_lambda_.7} parent=31 // pred_region
        _
      $region48: #{_lambda_.7} parent=31 // pred_fallthru
        _
    $region32: #{_lambda_.7} parent=5 // pred_fallthru
      _
    %p786 = scmp.le.s32.totalorder 2, %s12
    // Predicated region
    $region49: #{_lambda_.7} parent=5 // pred_check
      %p787 = pneg %p786
    $region50: #{_lambda_.7} parent=5 // pred_check_branch
      %789 = sbr.rel (%p787) target = $region52
    $region51: #{_lambda_.7} parent=5 // pred_region
      %s790 = ssub.s32 %s12, 2
      // Predicated region
      $region53: #{_lambda_.7} parent=51 // pred_check
        %p791 = pneg %p142
      $region54: #{_lambda_.7} parent=51 // pred_check_branch
        %793 = sbr.rel (%p791) target = $region56
      $region55: #{_lambda_.7} parent=51 // pred_region
        %s794 = smul.u32 8, %s27
        %p795 = scmp.lt.s32.totalorder %s25, 1
        %s796 = scalar_select %p795, %s25, 1
        %p797 = scmp.lt.s32.totalorder %s794, 7
        %s798 = scalar_select %p797, %s794, 7
        %p799 = scmp.lt.s32.totalorder %s26, 0
        %s800 = scalar_select %p799, %s26, 0
        %s801 = sadd.s32 %s800, %s798
        %s802 = smul.addr %s796, 8
        %s803 = sadd.s32 %s801, %s802
        %s804 = smul.addr %s803, 4
        %s805 = scalar_lea.vmem %s3, %s804
      $region56: #{_lambda_.7} parent=51 // pred_fallthru
        _
      // Predicated region
      $region57: #{_lambda_.7} parent=51 // pred_check
        %p806 = pneg %p170
      $region58: #{_lambda_.7} parent=51 // pred_check_branch
        %808 = sbr.rel (%p806) target = $region60
      $region59: #{_lambda_.7} parent=51 // pred_region
        %p809 = scmp.lt.s32.totalorder %s25, 1
        %s810 = scalar_select %p809, %s25, 1
        %p811 = scmp.lt.s32.totalorder %s26, 0
        %s812 = scalar_select %p811, %s26, 0
        %s813 = sadd.s32 %s812, %s810
        %s814 = scalar_lea.vmem %s4, %s813
      $region60: #{_lambda_.7} parent=51 // pred_fallthru
        _
      // Predicated region
      $region61: #{_lambda_.7} parent=51 // pred_check
        %p815 = pneg %p198
      $region62: #{_lambda_.7} parent=51 // pred_check_branch
        %817 = sbr.rel (%p815) target = $region64
      $region63: #{_lambda_.7} parent=51 // pred_region
        %p818 = scmp.lt.s32.totalorder %s25, 1
        %s819 = scalar_select %p818, %s25, 1
        %p820 = scmp.lt.s32.totalorder %s26, 0
        %s821 = scalar_select %p820, %s26, 0
        %s822 = sadd.s32 %s821, %s819
        %s823 = scalar_lea.vmem %s5, %s822
      $region64: #{_lambda_.7} parent=51 // pred_fallthru
        _
    $region52: #{_lambda_.7} parent=5 // pred_fallthru
      _
  $region6: #{_lambda_.7} parent=0 // loop_footer
    %s16 = sadd.s32 1, %s12
  $region7: #{_lambda_.7} parent=0 // loop_footer_branch
    %11 = sbr.rel target = $region3
  $region8: #{_lambda_.7} parent=0 // loop_exit
    _

// kernel: _lambda_.8
$region0: #{_lambda_.8}
  #allocation0 [shape = 'u32[]', space=smem, size = 0x4, offset = 0x4, fixed_abs, tag = 'smem constant byte address 0x4 - core index']
  #allocation1 [shape = 'u32[144,128]{1,0:T(1,128)}', space=vmem, size = 0x12000, scoped, tag = 'internal scratch']
  %s0 = inlined_call_operand.vmem [shape: bf16[2,20,256], index: 0, kind: input, shape index: {}]
  %s1 = inlined_call_operand.vmem [shape: bf16[2,256,128], index: 1, kind: input, shape index: {}]
  %s2 = inlined_call_operand.vmem [shape: f32[1,128], index: 2, kind: input, shape index: {}]
  %s3 = inlined_call_operand.vmem [shape: bf16[2,16,128], index: 3, kind: output, shape index: {0}]
  %s4 = inlined_call_operand.vmem [shape: f32[2,1,128], index: 4, kind: output, shape index: {1}]
  %s5 = inlined_call_operand.vmem [shape: f32[2,1,128], index: 5, kind: output, shape index: {2}]
  %6 = xla_tuple %s3, %s4, %s5
  %s7 = sld [smem:[#allocation0]]
  $region65: #{_lambda_.8} parent=0
    _
  %s9 = ssub.s32 1, %s7
  %s10 = scalar_select 0, %s9, %s7
  loop: start=0, step=1, limit=4
  $region2: #{_lambda_.8} parent=0 // loop_pre_header
    _
  $region3: #{_lambda_.8} parent=0 // loop_header
    %s12 = sphi 0, %s16
    %p13 = scmp.ge.s32.totalorder %s12, 4
    %s19 = sphi 0, %s38
    %s20 = sphi 0, %s34
    %s21 = sphi 0, %s30
    %s22 = sphi 0, %s19
    %s23 = sphi 0, %s20
    %s24 = sphi 0, %s21
    %s25 = sphi 0, %s22
    %s26 = sphi 0, %s23
    %s27 = sphi 0, %s24
    %s41 = sphi 0, %s43
    %s44 = sphi 0, %s41
    %s45 = sphi 0, %s44
    %s61 = sphi 0, %s45
    %s67 = sphi 0, %s69
    %s70 = sphi 0, %s67
    %s71 = sphi 0, %s70
    %s87 = sphi 0, %s71
    %s93 = sphi 0, %s95
    %s96 = sphi 0, %s93
    %s97 = sphi 0, %s96
    %s113 = sphi 0, %s97
    %s123 = sphi 0, %s125
    %s126 = sphi 0, %s123
    %s127 = sphi 0, %s126
    %s143 = sphi 0, %s127
    %s151 = sphi 0, %s153
    %s154 = sphi 0, %s151
    %s155 = sphi 0, %s154
    %s171 = sphi 0, %s155
    %s179 = sphi 0, %s181
    %s182 = sphi 0, %s179
    %s183 = sphi 0, %s182
    %s199 = sphi 0, %s183
  $region4: #{_lambda_.8} parent=0 // loop_header_branch
    %15 = sbr.rel (%p13) target = $region8
  $region5: #{_lambda_.8} parent=0 // loop_body
    %s17 = ssub.s32 %s12, 1
    %s18 = ssub.s32 %s12, 2
    %s28 = sadd.s32 1, %s21
    %p29 = scmp.ge.s32.totalorder %s28, 1
    %s30 = scalar_select %p29, 0, %s28
    %s31 = sadd.s32 1, %s20
    %s32 = scalar_select %p29, %s31, %s20
    %p33 = scmp.ge.s32.totalorder %s32, 1
    %s34 = scalar_select %p33, 0, %s32
    %s35 = sadd.s32 1, %s19
    %s36 = scalar_select %p33, %s35, %s19
    %p37 = scmp.ge.s32.totalorder %s36, 2
    %s38 = scalar_select %p37, 0, %s36
    %s39 = ssub.s32 %s19, %s38
    %p40 = scmp.eq.s32.totalorder %s39, 0
    %s42 = sadd.s32 %s41, 1
    %s43 = scalar_select %p40, %s41, %s42
    %p46 = pneg %p40
    %p47 = scmp.eq.s32.totalorder %s12, 1
    %p48 = por %p46, %p47
    %p49 = scmp.ne.s32.totalorder %s41, %s44
    %p50 = scmp.eq.s32.totalorder %s12, 0
    %p51 = por %p49, %p50
    %p52 = scmp.ne.s32.totalorder %s41, %s44
    %p53 = scmp.eq.s32.totalorder %s17, 1
    %p54 = por %p52, %p53
    %p55 = scmp.ne.s32.totalorder %s44, %s45
    %p56 = scmp.eq.s32.totalorder %s17, 0
    %p57 = por %p55, %p56
    %p58 = scmp.ne.s32.totalorder %s44, %s45
    %p59 = scmp.eq.s32.totalorder %s18, 1
    %p60 = por %p58, %p59
    %p62 = scmp.ne.s32.totalorder %s45, %s61
    %p63 = scmp.eq.s32.totalorder %s18, 0
    %p64 = por %p62, %p63
    %s65 = ssub.s32 %s20, %s34
    %p66 = scmp.eq.s32.totalorder %s65, 0
    %s68 = sadd.s32 %s67, 1
    %s69 = scalar_select %p66, %s67, %s68
    %p72 = pneg %p66
    %p73 = scmp.eq.s32.totalorder %s12, 1
    %p74 = por %p72, %p73
    %p75 = scmp.ne.s32.totalorder %s67, %s70
    %p76 = scmp.eq.s32.totalorder %s12, 0
    %p77 = por %p75, %p76
    %p78 = scmp.ne.s32.totalorder %s67, %s70
    %p79 = scmp.eq.s32.totalorder %s17, 1
    %p80 = por %p78, %p79
    %p81 = scmp.ne.s32.totalorder %s70, %s71
    %p82 = scmp.eq.s32.totalorder %s17, 0
    %p83 = por %p81, %p82
    %p84 = scmp.ne.s32.totalorder %s70, %s71
    %p85 = scmp.eq.s32.totalorder %s18, 1
    %p86 = por %p84, %p85
    %p88 = scmp.ne.s32.totalorder %s71, %s87
    %p89 = scmp.eq.s32.totalorder %s18, 0
    %p90 = por %p88, %p89
    %s91 = ssub.s32 %s20, %s34
    %p92 = scmp.eq.s32.totalorder %s91, 0
    %s94 = sadd.s32 %s93, 1
    %s95 = scalar_select %p92, %s93, %s94
    %p98 = pneg %p92
    %p99 = scmp.eq.s32.totalorder %s12, 1
    %p100 = por %p98, %p99
    %p101 = scmp.ne.s32.totalorder %s93, %s96
    %p102 = scmp.eq.s32.totalorder %s12, 0
    %p103 = por %p101, %p102
    %p104 = scmp.ne.s32.totalorder %s93, %s96
    %p105 = scmp.eq.s32.totalorder %s17, 1
    %p106 = por %p104, %p105
    %p107 = scmp.ne.s32.totalorder %s96, %s97
    %p108 = scmp.eq.s32.totalorder %s17, 0
    %p109 = por %p107, %p108
    %p110 = scmp.ne.s32.totalorder %s96, %s97
    %p111 = scmp.eq.s32.totalorder %s18, 1
    %p112 = por %p110, %p111
    %p114 = scmp.ne.s32.totalorder %s97, %s113
    %p115 = scmp.eq.s32.totalorder %s18, 0
    %p116 = por %p114, %p115
    %s117 = ssub.s32 %s19, %s38
    %s118 = ssub.s32 %s21, %s30
    %s119 = sor.u32 %s117, %s118
    %s120 = ssub.s32 %s20, %s34
    %s121 = sor.u32 %s119, %s120
    %p122 = scmp.eq.s32.totalorder %s121, 0
    %s124 = sadd.s32 %s123, 1
    %s125 = scalar_select %p122, %s123, %s124
    %p128 = pneg %p122
    %p129 = scmp.eq.s32.totalorder %s12, 1
    %p130 = por %p128, %p129
    %p131 = scmp.ne.s32.totalorder %s123, %s126
    %p132 = scmp.eq.s32.totalorder %s12, 0
    %p133 = por %p131, %p132
    %p134 = scmp.ne.s32.totalorder %s123, %s126
    %p135 = scmp.eq.s32.totalorder %s17, 1
    %p136 = por %p134, %p135
    %p137 = scmp.ne.s32.totalorder %s126, %s127
    %p138 = scmp.eq.s32.totalorder %s17, 0
    %p139 = por %p137, %p138
    %p140 = scmp.ne.s32.totalorder %s126, %s127
    %p141 = scmp.eq.s32.totalorder %s18, 1
    %p142 = por %p140, %p141
    %p144 = scmp.ne.s32.totalorder %s127, %s143
    %p145 = scmp.eq.s32.totalorder %s18, 0
    %p146 = por %p144, %p145
    %s147 = ssub.s32 %s19, %s38
    %s148 = ssub.s32 %s20, %s34
    %s149 = sor.u32 %s147, %s148
    %p150 = scmp.eq.s32.totalorder %s149, 0
    %s152 = sadd.s32 %s151, 1
    %s153 = scalar_select %p150, %s151, %s152
    %p156 = pneg %p150
    %p157 = scmp.eq.s32.totalorder %s12, 1
    %p158 = por %p156, %p157
    %p159 = scmp.ne.s32.totalorder %s151, %s154
    %p160 = scmp.eq.s32.totalorder %s12, 0
    %p161 = por %p159, %p160
    %p162 = scmp.ne.s32.totalorder %s151, %s154
    %p163 = scmp.eq.s32.totalorder %s17, 1
    %p164 = por %p162, %p163
    %p165 = scmp.ne.s32.totalorder %s154, %s155
    %p166 = scmp.eq.s32.totalorder %s17, 0
    %p167 = por %p165, %p166
    %p168 = scmp.ne.s32.totalorder %s154, %s155
    %p169 = scmp.eq.s32.totalorder %s18, 1
    %p170 = por %p168, %p169
    %p172 = scmp.ne.s32.totalorder %s155, %s171
    %p173 = scmp.eq.s32.totalorder %s18, 0
    %p174 = por %p172, %p173
    %s175 = ssub.s32 %s19, %s38
    %s176 = ssub.s32 %s20, %s34
    %s177 = sor.u32 %s175, %s176
    %p178 = scmp.eq.s32.totalorder %s177, 0
    %s180 = sadd.s32 %s179, 1
    %s181 = scalar_select %p178, %s179, %s180
    %p184 = pneg %p178
    %p185 = scmp.eq.s32.totalorder %s12, 1
    %p186 = por %p184, %p185
    %p187 = scmp.ne.s32.totalorder %s179, %s182
    %p188 = scmp.eq.s32.totalorder %s12, 0
    %p189 = por %p187, %p188
    %p190 = scmp.ne.s32.totalorder %s179, %s182
    %p191 = scmp.eq.s32.totalorder %s17, 1
    %p192 = por %p190, %p191
    %p193 = scmp.ne.s32.totalorder %s182, %s183
    %p194 = scmp.eq.s32.totalorder %s17, 0
    %p195 = por %p193, %p194
    %p196 = scmp.ne.s32.totalorder %s182, %s183
    %p197 = scmp.eq.s32.totalorder %s18, 1
    %p198 = por %p196, %p197
    %p200 = scmp.ne.s32.totalorder %s183, %s199
    %p201 = scmp.eq.s32.totalorder %s18, 0
    %p202 = por %p200, %p201
    %p203 = scmp.le.s32.totalorder 1, %s12
    %p204 = scmp.lt.s32.totalorder %s12, 3
    %p205 = pnand %p203, %p204
    %p206 = pneg %p205
    // Predicated region
    $region9: #{_lambda_.8} parent=5 // pred_check
      _
    $region10: #{_lambda_.8} parent=5 // pred_check_branch
      %208 = sbr.rel (%p205) target = $region12
    $region11: #{_lambda_.8} parent=5 // pred_region
      %s209 = ssub.s32 %s12, 1
      // Predicated region
      $region13: #{_lambda_.8} parent=11 // pred_check
        %p210 = pneg %p83
      $region14: #{_lambda_.8} parent=11 // pred_check_branch
        %212 = sbr.rel (%p210) target = $region16
      $region15: #{_lambda_.8} parent=11 // pred_region
        %p213 = scmp.lt.s32.totalorder %s23, 0
        %s214 = scalar_select %p213, %s23, 0
        %s215 = smul.addr %s214, 4
        %s216 = scalar_lea.vmem %s1, %s215
      $region16: #{_lambda_.8} parent=11 // pred_fallthru
        _
      // Predicated region
      $region17: #{_lambda_.8} parent=11 // pred_check
        %p217 = pneg %p109
      $region18: #{_lambda_.8} parent=11 // pred_check_branch
        %219 = sbr.rel (%p217) target = $region20
      $region19: #{_lambda_.8} parent=11 // pred_region
        %p220 = scmp.lt.s32.totalorder %s23, 0
        %s221 = scalar_select %p220, %s23, 0
        %s222 = scalar_lea.vmem %s2, %s221
      $region20: #{_lambda_.8} parent=11 // pred_fallthru
        _
    $region12: #{_lambda_.8} parent=5 // pred_fallthru
      _
    %p223 = scmp.lt.s32.totalorder %s12, 2
    // Predicated region
    $region21: #{_lambda_.8} parent=5 // pred_check
      %p224 = pneg %p223
    $region22: #{_lambda_.8} parent=5 // pred_check_branch
      %226 = sbr.rel (%p224) target = $region24
    $region23: #{_lambda_.8} parent=5 // pred_region
      // Predicated region
      $region25: #{_lambda_.8} parent=23 // pred_check
        %p227 = pneg %p51
      $region26: #{_lambda_.8} parent=23 // pred_check_branch
        %229 = sbr.rel (%p227) target = $region28
      $region27: #{_lambda_.8} parent=23 // pred_region
        %p230 = scmp.lt.s32.totalorder %s19, 1
        %s231 = scalar_select %p230, %s19, 1
        %s232 = smul.addr %s231, 6
        %s233 = smul.addr %s232, 4
        %s234 = scalar_lea.vmem %s0, %s233
      $region28: #{_lambda_.8} parent=23 // pred_fallthru
        _
    $region24: #{_lambda_.8} parent=5 // pred_fallthru
      _
    %p235 = scmp.le.s32.totalorder 1, %s12
    %p236 = scmp.lt.s32.totalorder %s12, 3
    %p237 = pnand %p235, %p236
    %p238 = pneg %p237
    // Predicated region
    $region29: #{_lambda_.8} parent=5 // pred_check
      _
    $region30: #{_lambda_.8} parent=5 // pred_check_branch
      %240 = sbr.rel (%p237) target = $region32
    $region31: #{_lambda_.8} parent=5 // pred_region
      %s241 = ssub.s32 %s12, 1
      %p242 = scmp.lt.s32.totalorder %s22, 1
      %s243 = scalar_select %p242, %s22, 1
      %s244 = smul.addr %s243, 6
      %s245 = smul.addr %s244, 4
      %s246 = scalar_lea.vmem %s0, %s245
      %p247 = pneg %p57
      %p248 = pneg %p54
      %p249 = scmp.lt.s32.totalorder %s23, 0
      %s250 = scalar_select %p249, %s23, 0
      %s251 = smul.addr %s250, 4
      %s252 = scalar_lea.vmem %s1, %s251
      %p253 = pneg %p83
      %p254 = pneg %p80
      %p255 = scmp.lt.s32.totalorder %s23, 0
      %s256 = scalar_select %p255, %s23, 0
      %s257 = scalar_lea.vmem %s2, %s256
      %p258 = pneg %p109
      %p259 = pneg %p106
      %p260 = pneg %p139
      %p261 = pneg %p136
      %s262 = smul.u32 2, %s24
      %p263 = scmp.lt.s32.totalorder %s22, 1
      %s264 = scalar_select %p263, %s22, 1
      %p265 = scmp.lt.s32.totalorder %s262, 1
      %s266 = scalar_select %p265, %s262, 1
      %p267 = scmp.lt.s32.totalorder %s23, 0
      %s268 = scalar_select %p267, %s23, 0
      %s269 = sadd.s32 %s268, %s266
      %s270 = smul.addr %s264, 2
      %s271 = sadd.s32 %s269, %s270
      %s272 = smul.addr %s271, 4
      %s273 = scalar_lea.vmem %s3, %s272
      %p274 = pneg %p167
      %p275 = pneg %p164
      %p276 = scmp.lt.s32.totalorder %s22, 1
      %s277 = scalar_select %p276, %s22, 1
      %p278 = scmp.lt.s32.totalorder %s23, 0
      %s279 = scalar_select %p278, %s23, 0
      %s280 = sadd.s32 %s279, %s277
      %s281 = scalar_lea.vmem %s4, %s280
      %p282 = pneg %p195
      %p283 = pneg %p192
      %p284 = scmp.lt.s32.totalorder %s22, 1
      %s285 = scalar_select %p284, %s22, 1
      %p286 = scmp.lt.s32.totalorder %s23, 0
      %s287 = scalar_select %p286, %s23, 0
      %s288 = sadd.s32 %s287, %s285
      %s289 = scalar_lea.vmem %s5, %s288
      %p290 = scmp.lt.s32.totalorder %s22, 1
      %s291 = scalar_select %p290, %s22, 1
      %s292 = smul.addr %s291, 6
      %s293 = smul.addr %s292, 4
      %s294 = scalar_lea.vmem %s0, %s293
      %p295 = scmp.lt.s32.totalorder %s23, 0
      %s296 = scalar_select %p295, %s23, 0
      %s297 = smul.addr %s296, 4
      %s298 = scalar_lea.vmem %s1, %s297
      %p299 = scmp.lt.s32.totalorder %s23, 0
      %s300 = scalar_select %p299, %s23, 0
      %s301 = scalar_lea.vmem %s2, %s300
      %s302 = smul.u32 2, %s24
      %p303 = scmp.lt.s32.totalorder %s22, 1
      %s304 = scalar_select %p303, %s22, 1
      %p305 = scmp.lt.s32.totalorder %s302, 1
      %s306 = scalar_select %p305, %s302, 1
      %p307 = scmp.lt.s32.totalorder %s23, 0
      %s308 = scalar_select %p307, %s23, 0
      %s309 = sadd.s32 %s308, %s306
      %s310 = smul.addr %s304, 2
      %s311 = sadd.s32 %s309, %s310
      %s312 = smul.addr %s311, 4
      %s313 = scalar_lea.vmem %s3, %s312
      %s314 = smul.u32 2, %s24
      %p315 = scmp.lt.s32.totalorder %s22, 1
      %s316 = scalar_select %p315, %s22, 1
      %p317 = scmp.lt.s32.totalorder %s23, 0
      %s318 = scalar_select %p317, %s23, 0
      %s319 = sadd.s32 %s318, %s316
      %s320 = scalar_lea.vmem %s4, %s319
      %p321 = scmp.lt.s32.totalorder %s22, 1
      %s322 = scalar_select %p321, %s22, 1
      %p323 = scmp.lt.s32.totalorder %s23, 0
      %s324 = scalar_select %p323, %s23, 0
      %s325 = sadd.s32 %s324, %s322
      %s326 = scalar_lea.vmem %s5, %s325
      %v328 = vld [vmem:[%s294] sm:$0xff]
      %v329 = vld [vmem:[%s294 + $0x8] sm:$0xff]
      %v330 = vld [vmem:[%s298] sm:$0xf]
      %v331 = vld [vmem:[%s298 + $0x4] sm:$0xf]
      %v332 = vld [vmem:[%s298 + $0x8] sm:$0xf]
      %v333 = vld [vmem:[%s298 + $0xc] sm:$0xf]
      %v334 = vld [vmem:[%s298 + $0x10] sm:$0xf]
      %v335 = vld [vmem:[%s298 + $0x14] sm:$0xf]
      %v336 = vld [vmem:[%s298 + $0x18] sm:$0xf]
      %v337 = vld [vmem:[%s298 + $0x1c] sm:$0xf]
      %v338 = vld [vmem:[%s298 + $0x20] sm:$0xf]
      %v339 = vld [vmem:[%s298 + $0x24] sm:$0xf]
      %v340 = vld [vmem:[%s298 + $0x28] sm:$0xf]
      %v341 = vld [vmem:[%s298 + $0x2c] sm:$0xf]
      %v342 = vld [vmem:[%s298 + $0x30] sm:$0xf]
      %v343 = vld [vmem:[%s298 + $0x34] sm:$0xf]
      %v344 = vld [vmem:[%s298 + $0x38] sm:$0xf]
      %v345 = vld [vmem:[%s298 + $0x3c] sm:$0xf]
      %v346 = vld [vmem:[%s298 + $0x40] sm:$0xf]
      %v347 = vld [vmem:[%s298 + $0x44] sm:$0xf]
      %v348 = vld [vmem:[%s298 + $0x48] sm:$0xf]
      %v349 = vld [vmem:[%s298 + $0x4c] sm:$0xf]
      %v350 = vld [vmem:[%s298 + $0x50] sm:$0xf]
      %v351 = vld [vmem:[%s298 + $0x54] sm:$0xf]
      %v352 = vld [vmem:[%s298 + $0x58] sm:$0xf]
      %v353 = vld [vmem:[%s298 + $0x5c] sm:$0xf]
      %v354 = vld [vmem:[%s298 + $0x60] sm:$0xf]
      %v355 = vld [vmem:[%s298 + $0x64] sm:$0xf]
      %v356 = vld [vmem:[%s298 + $0x68] sm:$0xf]
      %v357 = vld [vmem:[%s298 + $0x6c] sm:$0xf]
      %v358 = vld [vmem:[%s298 + $0x70] sm:$0xf]
      %v359 = vld [vmem:[%s298 + $0x74] sm:$0xf]
      %v360 = vld [vmem:[%s298 + $0x78] sm:$0xf]
      %v361 = vld [vmem:[%s298 + $0x7c] sm:$0xf]
      %v362 = vld [vmem:[%s294] sm:$0xcc]
      %v363 = vld [vmem:[%s294 + $0x10] sm:$0x33]
      %s364 = scalar_lea.vmem %s298, 128
      %v365 = vld [vmem:[%s364] sm:$0xf]
      %v366 = vld [vmem:[%s364 + $0x4] sm:$0xf]
      %v367 = vld [vmem:[%s364 + $0x8] sm:$0xf]
      %v368 = vld [vmem:[%s364 + $0xc] sm:$0xf]
      %v369 = vld [vmem:[%s364 + $0x10] sm:$0xf]
      %v370 = vld [vmem:[%s364 + $0x14] sm:$0xf]
      %v371 = vld [vmem:[%s364 + $0x18] sm:$0xf]
      %v372 = vld [vmem:[%s364 + $0x1c] sm:$0xf]
      %v373 = vld [vmem:[%s364 + $0x20] sm:$0xf]
      %v374 = vld [vmem:[%s364 + $0x24] sm:$0xf]
      %v375 = vld [vmem:[%s364 + $0x28] sm:$0xf]
      %v376 = vld [vmem:[%s364 + $0x2c] sm:$0xf]
      %v377 = vld [vmem:[%s364 + $0x30] sm:$0xf]
      %v378 = vld [vmem:[%s364 + $0x34] sm:$0xf]
      %v379 = vld [vmem:[%s364 + $0x38] sm:$0xf]
      %v380 = vld [vmem:[%s364 + $0x3c] sm:$0xf]
      %v381 = vld [vmem:[%s364 + $0x40] sm:$0xf]
      %v382 = vld [vmem:[%s364 + $0x44] sm:$0xf]
      %v383 = vld [vmem:[%s364 + $0x48] sm:$0xf]
      %v384 = vld [vmem:[%s364 + $0x4c] sm:$0xf]
      %v385 = vld [vmem:[%s364 + $0x50] sm:$0xf]
      %v386 = vld [vmem:[%s364 + $0x54] sm:$0xf]
      %v387 = vld [vmem:[%s364 + $0x58] sm:$0xf]
      %v388 = vld [vmem:[%s364 + $0x5c] sm:$0xf]
      %v389 = vld [vmem:[%s364 + $0x60] sm:$0xf]
      %v390 = vld [vmem:[%s364 + $0x64] sm:$0xf]
      %v391 = vld [vmem:[%s364 + $0x68] sm:$0xf]
      %v392 = vld [vmem:[%s364 + $0x6c] sm:$0xf]
      %v393 = vld [vmem:[%s364 + $0x70] sm:$0xf]
      %v394 = vld [vmem:[%s364 + $0x74] sm:$0xf]
      %v395 = vld [vmem:[%s364 + $0x78] sm:$0xf]
      %v396 = vld [vmem:[%s364 + $0x7c] sm:$0xf]
      %v400 = vunpack.c.l.b16 %v362
      %v401 = vunpack.c.h.b16 %v362
      %v402 = vunpack.c.l.b16 %v329
      %v403 = vunpack.c.h.b16 %v329
      %v404 = vunpack.c.l.b16 %v363
      %v405 = vunpack.c.h.b16 %v363
      %v406 = vpack.c.b16 %v402, %v400
      %v407 = vpack.c.b16 %v403, %v401
      %v408 = vpack.c.b16 %v404, %v404
      %v409 = vpack.c.b16 %v405, %v405
      %vm410 = vcmask 1045504
      %v411 = vrot.slane %v406, 2
      %v412 = vrot.slane %v408, 2
      %v413 = vsel %vm410, %v411, %v412
      %v414 = vrot.slane %v407, 2
      %v415 = vrot.slane %v409, 2
      %v416 = vsel %vm410, %v414, %v415
      %v451 = vunpack.c.l.b16 %v365
      %v452 = vunpack.c.l.b16 %v366
      %v453 = vunpack.c.l.b16 %v367
      %v454 = vunpack.c.l.b16 %v368
      %v455 = vunpack.c.l.b16 %v369
      %v456 = vunpack.c.l.b16 %v370
      %v457 = vunpack.c.l.b16 %v371
      %v458 = vunpack.c.l.b16 %v372
      %v459 = vunpack.c.l.b16 %v373
      %v460 = vunpack.c.l.b16 %v374
      %v461 = vunpack.c.l.b16 %v375
      %v462 = vunpack.c.l.b16 %v376
      %v463 = vunpack.c.l.b16 %v377
      %v464 = vunpack.c.l.b16 %v378
      %v465 = vunpack.c.l.b16 %v379
      %v466 = vunpack.c.l.b16 %v380
      %v467 = vunpack.c.l.b16 %v381
      %v468 = vunpack.c.l.b16 %v382
      %v469 = vunpack.c.l.b16 %v383
      %v470 = vunpack.c.l.b16 %v384
      %v471 = vunpack.c.l.b16 %v385
      %v472 = vunpack.c.l.b16 %v386
      %v473 = vunpack.c.l.b16 %v387
      %v474 = vunpack.c.l.b16 %v388
      %v475 = vunpack.c.l.b16 %v389
      %v476 = vunpack.c.l.b16 %v390
      %v477 = vunpack.c.l.b16 %v391
      %v478 = vunpack.c.l.b16 %v392
      %v479 = vunpack.c.l.b16 %v393
      %v480 = vunpack.c.l.b16 %v394
      %v481 = vunpack.c.l.b16 %v395
      %v482 = vunpack.c.l.b16 %v396
      %v483 = vpack.c.b16 %v452, %v451
      %v484 = vpack.c.b16 %v454, %v453
      %v485 = vpack.c.b16 %v456, %v455
      %v486 = vpack.c.b16 %v458, %v457
      %v487 = vpack.c.b16 %v460, %v459
      %v488 = vpack.c.b16 %v462, %v461
      %v489 = vpack.c.b16 %v464, %v463
      %v490 = vpack.c.b16 %v466, %v465
      %v491 = vpack.c.b16 %v468, %v467
      %v492 = vpack.c.b16 %v470, %v469
      %v493 = vpack.c.b16 %v472, %v471
      %v494 = vpack.c.b16 %v474, %v473
      %v495 = vpack.c.b16 %v476, %v475
      %v496 = vpack.c.b16 %v478, %v477
      %v497 = vpack.c.b16 %v480, %v479
      %v498 = vpack.c.b16 %v482, %v481
      %515 = vmatprep.subr.bf16.mxu0 0
      %516 = vmatpush1.bf16.msra.mxu0 %v483
      %517 = vmatprep.subr.bf16.mxu0 0
      %518 = vmatpush1.bf16.msra.mxu0 %v484
      %519 = vmatprep.subr.bf16.mxu0 0
      %520 = vmatpush1.bf16.msra.mxu0 %v485
      %521 = vmatprep.subr.bf16.mxu0 0
      %522 = vmatpush1.bf16.msra.mxu0 %v486
      %523 = vmatprep.subr.bf16.mxu0 0
      %524 = vmatpush1.bf16.msra.mxu0 %v487
      %525 = vmatprep.subr.bf16.mxu0 0
      %526 = vmatpush1.bf16.msra.mxu0 %v488
      %527 = vmatprep.subr.bf16.mxu0 0
      %528 = vmatpush1.bf16.msra.mxu0 %v489
      %529 = vmatprep.subr.bf16.mxu0 0
      %530 = vmatpush1.bf16.msra.mxu0 %v490
      %531 = vmatprep.subr.bf16.mxu0 0
      %532 = vmatpush1.bf16.msra.mxu0 %v491
      %533 = vmatprep.subr.bf16.mxu0 0
      %534 = vmatpush1.bf16.msra.mxu0 %v492
      %535 = vmatprep.subr.bf16.mxu0 0
      %536 = vmatpush1.bf16.msra.mxu0 %v493
      %537 = vmatprep.subr.bf16.mxu0 0
      %538 = vmatpush1.bf16.msra.mxu0 %v494
      %539 = vmatprep.subr.bf16.mxu0 0
      %540 = vmatpush1.bf16.msra.mxu0 %v495
      %541 = vmatprep.subr.bf16.mxu0 0
      %542 = vmatpush1.bf16.msra.mxu0 %v496
      %543 = vmatprep.subr.bf16.mxu0 0
      %544 = vmatpush1.bf16.msra.mxu0 %v497
      %545 = vmatprep.subr.bf16.mxu0 0
      %546 = vmatpush1.bf16.msra.mxu0 %v498
      %547 = vmatprep.mubr.bf16.mxu0 %v416
      %548 = vmatmul.mubr.bf16.gmra.mrb[0].mxu0 %v413
      %v549 = vpop.f32.mrb[0].mxu0
      %v550 = vadd.f32 0.0, %v549
      %v551 = vpop.f32.mrb[0].mxu0
      %v552 = vpop.f32.mrb[0].mxu0
      %v553 = vadd.f32 0.0, %v552
      %v554 = vpop.f32.mrb[0].mxu0
      %555 = vdwg.mxu0
      %v557 = vunpack.c.l.b16 %v328
      %v558 = vunpack.c.h.b16 %v328
      %v559 = vpack.c.b16 %v402, %v557
      %v560 = vpack.c.b16 %v403, %v558
      %v595 = vunpack.c.l.b16 %v330
      %v596 = vunpack.c.l.b16 %v331
      %v597 = vunpack.c.l.b16 %v332
      %v598 = vunpack.c.l.b16 %v333
      %v599 = vunpack.c.l.b16 %v334
      %v600 = vunpack.c.l.b16 %v335
      %v601 = vunpack.c.l.b16 %v336
      %v602 = vunpack.c.l.b16 %v337
      %v603 = vunpack.c.l.b16 %v338
      %v604 = vunpack.c.l.b16 %v339
      %v605 = vunpack.c.l.b16 %v340
      %v606 = vunpack.c.l.b16 %v341
      %v607 = vunpack.c.l.b16 %v342
      %v608 = vunpack.c.l.b16 %v343
      %v609 = vunpack.c.l.b16 %v344
      %v610 = vunpack.c.l.b16 %v345
      %v611 = vunpack.c.l.b16 %v346
      %v612 = vunpack.c.l.b16 %v347
      %v613 = vunpack.c.l.b16 %v348
      %v614 = vunpack.c.l.b16 %v349
      %v615 = vunpack.c.l.b16 %v350
      %v616 = vunpack.c.l.b16 %v351
      %v617 = vunpack.c.l.b16 %v352
      %v618 = vunpack.c.l.b16 %v353
      %v619 = vunpack.c.l.b16 %v354
      %v620 = vunpack.c.l.b16 %v355
      %v621 = vunpack.c.l.b16 %v356
      %v622 = vunpack.c.l.b16 %v357
      %v623 = vunpack.c.l.b16 %v358
      %v624 = vunpack.c.l.b16 %v359
      %v625 = vunpack.c.l.b16 %v360
      %v626 = vunpack.c.l.b16 %v361
      %v627 = vpack.c.b16 %v596, %v595
      %v628 = vpack.c.b16 %v598, %v597
      %v629 = vpack.c.b16 %v600, %v599
      %v630 = vpack.c.b16 %v602, %v601
      %v631 = vpack.c.b16 %v604, %v603
      %v632 = vpack.c.b16 %v606, %v605
      %v633 = vpack.c.b16 %v608, %v607
      %v634 = vpack.c.b16 %v610, %v609
      %v635 = vpack.c.b16 %v612, %v611
      %v636 = vpack.c.b16 %v614, %v613
      %v637 = vpack.c.b16 %v616, %v615
      %v638 = vpack.c.b16 %v618, %v617
      %v639 = vpack.c.b16 %v620, %v619
      %v640 = vpack.c.b16 %v622, %v621
      %v641 = vpack.c.b16 %v624, %v623
      %v642 = vpack.c.b16 %v626, %v625
      %659 = vmatprep.subr.bf16.mxu0 0
      %660 = vmatpush1.bf16.msra.mxu0 %v627
      %661 = vmatprep.subr.bf16.mxu0 0
      %662 = vmatpush1.bf16.msra.mxu0 %v628
      %663 = vmatprep.subr.bf16.mxu0 0
      %664 = vmatpush1.bf16.msra.mxu0 %v629
      %665 = vmatprep.subr.bf16.mxu0 0
      %666 = vmatpush1.bf16.msra.mxu0 %v630
      %667 = vmatprep.subr.bf16.mxu0 0
      %668 = vmatpush1.bf16.msra.mxu0 %v631
      %669 = vmatprep.subr.bf16.mxu0 0
      %670 = vmatpush1.bf16.msra.mxu0 %v632
      %671 = vmatprep.subr.bf16.mxu0 0
      %672 = vmatpush1.bf16.msra.mxu0 %v633
      %673 = vmatprep.subr.bf16.mxu0 0
      %674 = vmatpush1.bf16.msra.mxu0 %v634
      %675 = vmatprep.subr.bf16.mxu0 0
      %676 = vmatpush1.bf16.msra.mxu0 %v635
      %677 = vmatprep.subr.bf16.mxu0 0
      %678 = vmatpush1.bf16.msra.mxu0 %v636
      %679 = vmatprep.subr.bf16.mxu0 0
      %680 = vmatpush1.bf16.msra.mxu0 %v637
      %681 = vmatprep.subr.bf16.mxu0 0
      %682 = vmatpush1.bf16.msra.mxu0 %v638
      %683 = vmatprep.subr.bf16.mxu0 0
      %684 = vmatpush1.bf16.msra.mxu0 %v639
      %685 = vmatprep.subr.bf16.mxu0 0
      %686 = vmatpush1.bf16.msra.mxu0 %v640
      %687 = vmatprep.subr.bf16.mxu0 0
      %688 = vmatpush1.bf16.msra.mxu0 %v641
      %689 = vmatprep.subr.bf16.mxu0 0
      %690 = vmatpush1.bf16.msra.mxu0 %v642
      %691 = vmatprep.mubr.bf16.mxu0 %v560
      %692 = vmatmul.mubr.bf16.gmra.mrb[0].mxu0 %v559
      %v693 = vpop.f32.mrb[0].mxu0
      %v694 = vadd.f32 %v550, %v693
      %v695 = vpop.f32.mrb[0].mxu0
      %v696 = vpop.f32.mrb[0].mxu0
      %v697 = vadd.f32 %v553, %v696
      %v698 = vpop.f32.mrb[0].mxu0
      %699 = vdwg.mxu0
      %v700 = vld [vmem:[%s301] sm:$0x1]
      %v702 = vlaneseq
      %v703 = vshrl.u32 %v702, 7
      %v704 = vsub.s32 0, %v703
      %v705 = vrot.slane %v700, %v704
      %v707 = vadd.f32 %v694, %v705
      %v708 = vadd.f32 %v697, %v705
      %p709 = scmp.eq.s32.totalorder %s24, 0
      // Predicated region
      $region33: #{_lambda_.8} parent=31 // pred_check
        %p710 = pneg %p709
      $region34: #{_lambda_.8} parent=31 // pred_check_branch
        %712 = sbr.rel (%p710) target = $region36
      $region35: #{_lambda_.8} parent=31 // pred_region
        %713 = vst [vmem:[%s320] sm:$0x1] 0.0
        %714 = vst [vmem:[%s326] sm:$0x1] 0.0
      $region36: #{_lambda_.8} parent=31 // pred_fallthru
        _
      %v715 = vld [vmem:[%s320] sm:$0x1]
      %v716 = vadd.f32 %v707, %v708
      %v717 = vrot.slane %v716, 4
      %v718 = vadd.f32 %v716, %v717
      %v719 = vrot.slane %v718, 2
      %v720 = vadd.f32 %v718, %v719
      %v721 = vrot.slane %v720, 1
      %v722 = vadd.f32 %v720, %v721
      %v723 = vadd.f32 %v715, %v722
      %724 = vst [vmem:[%s320] sm:$0x1] %v723
      %v725 = vld [vmem:[%s326] sm:$0x1]
      %v726 = vmul.f32 %v707, %v707
      %v727 = vmul.f32 %v708, %v708
      %v728 = vadd.f32 %v726, %v727
      %v729 = vrot.slane %v728, 4
      %v730 = vadd.f32 %v728, %v729
      %v731 = vrot.slane %v730, 2
      %v732 = vadd.f32 %v730, %v731
      %v733 = vrot.slane %v732, 1
      %v734 = vadd.f32 %v732, %v733
      %v735 = vadd.f32 %v725, %v734
      %736 = vst [vmem:[%s326] sm:$0x1] %v735
      %v737 = vpack.c.bf16 %v708, %v707
      %v739 = vunpack.c.l.b16 %v737
      %v740 = vunpack.c.h.b16 %v737
      %v741 = vpack.c.b16 %v739, %v739
      %v742 = vpack.c.b16 %v740, %v740
      %745 = vst [vmem:[%s313] sm:$0xf] %v741
      %746 = vst [vmem:[%s313 + $0x4] sm:$0xf] %v742
      %s747 = smul.u32 2, %s24
      %p748 = scmp.lt.s32.totalorder %s22, 1
      %s749 = scalar_select %p748, %s22, 1
      %p750 = scmp.lt.s32.totalorder %s747, 1
      %s751 = scalar_select %p750, %s747, 1
      %p752 = scmp.lt.s32.totalorder %s23, 0
      %s753 = scalar_select %p752, %s23, 0
      %s754 = sadd.s32 %s753, %s751
      %s755 = smul.addr %s749, 2
      %s756 = sadd.s32 %s754, %s755
      %s757 = smul.addr %s756, 4
      %s758 = scalar_lea.vmem %s3, %s757
      %p759 = scmp.lt.s32.totalorder %s22, 1
      %s760 = scalar_select %p759, %s22, 1
      %p761 = scmp.lt.s32.totalorder %s23, 0
      %s762 = scalar_select %p761, %s23, 0
      %s763 = sadd.s32 %s762, %s760
      %s764 = scalar_lea.vmem %s4, %s763
      %p765 = scmp.lt.s32.totalorder %s22, 1
      %s766 = scalar_select %p765, %s22, 1
      %p767 = scmp.lt.s32.totalorder %s23, 0
      %s768 = scalar_select %p767, %s23, 0
      %s769 = sadd.s32 %s768, %s766
      %s770 = scalar_lea.vmem %s5, %s769
      // Predicated region
      $region37: #{_lambda_.8} parent=31 // pred_check
        %p771 = pneg %p136
      $region38: #{_lambda_.8} parent=31 // pred_check_branch
        %773 = sbr.rel (%p771) target = $region40
      $region39: #{_lambda_.8} parent=31 // pred_region
        %s774 = smul.u32 2, %s24
      $region40: #{_lambda_.8} parent=31 // pred_fallthru
        _
      // Predicated region
      $region41: #{_lambda_.8} parent=31 // pred_check
        %p775 = pneg %p164
      $region42: #{_lambda_.8} parent=31 // pred_check_branch
        %777 = sbr.rel (%p775) target = $region44
      $region43: #{_lambda_.8} parent=31 // pred_region
        _
      $region44: #{_lambda_.8} parent=31 // pred_fallthru
        _
      // Predicated region
      $region45: #{_lambda_.8} parent=31 // pred_check
        %p778 = pneg %p192
      $region46: #{_lambda_.8} parent=31 // pred_check_branch
        %780 = sbr.rel (%p778) target = $region48
      $region47: #{_lambda_.8} parent=31 // pred_region
        _
      $region48: #{_lambda_.8} parent=31 // pred_fallthru
        _
    $region32: #{_lambda_.8} parent=5 // pred_fallthru
      _
    %p781 = scmp.le.s32.totalorder 2, %s12
    // Predicated region
    $region49: #{_lambda_.8} parent=5 // pred_check
      %p782 = pneg %p781
    $region50: #{_lambda_.8} parent=5 // pred_check_branch
      %784 = sbr.rel (%p782) target = $region52
    $region51: #{_lambda_.8} parent=5 // pred_region
      %s785 = ssub.s32 %s12, 2
      // Predicated region
      $region53: #{_lambda_.8} parent=51 // pred_check
        %p786 = pneg %p142
      $region54: #{_lambda_.8} parent=51 // pred_check_branch
        %788 = sbr.rel (%p786) target = $region56
      $region55: #{_lambda_.8} parent=51 // pred_region
        %s789 = smul.u32 2, %s27
        %p790 = scmp.lt.s32.totalorder %s25, 1
        %s791 = scalar_select %p790, %s25, 1
        %p792 = scmp.lt.s32.totalorder %s789, 1
        %s793 = scalar_select %p792, %s789, 1
        %p794 = scmp.lt.s32.totalorder %s26, 0
        %s795 = scalar_select %p794, %s26, 0
        %s796 = sadd.s32 %s795, %s793
        %s797 = smul.addr %s791, 2
        %s798 = sadd.s32 %s796, %s797
        %s799 = smul.addr %s798, 4
        %s800 = scalar_lea.vmem %s3, %s799
      $region56: #{_lambda_.8} parent=51 // pred_fallthru
        _
      // Predicated region
      $region57: #{_lambda_.8} parent=51 // pred_check
        %p801 = pneg %p170
      $region58: #{_lambda_.8} parent=51 // pred_check_branch
        %803 = sbr.rel (%p801) target = $region60
      $region59: #{_lambda_.8} parent=51 // pred_region
        %p804 = scmp.lt.s32.totalorder %s25, 1
        %s805 = scalar_select %p804, %s25, 1
        %p806 = scmp.lt.s32.totalorder %s26, 0
        %s807 = scalar_select %p806, %s26, 0
        %s808 = sadd.s32 %s807, %s805
        %s809 = scalar_lea.vmem %s4, %s808
      $region60: #{_lambda_.8} parent=51 // pred_fallthru
        _
      // Predicated region
      $region61: #{_lambda_.8} parent=51 // pred_check
        %p810 = pneg %p198
      $region62: #{_lambda_.8} parent=51 // pred_check_branch
        %812 = sbr.rel (%p810) target = $region64
      $region63: #{_lambda_.8} parent=51 // pred_region
        %p813 = scmp.lt.s32.totalorder %s25, 1
        %s814 = scalar_select %p813, %s25, 1
        %p815 = scmp.lt.s32.totalorder %s26, 0
        %s816 = scalar_select %p815, %s26, 0
        %s817 = sadd.s32 %s816, %s814
        %s818 = scalar_lea.vmem %s5, %s817
      $region64: #{_lambda_.8} parent=51 // pred_fallthru
        _
    $region52: #{_lambda_.8} parent=5 // pred_fallthru
      _
  $region6: #{_lambda_.8} parent=0 // loop_footer
    %s16 = sadd.s32 1, %s12
  $region7: #{_lambda_.8} parent=0 // loop_footer_branch
    %11 = sbr.rel target = $region3
  $region8: #{_lambda_.8} parent=0 // loop_exit
    _

// kernel: _lambda_.9
$region0: #{_lambda_.9}
  #allocation0 [shape = 'u32[]', space=smem, size = 0x4, offset = 0x4, fixed_abs, tag = 'smem constant byte address 0x4 - core index']
  #allocation1 [shape = 'u32[144,128]{1,0:T(1,128)}', space=vmem, size = 0x12000, scoped, tag = 'internal scratch']
  %s0 = inlined_call_operand.vmem [shape: bf16[2,28,256], index: 0, kind: input, shape index: {}]
  %s1 = inlined_call_operand.vmem [shape: bf16[4,256,128], index: 1, kind: input, shape index: {}]
  %s2 = inlined_call_operand.vmem [shape: f32[1,128], index: 2, kind: input, shape index: {}]
  %s3 = inlined_call_operand.vmem [shape: f32[2,16,128], index: 3, kind: output, shape index: {}]
  %s4 = sld [smem:[#allocation0]]
  $region45: #{_lambda_.9} parent=0
    _
  %s6 = ssub.s32 1, %s4
  %s7 = scalar_select 0, %s6, %s4
  loop: start=0, step=1, limit=4
  $region2: #{_lambda_.9} parent=0 // loop_pre_header
    _
  $region3: #{_lambda_.9} parent=0 // loop_header
    %s9 = sphi 0, %s13
    %p10 = scmp.ge.s32.totalorder %s9, 4
    %s16 = sphi 0, %s35
    %s17 = sphi 0, %s31
    %s18 = sphi 0, %s27
    %s19 = sphi 0, %s16
    %s20 = sphi 0, %s17
    %s21 = sphi 0, %s18
    %s22 = sphi 0, %s19
    %s23 = sphi 0, %s20
    %s24 = sphi 0, %s21
    %s38 = sphi 0, %s40
    %s41 = sphi 0, %s38
    %s42 = sphi 0, %s41
    %s58 = sphi 0, %s42
    %s64 = sphi 0, %s66
    %s67 = sphi 0, %s64
    %s68 = sphi 0, %s67
    %s84 = sphi 0, %s68
    %s90 = sphi 0, %s92
    %s93 = sphi 0, %s90
    %s94 = sphi 0, %s93
    %s110 = sphi 0, %s94
    %s120 = sphi 0, %s122
    %s123 = sphi 0, %s120
    %s124 = sphi 0, %s123
    %s140 = sphi 0, %s124
  $region4: #{_lambda_.9} parent=0 // loop_header_branch
    %12 = sbr.rel (%p10) target = $region8
  $region5: #{_lambda_.9} parent=0 // loop_body
    %s14 = ssub.s32 %s9, 1
    %s15 = ssub.s32 %s9, 2
    %s25 = sadd.s32 1, %s18
    %p26 = scmp.ge.s32.totalorder %s25, 1
    %s27 = scalar_select %p26, 0, %s25
    %s28 = sadd.s32 1, %s17
    %s29 = scalar_select %p26, %s28, %s17
    %p30 = scmp.ge.s32.totalorder %s29, 1
    %s31 = scalar_select %p30, 0, %s29
    %s32 = sadd.s32 1, %s16
    %s33 = scalar_select %p30, %s32, %s16
    %p34 = scmp.ge.s32.totalorder %s33, 2
    %s35 = scalar_select %p34, 0, %s33
    %s36 = ssub.s32 %s16, %s35
    %p37 = scmp.eq.s32.totalorder %s36, 0
    %s39 = sadd.s32 %s38, 1
    %s40 = scalar_select %p37, %s38, %s39
    %p43 = pneg %p37
    %p44 = scmp.eq.s32.totalorder %s9, 1
    %p45 = por %p43, %p44
    %p46 = scmp.ne.s32.totalorder %s38, %s41
    %p47 = scmp.eq.s32.totalorder %s9, 0
    %p48 = por %p46, %p47
    %p49 = scmp.ne.s32.totalorder %s38, %s41
    %p50 = scmp.eq.s32.totalorder %s14, 1
    %p51 = por %p49, %p50
    %p52 = scmp.ne.s32.totalorder %s41, %s42
    %p53 = scmp.eq.s32.totalorder %s14, 0
    %p54 = por %p52, %p53
    %p55 = scmp.ne.s32.totalorder %s41, %s42
    %p56 = scmp.eq.s32.totalorder %s15, 1
    %p57 = por %p55, %p56
    %p59 = scmp.ne.s32.totalorder %s42, %s58
    %p60 = scmp.eq.s32.totalorder %s15, 0
    %p61 = por %p59, %p60
    %s62 = ssub.s32 %s17, %s31
    %p63 = scmp.eq.s32.totalorder %s62, 0
    %s65 = sadd.s32 %s64, 1
    %s66 = scalar_select %p63, %s64, %s65
    %p69 = pneg %p63
    %p70 = scmp.eq.s32.totalorder %s9, 1
    %p71 = por %p69, %p70
    %p72 = scmp.ne.s32.totalorder %s64, %s67
    %p73 = scmp.eq.s32.totalorder %s9, 0
    %p74 = por %p72, %p73
    %p75 = scmp.ne.s32.totalorder %s64, %s67
    %p76 = scmp.eq.s32.totalorder %s14, 1
    %p77 = por %p75, %p76
    %p78 = scmp.ne.s32.totalorder %s67, %s68
    %p79 = scmp.eq.s32.totalorder %s14, 0
    %p80 = por %p78, %p79
    %p81 = scmp.ne.s32.totalorder %s67, %s68
    %p82 = scmp.eq.s32.totalorder %s15, 1
    %p83 = por %p81, %p82
    %p85 = scmp.ne.s32.totalorder %s68, %s84
    %p86 = scmp.eq.s32.totalorder %s15, 0
    %p87 = por %p85, %p86
    %s88 = ssub.s32 %s17, %s31
    %p89 = scmp.eq.s32.totalorder %s88, 0
    %s91 = sadd.s32 %s90, 1
    %s92 = scalar_select %p89, %s90, %s91
    %p95 = pneg %p89
    %p96 = scmp.eq.s32.totalorder %s9, 1
    %p97 = por %p95, %p96
    %p98 = scmp.ne.s32.totalorder %s90, %s93
    %p99 = scmp.eq.s32.totalorder %s9, 0
    %p100 = por %p98, %p99
    %p101 = scmp.ne.s32.totalorder %s90, %s93
    %p102 = scmp.eq.s32.totalorder %s14, 1
    %p103 = por %p101, %p102
    %p104 = scmp.ne.s32.totalorder %s93, %s94
    %p105 = scmp.eq.s32.totalorder %s14, 0
    %p106 = por %p104, %p105
    %p107 = scmp.ne.s32.totalorder %s93, %s94
    %p108 = scmp.eq.s32.totalorder %s15, 1
    %p109 = por %p107, %p108
    %p111 = scmp.ne.s32.totalorder %s94, %s110
    %p112 = scmp.eq.s32.totalorder %s15, 0
    %p113 = por %p111, %p112
    %s114 = ssub.s32 %s16, %s35
    %s115 = ssub.s32 %s18, %s27
    %s116 = sor.u32 %s114, %s115
    %s117 = ssub.s32 %s17, %s31
    %s118 = sor.u32 %s116, %s117
    %p119 = scmp.eq.s32.totalorder %s118, 0
    %s121 = sadd.s32 %s120, 1
    %s122 = scalar_select %p119, %s120, %s121
    %p125 = pneg %p119
    %p126 = scmp.eq.s32.totalorder %s9, 1
    %p127 = por %p125, %p126
    %p128 = scmp.ne.s32.totalorder %s120, %s123
    %p129 = scmp.eq.s32.totalorder %s9, 0
    %p130 = por %p128, %p129
    %p131 = scmp.ne.s32.totalorder %s120, %s123
    %p132 = scmp.eq.s32.totalorder %s14, 1
    %p133 = por %p131, %p132
    %p134 = scmp.ne.s32.totalorder %s123, %s124
    %p135 = scmp.eq.s32.totalorder %s14, 0
    %p136 = por %p134, %p135
    %p137 = scmp.ne.s32.totalorder %s123, %s124
    %p138 = scmp.eq.s32.totalorder %s15, 1
    %p139 = por %p137, %p138
    %p141 = scmp.ne.s32.totalorder %s124, %s140
    %p142 = scmp.eq.s32.totalorder %s15, 0
    %p143 = por %p141, %p142
    %p144 = scmp.le.s32.totalorder 1, %s9
    %p145 = scmp.lt.s32.totalorder %s9, 3
    %p146 = pnand %p144, %p145
    %p147 = pneg %p146
    // Predicated region
    $region9: #{_lambda_.9} parent=5 // pred_check
      _
    $region10: #{_lambda_.9} parent=5 // pred_check_branch
      %149 = sbr.rel (%p146) target = $region12
    $region11: #{_lambda_.9} parent=5 // pred_region
      %s150 = ssub.s32 %s9, 1
      // Predicated region
      $region13: #{_lambda_.9} parent=11 // pred_check
        %p151 = pneg %p80
      $region14: #{_lambda_.9} parent=11 // pred_check_branch
        %153 = sbr.rel (%p151) target = $region16
      $region15: #{_lambda_.9} parent=11 // pred_region
        %p154 = scmp.lt.s32.totalorder %s20, 0
        %s155 = scalar_select %p154, %s20, 0
        %s156 = smul.addr %s155, 4
        %s157 = scalar_lea.vmem %s1, %s156
      $region16: #{_lambda_.9} parent=11 // pred_fallthru
        _
      // Predicated region
      $region17: #{_lambda_.9} parent=11 // pred_check
        %p158 = pneg %p106
      $region18: #{_lambda_.9} parent=11 // pred_check_branch
        %160 = sbr.rel (%p158) target = $region20
      $region19: #{_lambda_.9} parent=11 // pred_region
        %p161 = scmp.lt.s32.totalorder %s20, 0
        %s162 = scalar_select %p161, %s20, 0
        %s163 = scalar_lea.vmem %s2, %s162
      $region20: #{_lambda_.9} parent=11 // pred_fallthru
        _
    $region12: #{_lambda_.9} parent=5 // pred_fallthru
      _
    %p164 = scmp.lt.s32.totalorder %s9, 2
    // Predicated region
    $region21: #{_lambda_.9} parent=5 // pred_check
      %p165 = pneg %p164
    $region22: #{_lambda_.9} parent=5 // pred_check_branch
      %167 = sbr.rel (%p165) target = $region24
    $region23: #{_lambda_.9} parent=5 // pred_region
      // Predicated region
      $region25: #{_lambda_.9} parent=23 // pred_check
        %p168 = pneg %p48
      $region26: #{_lambda_.9} parent=23 // pred_check_branch
        %170 = sbr.rel (%p168) target = $region28
      $region27: #{_lambda_.9} parent=23 // pred_region
        %p171 = scmp.lt.s32.totalorder %s16, 1
        %s172 = scalar_select %p171, %s16, 1
        %s173 = smul.addr %s172, 8
        %s174 = smul.addr %s173, 4
        %s175 = scalar_lea.vmem %s0, %s174
      $region28: #{_lambda_.9} parent=23 // pred_fallthru
        _
    $region24: #{_lambda_.9} parent=5 // pred_fallthru
      _
    %p176 = scmp.le.s32.totalorder 1, %s9
    %p177 = scmp.lt.s32.totalorder %s9, 3
    %p178 = pnand %p176, %p177
    %p179 = pneg %p178
    // Predicated region
    $region29: #{_lambda_.9} parent=5 // pred_check
      _
    $region30: #{_lambda_.9} parent=5 // pred_check_branch
      %181 = sbr.rel (%p178) target = $region32
    $region31: #{_lambda_.9} parent=5 // pred_region
      %s182 = ssub.s32 %s9, 1
      %p183 = scmp.lt.s32.totalorder %s19, 1
      %s184 = scalar_select %p183, %s19, 1
      %s185 = smul.addr %s184, 8
      %s186 = smul.addr %s185, 4
      %s187 = scalar_lea.vmem %s0, %s186
      %p188 = pneg %p54
      %p189 = pneg %p51
      %p190 = scmp.lt.s32.totalorder %s20, 0
      %s191 = scalar_select %p190, %s20, 0
      %s192 = smul.addr %s191, 4
      %s193 = scalar_lea.vmem %s1, %s192
      %p194 = pneg %p80
      %p195 = pneg %p77
      %p196 = scmp.lt.s32.totalorder %s20, 0
      %s197 = scalar_select %p196, %s20, 0
      %s198 = scalar_lea.vmem %s2, %s197
      %p199 = pneg %p106
      %p200 = pneg %p103
      %p201 = pneg %p136
      %p202 = pneg %p133
      %s203 = smul.u32 2, %s21
      %p204 = scmp.lt.s32.totalorder %s19, 1
      %s205 = scalar_select %p204, %s19, 1
      %p206 = scmp.lt.s32.totalorder %s203, 1
      %s207 = scalar_select %p206, %s203, 1
      %p208 = scmp.lt.s32.totalorder %s20, 0
      %s209 = scalar_select %p208, %s20, 0
      %s210 = sadd.s32 %s209, %s207
      %s211 = smul.addr %s205, 2
      %s212 = sadd.s32 %s210, %s211
      %s213 = smul.addr %s212, 8
      %s214 = scalar_lea.vmem %s3, %s213
      %p215 = scmp.lt.s32.totalorder %s19, 1
      %s216 = scalar_select %p215, %s19, 1
      %s217 = smul.addr %s216, 8
      %s218 = smul.addr %s217, 4
      %s219 = scalar_lea.vmem %s0, %s218
      %p220 = scmp.lt.s32.totalorder %s20, 0
      %s221 = scalar_select %p220, %s20, 0
      %s222 = smul.addr %s221, 4
      %s223 = scalar_lea.vmem %s1, %s222
      %p224 = scmp.lt.s32.totalorder %s20, 0
      %s225 = scalar_select %p224, %s20, 0
      %s226 = scalar_lea.vmem %s2, %s225
      %s227 = smul.u32 2, %s21
      %p228 = scmp.lt.s32.totalorder %s19, 1
      %s229 = scalar_select %p228, %s19, 1
      %p230 = scmp.lt.s32.totalorder %s227, 1
      %s231 = scalar_select %p230, %s227, 1
      %p232 = scmp.lt.s32.totalorder %s20, 0
      %s233 = scalar_select %p232, %s20, 0
      %s234 = sadd.s32 %s233, %s231
      %s235 = smul.addr %s229, 2
      %s236 = sadd.s32 %s234, %s235
      %s237 = smul.addr %s236, 8
      %s238 = scalar_lea.vmem %s3, %s237
      %s239 = smul.u32 2, %s21
      %v241 = vld [vmem:[%s219] sm:$0xff]
      %v242 = vld [vmem:[%s219 + $0x8] sm:$0xff]
      %v243 = vld [vmem:[%s223] sm:$0xf]
      %v244 = vld [vmem:[%s223 + $0x4] sm:$0xf]
      %v245 = vld [vmem:[%s223 + $0x8] sm:$0xf]
      %v246 = vld [vmem:[%s223 + $0xc] sm:$0xf]
      %v247 = vld [vmem:[%s223 + $0x10] sm:$0xf]
      %v248 = vld [vmem:[%s223 + $0x14] sm:$0xf]
      %v249 = vld [vmem:[%s223 + $0x18] sm:$0xf]
      %v250 = vld [vmem:[%s223 + $0x1c] sm:$0xf]
      %v251 = vld [vmem:[%s223 + $0x20] sm:$0xf]
      %v252 = vld [vmem:[%s223 + $0x24] sm:$0xf]
      %v253 = vld [vmem:[%s223 + $0x28] sm:$0xf]
      %v254 = vld [vmem:[%s223 + $0x2c] sm:$0xf]
      %v255 = vld [vmem:[%s223 + $0x30] sm:$0xf]
      %v256 = vld [vmem:[%s223 + $0x34] sm:$0xf]
      %v257 = vld [vmem:[%s223 + $0x38] sm:$0xf]
      %v258 = vld [vmem:[%s223 + $0x3c] sm:$0xf]
      %v259 = vld [vmem:[%s223 + $0x40] sm:$0xf]
      %v260 = vld [vmem:[%s223 + $0x44] sm:$0xf]
      %v261 = vld [vmem:[%s223 + $0x48] sm:$0xf]
      %v262 = vld [vmem:[%s223 + $0x4c] sm:$0xf]
      %v263 = vld [vmem:[%s223 + $0x50] sm:$0xf]
      %v264 = vld [vmem:[%s223 + $0x54] sm:$0xf]
      %v265 = vld [vmem:[%s223 + $0x58] sm:$0xf]
      %v266 = vld [vmem:[%s223 + $0x5c] sm:$0xf]
      %v267 = vld [vmem:[%s223 + $0x60] sm:$0xf]
      %v268 = vld [vmem:[%s223 + $0x64] sm:$0xf]
      %v269 = vld [vmem:[%s223 + $0x68] sm:$0xf]
      %v270 = vld [vmem:[%s223 + $0x6c] sm:$0xf]
      %v271 = vld [vmem:[%s223 + $0x70] sm:$0xf]
      %v272 = vld [vmem:[%s223 + $0x74] sm:$0xf]
      %v273 = vld [vmem:[%s223 + $0x78] sm:$0xf]
      %v274 = vld [vmem:[%s223 + $0x7c] sm:$0xf]
      %v275 = vld [vmem:[%s219] sm:$0xcc]
      %v276 = vld [vmem:[%s219 + $0x10] sm:$0x33]
      %s277 = scalar_lea.vmem %s223, 128
      %v278 = vld [vmem:[%s277] sm:$0xf]
      %v279 = vld [vmem:[%s277 + $0x4] sm:$0xf]
      %v280 = vld [vmem:[%s277 + $0x8] sm:$0xf]
      %v281 = vld [vmem:[%s277 + $0xc] sm:$0xf]
      %v282 = vld [vmem:[%s277 + $0x10] sm:$0xf]
      %v283 = vld [vmem:[%s277 + $0x14] sm:$0xf]
      %v284 = vld [vmem:[%s277 + $0x18] sm:$0xf]
      %v285 = vld [vmem:[%s277 + $0x1c] sm:$0xf]
      %v286 = vld [vmem:[%s277 + $0x20] sm:$0xf]
      %v287 = vld [vmem:[%s277 + $0x24] sm:$0xf]
      %v288 = vld [vmem:[%s277 + $0x28] sm:$0xf]
      %v289 = vld [vmem:[%s277 + $0x2c] sm:$0xf]
      %v290 = vld [vmem:[%s277 + $0x30] sm:$0xf]
      %v291 = vld [vmem:[%s277 + $0x34] sm:$0xf]
      %v292 = vld [vmem:[%s277 + $0x38] sm:$0xf]
      %v293 = vld [vmem:[%s277 + $0x3c] sm:$0xf]
      %v294 = vld [vmem:[%s277 + $0x40] sm:$0xf]
      %v295 = vld [vmem:[%s277 + $0x44] sm:$0xf]
      %v296 = vld [vmem:[%s277 + $0x48] sm:$0xf]
      %v297 = vld [vmem:[%s277 + $0x4c] sm:$0xf]
      %v298 = vld [vmem:[%s277 + $0x50] sm:$0xf]
      %v299 = vld [vmem:[%s277 + $0x54] sm:$0xf]
      %v300 = vld [vmem:[%s277 + $0x58] sm:$0xf]
      %v301 = vld [vmem:[%s277 + $0x5c] sm:$0xf]
      %v302 = vld [vmem:[%s277 + $0x60] sm:$0xf]
      %v303 = vld [vmem:[%s277 + $0x64] sm:$0xf]
      %v304 = vld [vmem:[%s277 + $0x68] sm:$0xf]
      %v305 = vld [vmem:[%s277 + $0x6c] sm:$0xf]
      %v306 = vld [vmem:[%s277 + $0x70] sm:$0xf]
      %v307 = vld [vmem:[%s277 + $0x74] sm:$0xf]
      %v308 = vld [vmem:[%s277 + $0x78] sm:$0xf]
      %v309 = vld [vmem:[%s277 + $0x7c] sm:$0xf]
      %v313 = vunpack.c.l.b16 %v275
      %v314 = vunpack.c.h.b16 %v275
      %v315 = vunpack.c.l.b16 %v242
      %v316 = vunpack.c.h.b16 %v242
      %v317 = vunpack.c.l.b16 %v276
      %v318 = vunpack.c.h.b16 %v276
      %v319 = vpack.c.b16 %v315, %v313
      %v320 = vpack.c.b16 %v316, %v314
      %v321 = vpack.c.b16 %v317, %v317
      %v322 = vpack.c.b16 %v318, %v318
      %vm323 = vcmask 1045504
      %v324 = vrot.slane %v319, 2
      %v325 = vrot.slane %v321, 2
      %v326 = vsel %vm323, %v324, %v325
      %v327 = vrot.slane %v320, 2
      %v328 = vrot.slane %v322, 2
      %v329 = vsel %vm323, %v327, %v328
      %v364 = vunpack.c.l.b16 %v278
      %v365 = vunpack.c.l.b16 %v279
      %v366 = vunpack.c.l.b16 %v280
      %v367 = vunpack.c.l.b16 %v281
      %v368 = vunpack.c.l.b16 %v282
      %v369 = vunpack.c.l.b16 %v283
      %v370 = vunpack.c.l.b16 %v284
      %v371 = vunpack.c.l.b16 %v285
      %v372 = vunpack.c.l.b16 %v286
      %v373 = vunpack.c.l.b16 %v287
      %v374 = vunpack.c.l.b16 %v288
      %v375 = vunpack.c.l.b16 %v289
      %v376 = vunpack.c.l.b16 %v290
      %v377 = vunpack.c.l.b16 %v291
      %v378 = vunpack.c.l.b16 %v292
      %v379 = vunpack.c.l.b16 %v293
      %v380 = vunpack.c.l.b16 %v294
      %v381 = vunpack.c.l.b16 %v295
      %v382 = vunpack.c.l.b16 %v296
      %v383 = vunpack.c.l.b16 %v297
      %v384 = vunpack.c.l.b16 %v298
      %v385 = vunpack.c.l.b16 %v299
      %v386 = vunpack.c.l.b16 %v300
      %v387 = vunpack.c.l.b16 %v301
      %v388 = vunpack.c.l.b16 %v302
      %v389 = vunpack.c.l.b16 %v303
      %v390 = vunpack.c.l.b16 %v304
      %v391 = vunpack.c.l.b16 %v305
      %v392 = vunpack.c.l.b16 %v306
      %v393 = vunpack.c.l.b16 %v307
      %v394 = vunpack.c.l.b16 %v308
      %v395 = vunpack.c.l.b16 %v309
      %v396 = vpack.c.b16 %v365, %v364
      %v397 = vpack.c.b16 %v367, %v366
      %v398 = vpack.c.b16 %v369, %v368
      %v399 = vpack.c.b16 %v371, %v370
      %v400 = vpack.c.b16 %v373, %v372
      %v401 = vpack.c.b16 %v375, %v374
      %v402 = vpack.c.b16 %v377, %v376
      %v403 = vpack.c.b16 %v379, %v378
      %v404 = vpack.c.b16 %v381, %v380
      %v405 = vpack.c.b16 %v383, %v382
      %v406 = vpack.c.b16 %v385, %v384
      %v407 = vpack.c.b16 %v387, %v386
      %v408 = vpack.c.b16 %v389, %v388
      %v409 = vpack.c.b16 %v391, %v390
      %v410 = vpack.c.b16 %v393, %v392
      %v411 = vpack.c.b16 %v395, %v394
      %428 = vmatprep.subr.bf16.mxu0 0
      %429 = vmatpush1.bf16.msra.mxu0 %v396
      %430 = vmatprep.subr.bf16.mxu0 0
      %431 = vmatpush1.bf16.msra.mxu0 %v397
      %432 = vmatprep.subr.bf16.mxu0 0
      %433 = vmatpush1.bf16.msra.mxu0 %v398
      %434 = vmatprep.subr.bf16.mxu0 0
      %435 = vmatpush1.bf16.msra.mxu0 %v399
      %436 = vmatprep.subr.bf16.mxu0 0
      %437 = vmatpush1.bf16.msra.mxu0 %v400
      %438 = vmatprep.subr.bf16.mxu0 0
      %439 = vmatpush1.bf16.msra.mxu0 %v401
      %440 = vmatprep.subr.bf16.mxu0 0
      %441 = vmatpush1.bf16.msra.mxu0 %v402
      %442 = vmatprep.subr.bf16.mxu0 0
      %443 = vmatpush1.bf16.msra.mxu0 %v403
      %444 = vmatprep.subr.bf16.mxu0 0
      %445 = vmatpush1.bf16.msra.mxu0 %v404
      %446 = vmatprep.subr.bf16.mxu0 0
      %447 = vmatpush1.bf16.msra.mxu0 %v405
      %448 = vmatprep.subr.bf16.mxu0 0
      %449 = vmatpush1.bf16.msra.mxu0 %v406
      %450 = vmatprep.subr.bf16.mxu0 0
      %451 = vmatpush1.bf16.msra.mxu0 %v407
      %452 = vmatprep.subr.bf16.mxu0 0
      %453 = vmatpush1.bf16.msra.mxu0 %v408
      %454 = vmatprep.subr.bf16.mxu0 0
      %455 = vmatpush1.bf16.msra.mxu0 %v409
      %456 = vmatprep.subr.bf16.mxu0 0
      %457 = vmatpush1.bf16.msra.mxu0 %v410
      %458 = vmatprep.subr.bf16.mxu0 0
      %459 = vmatpush1.bf16.msra.mxu0 %v411
      %460 = vmatprep.mubr.bf16.mxu0 %v329
      %461 = vmatmul.mubr.bf16.gmra.mrb[0].mxu0 %v326
      %v462 = vpop.f32.mrb[0].mxu0
      %v463 = vadd.f32 0.0, %v462
      %v464 = vpop.f32.mrb[0].mxu0
      %v465 = vpop.f32.mrb[0].mxu0
      %v466 = vadd.f32 0.0, %v465
      %v467 = vpop.f32.mrb[0].mxu0
      %468 = vdwg.mxu0
      %v470 = vunpack.c.l.b16 %v241
      %v471 = vunpack.c.h.b16 %v241
      %v472 = vpack.c.b16 %v315, %v470
      %v473 = vpack.c.b16 %v316, %v471
      %v508 = vunpack.c.l.b16 %v243
      %v509 = vunpack.c.l.b16 %v244
      %v510 = vunpack.c.l.b16 %v245
      %v511 = vunpack.c.l.b16 %v246
      %v512 = vunpack.c.l.b16 %v247
      %v513 = vunpack.c.l.b16 %v248
      %v514 = vunpack.c.l.b16 %v249
      %v515 = vunpack.c.l.b16 %v250
      %v516 = vunpack.c.l.b16 %v251
      %v517 = vunpack.c.l.b16 %v252
      %v518 = vunpack.c.l.b16 %v253
      %v519 = vunpack.c.l.b16 %v254
      %v520 = vunpack.c.l.b16 %v255
      %v521 = vunpack.c.l.b16 %v256
      %v522 = vunpack.c.l.b16 %v257
      %v523 = vunpack.c.l.b16 %v258
      %v524 = vunpack.c.l.b16 %v259
      %v525 = vunpack.c.l.b16 %v260
      %v526 = vunpack.c.l.b16 %v261
      %v527 = vunpack.c.l.b16 %v262
      %v528 = vunpack.c.l.b16 %v263
      %v529 = vunpack.c.l.b16 %v264
      %v530 = vunpack.c.l.b16 %v265
      %v531 = vunpack.c.l.b16 %v266
      %v532 = vunpack.c.l.b16 %v267
      %v533 = vunpack.c.l.b16 %v268
      %v534 = vunpack.c.l.b16 %v269
      %v535 = vunpack.c.l.b16 %v270
      %v536 = vunpack.c.l.b16 %v271
      %v537 = vunpack.c.l.b16 %v272
      %v538 = vunpack.c.l.b16 %v273
      %v539 = vunpack.c.l.b16 %v274
      %v540 = vpack.c.b16 %v509, %v508
      %v541 = vpack.c.b16 %v511, %v510
      %v542 = vpack.c.b16 %v513, %v512
      %v543 = vpack.c.b16 %v515, %v514
      %v544 = vpack.c.b16 %v517, %v516
      %v545 = vpack.c.b16 %v519, %v518
      %v546 = vpack.c.b16 %v521, %v520
      %v547 = vpack.c.b16 %v523, %v522
      %v548 = vpack.c.b16 %v525, %v524
      %v549 = vpack.c.b16 %v527, %v526
      %v550 = vpack.c.b16 %v529, %v528
      %v551 = vpack.c.b16 %v531, %v530
      %v552 = vpack.c.b16 %v533, %v532
      %v553 = vpack.c.b16 %v535, %v534
      %v554 = vpack.c.b16 %v537, %v536
      %v555 = vpack.c.b16 %v539, %v538
      %572 = vmatprep.subr.bf16.mxu0 0
      %573 = vmatpush1.bf16.msra.mxu0 %v540
      %574 = vmatprep.subr.bf16.mxu0 0
      %575 = vmatpush1.bf16.msra.mxu0 %v541
      %576 = vmatprep.subr.bf16.mxu0 0
      %577 = vmatpush1.bf16.msra.mxu0 %v542
      %578 = vmatprep.subr.bf16.mxu0 0
      %579 = vmatpush1.bf16.msra.mxu0 %v543
      %580 = vmatprep.subr.bf16.mxu0 0
      %581 = vmatpush1.bf16.msra.mxu0 %v544
      %582 = vmatprep.subr.bf16.mxu0 0
      %583 = vmatpush1.bf16.msra.mxu0 %v545
      %584 = vmatprep.subr.bf16.mxu0 0
      %585 = vmatpush1.bf16.msra.mxu0 %v546
      %586 = vmatprep.subr.bf16.mxu0 0
      %587 = vmatpush1.bf16.msra.mxu0 %v547
      %588 = vmatprep.subr.bf16.mxu0 0
      %589 = vmatpush1.bf16.msra.mxu0 %v548
      %590 = vmatprep.subr.bf16.mxu0 0
      %591 = vmatpush1.bf16.msra.mxu0 %v549
      %592 = vmatprep.subr.bf16.mxu0 0
      %593 = vmatpush1.bf16.msra.mxu0 %v550
      %594 = vmatprep.subr.bf16.mxu0 0
      %595 = vmatpush1.bf16.msra.mxu0 %v551
      %596 = vmatprep.subr.bf16.mxu0 0
      %597 = vmatpush1.bf16.msra.mxu0 %v552
      %598 = vmatprep.subr.bf16.mxu0 0
      %599 = vmatpush1.bf16.msra.mxu0 %v553
      %600 = vmatprep.subr.bf16.mxu0 0
      %601 = vmatpush1.bf16.msra.mxu0 %v554
      %602 = vmatprep.subr.bf16.mxu0 0
      %603 = vmatpush1.bf16.msra.mxu0 %v555
      %604 = vmatprep.mubr.bf16.mxu0 %v473
      %605 = vmatmul.mubr.bf16.gmra.mrb[0].mxu0 %v472
      %v606 = vpop.f32.mrb[0].mxu0
      %v607 = vadd.f32 %v463, %v606
      %v608 = vpop.f32.mrb[0].mxu0
      %v609 = vpop.f32.mrb[0].mxu0
      %v610 = vadd.f32 %v466, %v609
      %v611 = vpop.f32.mrb[0].mxu0
      %612 = vdwg.mxu0
      %v613 = vld [vmem:[%s219 + $0x10] sm:$0xff]
      %s614 = scalar_lea.vmem %s223, 256
      %v615 = vld [vmem:[%s614] sm:$0xf]
      %v616 = vld [vmem:[%s614 + $0x4] sm:$0xf]
      %v617 = vld [vmem:[%s614 + $0x8] sm:$0xf]
      %v618 = vld [vmem:[%s614 + $0xc] sm:$0xf]
      %v619 = vld [vmem:[%s614 + $0x10] sm:$0xf]
      %v620 = vld [vmem:[%s614 + $0x14] sm:$0xf]
      %v621 = vld [vmem:[%s614 + $0x18] sm:$0xf]
      %v622 = vld [vmem:[%s614 + $0x1c] sm:$0xf]
      %v623 = vld [vmem:[%s614 + $0x20] sm:$0xf]
      %v624 = vld [vmem:[%s614 + $0x24] sm:$0xf]
      %v625 = vld [vmem:[%s614 + $0x28] sm:$0xf]
      %v626 = vld [vmem:[%s614 + $0x2c] sm:$0xf]
      %v627 = vld [vmem:[%s614 + $0x30] sm:$0xf]
      %v628 = vld [vmem:[%s614 + $0x34] sm:$0xf]
      %v629 = vld [vmem:[%s614 + $0x38] sm:$0xf]
      %v630 = vld [vmem:[%s614 + $0x3c] sm:$0xf]
      %v631 = vld [vmem:[%s614 + $0x40] sm:$0xf]
      %v632 = vld [vmem:[%s614 + $0x44] sm:$0xf]
      %v633 = vld [vmem:[%s614 + $0x48] sm:$0xf]
      %v634 = vld [vmem:[%s614 + $0x4c] sm:$0xf]
      %v635 = vld [vmem:[%s614 + $0x50] sm:$0xf]
      %v636 = vld [vmem:[%s614 + $0x54] sm:$0xf]
      %v637 = vld [vmem:[%s614 + $0x58] sm:$0xf]
      %v638 = vld [vmem:[%s614 + $0x5c] sm:$0xf]
      %v639 = vld [vmem:[%s614 + $0x60] sm:$0xf]
      %v640 = vld [vmem:[%s614 + $0x64] sm:$0xf]
      %v641 = vld [vmem:[%s614 + $0x68] sm:$0xf]
      %v642 = vld [vmem:[%s614 + $0x6c] sm:$0xf]
      %v643 = vld [vmem:[%s614 + $0x70] sm:$0xf]
      %v644 = vld [vmem:[%s614 + $0x74] sm:$0xf]
      %v645 = vld [vmem:[%s614 + $0x78] sm:$0xf]
      %v646 = vld [vmem:[%s614 + $0x7c] sm:$0xf]
      %v648 = vunpack.c.l.b16 %v613
      %v649 = vunpack.c.h.b16 %v613
      %v650 = vpack.c.b16 %v648, %v315
      %v651 = vpack.c.b16 %v649, %v316
      %v686 = vunpack.c.l.b16 %v615
      %v687 = vunpack.c.l.b16 %v616
      %v688 = vunpack.c.l.b16 %v617
      %v689 = vunpack.c.l.b16 %v618
      %v690 = vunpack.c.l.b16 %v619
      %v691 = vunpack.c.l.b16 %v620
      %v692 = vunpack.c.l.b16 %v621
      %v693 = vunpack.c.l.b16 %v622
      %v694 = vunpack.c.l.b16 %v623
      %v695 = vunpack.c.l.b16 %v624
      %v696 = vunpack.c.l.b16 %v625
      %v697 = vunpack.c.l.b16 %v626
      %v698 = vunpack.c.l.b16 %v627
      %v699 = vunpack.c.l.b16 %v628
      %v700 = vunpack.c.l.b16 %v629
      %v701 = vunpack.c.l.b16 %v630
      %v702 = vunpack.c.l.b16 %v631
      %v703 = vunpack.c.l.b16 %v632
      %v704 = vunpack.c.l.b16 %v633
      %v705 = vunpack.c.l.b16 %v634
      %v706 = vunpack.c.l.b16 %v635
      %v707 = vunpack.c.l.b16 %v636
      %v708 = vunpack.c.l.b16 %v637
      %v709 = vunpack.c.l.b16 %v638
      %v710 = vunpack.c.l.b16 %v639
      %v711 = vunpack.c.l.b16 %v640
      %v712 = vunpack.c.l.b16 %v641
      %v713 = vunpack.c.l.b16 %v642
      %v714 = vunpack.c.l.b16 %v643
      %v715 = vunpack.c.l.b16 %v644
      %v716 = vunpack.c.l.b16 %v645
      %v717 = vunpack.c.l.b16 %v646
      %v718 = vpack.c.b16 %v687, %v686
      %v719 = vpack.c.b16 %v689, %v688
      %v720 = vpack.c.b16 %v691, %v690
      %v721 = vpack.c.b16 %v693, %v692
      %v722 = vpack.c.b16 %v695, %v694
      %v723 = vpack.c.b16 %v697, %v696
      %v724 = vpack.c.b16 %v699, %v698
      %v725 = vpack.c.b16 %v701, %v700
      %v726 = vpack.c.b16 %v703, %v702
      %v727 = vpack.c.b16 %v705, %v704
      %v728 = vpack.c.b16 %v707, %v706
      %v729 = vpack.c.b16 %v709, %v708
      %v730 = vpack.c.b16 %v711, %v710
      %v731 = vpack.c.b16 %v713, %v712
      %v732 = vpack.c.b16 %v715, %v714
      %v733 = vpack.c.b16 %v717, %v716
      %750 = vmatprep.subr.bf16.mxu0 0
      %751 = vmatpush1.bf16.msra.mxu0 %v718
      %752 = vmatprep.subr.bf16.mxu0 0
      %753 = vmatpush1.bf16.msra.mxu0 %v719
      %754 = vmatprep.subr.bf16.mxu0 0
      %755 = vmatpush1.bf16.msra.mxu0 %v720
      %756 = vmatprep.subr.bf16.mxu0 0
      %757 = vmatpush1.bf16.msra.mxu0 %v721
      %758 = vmatprep.subr.bf16.mxu0 0
      %759 = vmatpush1.bf16.msra.mxu0 %v722
      %760 = vmatprep.subr.bf16.mxu0 0
      %761 = vmatpush1.bf16.msra.mxu0 %v723
      %762 = vmatprep.subr.bf16.mxu0 0
      %763 = vmatpush1.bf16.msra.mxu0 %v724
      %764 = vmatprep.subr.bf16.mxu0 0
      %765 = vmatpush1.bf16.msra.mxu0 %v725
      %766 = vmatprep.subr.bf16.mxu0 0
      %767 = vmatpush1.bf16.msra.mxu0 %v726
      %768 = vmatprep.subr.bf16.mxu0 0
      %769 = vmatpush1.bf16.msra.mxu0 %v727
      %770 = vmatprep.subr.bf16.mxu0 0
      %771 = vmatpush1.bf16.msra.mxu0 %v728
      %772 = vmatprep.subr.bf16.mxu0 0
      %773 = vmatpush1.bf16.msra.mxu0 %v729
      %774 = vmatprep.subr.bf16.mxu0 0
      %775 = vmatpush1.bf16.msra.mxu0 %v730
      %776 = vmatprep.subr.bf16.mxu0 0
      %777 = vmatpush1.bf16.msra.mxu0 %v731
      %778 = vmatprep.subr.bf16.mxu0 0
      %779 = vmatpush1.bf16.msra.mxu0 %v732
      %780 = vmatprep.subr.bf16.mxu0 0
      %781 = vmatpush1.bf16.msra.mxu0 %v733
      %782 = vmatprep.mubr.bf16.mxu0 %v651
      %783 = vmatmul.mubr.bf16.gmra.mrb[0].mxu0 %v650
      %v784 = vpop.f32.mrb[0].mxu0
      %v785 = vadd.f32 0.0, %v784
      %v786 = vpop.f32.mrb[0].mxu0
      %v787 = vpop.f32.mrb[0].mxu0
      %v788 = vadd.f32 0.0, %v787
      %v789 = vpop.f32.mrb[0].mxu0
      %790 = vdwg.mxu0
      %v791 = vadd.f32 %v607, %v785
      %v792 = vadd.f32 %v610, %v788
      %v793 = vld [vmem:[%s219 + $0x8] sm:$0xcc]
      %v794 = vld [vmem:[%s219 + $0x10] sm:$0xff]
      %v795 = vld [vmem:[%s219 + $0x18] sm:$0x33]
      %s796 = scalar_lea.vmem %s223, 384
      %v797 = vld [vmem:[%s796] sm:$0xf]
      %v798 = vld [vmem:[%s796 + $0x4] sm:$0xf]
      %v799 = vld [vmem:[%s796 + $0x8] sm:$0xf]
      %v800 = vld [vmem:[%s796 + $0xc] sm:$0xf]
      %v801 = vld [vmem:[%s796 + $0x10] sm:$0xf]
      %v802 = vld [vmem:[%s796 + $0x14] sm:$0xf]
      %v803 = vld [vmem:[%s796 + $0x18] sm:$0xf]
      %v804 = vld [vmem:[%s796 + $0x1c] sm:$0xf]
      %v805 = vld [vmem:[%s796 + $0x20] sm:$0xf]
      %v806 = vld [vmem:[%s796 + $0x24] sm:$0xf]
      %v807 = vld [vmem:[%s796 + $0x28] sm:$0xf]
      %v808 = vld [vmem:[%s796 + $0x2c] sm:$0xf]
      %v809 = vld [vmem:[%s796 + $0x30] sm:$0xf]
      %v810 = vld [vmem:[%s796 + $0x34] sm:$0xf]
      %v811 = vld [vmem:[%s796 + $0x38] sm:$0xf]
      %v812 = vld [vmem:[%s796 + $0x3c] sm:$0xf]
      %v813 = vld [vmem:[%s796 + $0x40] sm:$0xf]
      %v814 = vld [vmem:[%s796 + $0x44] sm:$0xf]
      %v815 = vld [vmem:[%s796 + $0x48] sm:$0xf]
      %v816 = vld [vmem:[%s796 + $0x4c] sm:$0xf]
      %v817 = vld [vmem:[%s796 + $0x50] sm:$0xf]
      %v818 = vld [vmem:[%s796 + $0x54] sm:$0xf]
      %v819 = vld [vmem:[%s796 + $0x58] sm:$0xf]
      %v820 = vld [vmem:[%s796 + $0x5c] sm:$0xf]
      %v821 = vld [vmem:[%s796 + $0x60] sm:$0xf]
      %v822 = vld [vmem:[%s796 + $0x64] sm:$0xf]
      %v823 = vld [vmem:[%s796 + $0x68] sm:$0xf]
      %v824 = vld [vmem:[%s796 + $0x6c] sm:$0xf]
      %v825 = vld [vmem:[%s796 + $0x70] sm:$0xf]
      %v826 = vld [vmem:[%s796 + $0x74] sm:$0xf]
      %v827 = vld [vmem:[%s796 + $0x78] sm:$0xf]
      %v828 = vld [vmem:[%s796 + $0x7c] sm:$0xf]
      %v832 = vunpack.c.l.b16 %v793
      %v833 = vunpack.c.h.b16 %v793
      %v834 = vunpack.c.l.b16 %v794
      %v835 = vunpack.c.h.b16 %v794
      %v836 = vunpack.c.l.b16 %v795
      %v837 = vunpack.c.h.b16 %v795
      %v838 = vpack.c.b16 %v834, %v832
      %v839 = vpack.c.b16 %v835, %v833
      %v840 = vpack.c.b16 %v836, %v836
      %v841 = vpack.c.b16 %v837, %v837
      %v842 = vrot.slane %v838, 2
      %v843 = vrot.slane %v840, 2
      %v844 = vsel %vm323, %v842, %v843
      %v845 = vrot.slane %v839, 2
      %v846 = vrot.slane %v841, 2
      %v847 = vsel %vm323, %v845, %v846
      %v882 = vunpack.c.l.b16 %v797
      %v883 = vunpack.c.l.b16 %v798
      %v884 = vunpack.c.l.b16 %v799
      %v885 = vunpack.c.l.b16 %v800
      %v886 = vunpack.c.l.b16 %v801
      %v887 = vunpack.c.l.b16 %v802
      %v888 = vunpack.c.l.b16 %v803
      %v889 = vunpack.c.l.b16 %v804
      %v890 = vunpack.c.l.b16 %v805
      %v891 = vunpack.c.l.b16 %v806
      %v892 = vunpack.c.l.b16 %v807
      %v893 = vunpack.c.l.b16 %v808
      %v894 = vunpack.c.l.b16 %v809
      %v895 = vunpack.c.l.b16 %v810
      %v896 = vunpack.c.l.b16 %v811
      %v897 = vunpack.c.l.b16 %v812
      %v898 = vunpack.c.l.b16 %v813
      %v899 = vunpack.c.l.b16 %v814
      %v900 = vunpack.c.l.b16 %v815
      %v901 = vunpack.c.l.b16 %v816
      %v902 = vunpack.c.l.b16 %v817
      %v903 = vunpack.c.l.b16 %v818
      %v904 = vunpack.c.l.b16 %v819
      %v905 = vunpack.c.l.b16 %v820
      %v906 = vunpack.c.l.b16 %v821
      %v907 = vunpack.c.l.b16 %v822
      %v908 = vunpack.c.l.b16 %v823
      %v909 = vunpack.c.l.b16 %v824
      %v910 = vunpack.c.l.b16 %v825
      %v911 = vunpack.c.l.b16 %v826
      %v912 = vunpack.c.l.b16 %v827
      %v913 = vunpack.c.l.b16 %v828
      %v914 = vpack.c.b16 %v883, %v882
      %v915 = vpack.c.b16 %v885, %v884
      %v916 = vpack.c.b16 %v887, %v886
      %v917 = vpack.c.b16 %v889, %v888
      %v918 = vpack.c.b16 %v891, %v890
      %v919 = vpack.c.b16 %v893, %v892
      %v920 = vpack.c.b16 %v895, %v894
      %v921 = vpack.c.b16 %v897, %v896
      %v922 = vpack.c.b16 %v899, %v898
      %v923 = vpack.c.b16 %v901, %v900
      %v924 = vpack.c.b16 %v903, %v902
      %v925 = vpack.c.b16 %v905, %v904
      %v926 = vpack.c.b16 %v907, %v906
      %v927 = vpack.c.b16 %v909, %v908
      %v928 = vpack.c.b16 %v911, %v910
      %v929 = vpack.c.b16 %v913, %v912
      %946 = vmatprep.subr.bf16.mxu0 0
      %947 = vmatpush1.bf16.msra.mxu0 %v914
      %948 = vmatprep.subr.bf16.mxu0 0
      %949 = vmatpush1.bf16.msra.mxu0 %v915
      %950 = vmatprep.subr.bf16.mxu0 0
      %951 = vmatpush1.bf16.msra.mxu0 %v916
      %952 = vmatprep.subr.bf16.mxu0 0
      %953 = vmatpush1.bf16.msra.mxu0 %v917
      %954 = vmatprep.subr.bf16.mxu0 0
      %955 = vmatpush1.bf16.msra.mxu0 %v918
      %956 = vmatprep.subr.bf16.mxu0 0
      %957 = vmatpush1.bf16.msra.mxu0 %v919
      %958 = vmatprep.subr.bf16.mxu0 0
      %959 = vmatpush1.bf16.msra.mxu0 %v920
      %960 = vmatprep.subr.bf16.mxu0 0
      %961 = vmatpush1.bf16.msra.mxu0 %v921
      %962 = vmatprep.subr.bf16.mxu0 0
      %963 = vmatpush1.bf16.msra.mxu0 %v922
      %964 = vmatprep.subr.bf16.mxu0 0
      %965 = vmatpush1.bf16.msra.mxu0 %v923
      %966 = vmatprep.subr.bf16.mxu0 0
      %967 = vmatpush1.bf16.msra.mxu0 %v924
      %968 = vmatprep.subr.bf16.mxu0 0
      %969 = vmatpush1.bf16.msra.mxu0 %v925
      %970 = vmatprep.subr.bf16.mxu0 0
      %971 = vmatpush1.bf16.msra.mxu0 %v926
      %972 = vmatprep.subr.bf16.mxu0 0
      %973 = vmatpush1.bf16.msra.mxu0 %v927
      %974 = vmatprep.subr.bf16.mxu0 0
      %975 = vmatpush1.bf16.msra.mxu0 %v928
      %976 = vmatprep.subr.bf16.mxu0 0
      %977 = vmatpush1.bf16.msra.mxu0 %v929
      %978 = vmatprep.mubr.bf16.mxu0 %v847
      %979 = vmatmul.mubr.bf16.gmra.mrb[0].mxu0 %v844
      %v980 = vpop.f32.mrb[0].mxu0
      %v981 = vadd.f32 0.0, %v980
      %v982 = vpop.f32.mrb[0].mxu0
      %v983 = vpop.f32.mrb[0].mxu0
      %v984 = vadd.f32 0.0, %v983
      %v985 = vpop.f32.mrb[0].mxu0
      %986 = vdwg.mxu0
      %v987 = vadd.f32 %v791, %v981
      %v988 = vadd.f32 %v792, %v984
      %v989 = vld [vmem:[%s226] sm:$0x1]
      %v991 = vlaneseq
      %v992 = vshrl.u32 %v991, 7
      %v993 = vsub.s32 0, %v992
      %v994 = vrot.slane %v989, %v993
      %v996 = vadd.f32 %v987, %v994
      %v997 = vadd.f32 %v988, %v994
      %998 = vst [vmem:[%s238] sm:$0xff] %v996
      %999 = vst [vmem:[%s238 + $0x8] sm:$0xff] %v997
      %s1000 = smul.u32 2, %s21
      %p1001 = scmp.lt.s32.totalorder %s19, 1
      %s1002 = scalar_select %p1001, %s19, 1
      %p1003 = scmp.lt.s32.totalorder %s1000, 1
      %s1004 = scalar_select %p1003, %s1000, 1
      %p1005 = scmp.lt.s32.totalorder %s20, 0
      %s1006 = scalar_select %p1005, %s20, 0
      %s1007 = sadd.s32 %s1006, %s1004
      %s1008 = smul.addr %s1002, 2
      %s1009 = sadd.s32 %s1007, %s1008
      %s1010 = smul.addr %s1009, 8
      %s1011 = scalar_lea.vmem %s3, %s1010
      // Predicated region
      $region33: #{_lambda_.9} parent=31 // pred_check
        %p1012 = pneg %p133
      $region34: #{_lambda_.9} parent=31 // pred_check_branch
        %1014 = sbr.rel (%p1012) target = $region36
      $region35: #{_lambda_.9} parent=31 // pred_region
        %s1015 = smul.u32 2, %s21
      $region36: #{_lambda_.9} parent=31 // pred_fallthru
        _
    $region32: #{_lambda_.9} parent=5 // pred_fallthru
      _
    %p1016 = scmp.le.s32.totalorder 2, %s9
    // Predicated region
    $region37: #{_lambda_.9} parent=5 // pred_check
      %p1017 = pneg %p1016
    $region38: #{_lambda_.9} parent=5 // pred_check_branch
      %1019 = sbr.rel (%p1017) target = $region40
    $region39: #{_lambda_.9} parent=5 // pred_region
      %s1020 = ssub.s32 %s9, 2
      // Predicated region
      $region41: #{_lambda_.9} parent=39 // pred_check
        %p1021 = pneg %p139
      $region42: #{_lambda_.9} parent=39 // pred_check_branch
        %1023 = sbr.rel (%p1021) target = $region44
      $region43: #{_lambda_.9} parent=39 // pred_region
        %s1024 = smul.u32 2, %s24
        %p1025 = scmp.lt.s32.totalorder %s22, 1
        %s1026 = scalar_select %p1025, %s22, 1
        %p1027 = scmp.lt.s32.totalorder %s1024, 1
        %s1028 = scalar_select %p1027, %s1024, 1
        %p1029 = scmp.lt.s32.totalorder %s23, 0
        %s1030 = scalar_select %p1029, %s23, 0
        %s1031 = sadd.s32 %s1030, %s1028
        %s1032 = smul.addr %s1026, 2
        %s1033 = sadd.s32 %s1031, %s1032
        %s1034 = smul.addr %s1033, 8
        %s1035 = scalar_lea.vmem %s3, %s1034
      $region44: #{_lambda_.9} parent=39 // pred_fallthru
        _
    $region40: #{_lambda_.9} parent=5 // pred_fallthru
      _
  $region6: #{_lambda_.9} parent=0 // loop_footer
    %s13 = sadd.s32 1, %s9
  $region7: #{_lambda_.9} parent=0 // loop_footer_branch
    %8 = sbr.rel target = $region3
  $region8: #{_lambda_.9} parent=0 // loop_exit
    _

</llo_original>
